<compile_context>
chip_gen: v7x
topology: tpu7x:2x2x1
jax: 0.10.0
libtpu: 0.0.40
codegen_flags: <defaults>
</compile_context>

<pallas_src>
import functools

import jax
import jax.numpy as jnp
from jax.experimental import pallas as pl
from jax.experimental.pallas import tpu as pltpu

EPS = 1e-5                  # PyTorch InstanceNorm2d default
_TWO_PASS_VARIANCE = False  # safer centred variance (extra pass over the stage scratch) if needed


# --------------------------------------------------------------------------------------------
# Kernel
# --------------------------------------------------------------------------------------------
def _unet_up_kernel(x_ref, w_ref, o_ref, pad_ref, stage_ref, *, fold_taps):
    # x_ref    : (1, H, W, IC)        unpadded NHWC input, one sample
    # w_ref    : (4, 4*IC, TO)        per-phase K-folded ConvTranspose2d taps (one OC tile)
    # o_ref    : (1, 1, H*W, 4*TO)    normalised + ReLU output, phases packed along lanes
    # pad_ref  : (H+2, W+2, IC)       VMEM scratch: zero-halo padded input
    # stage_ref: (4, H*W, TO) f32     VMEM scratch: un-normalised conv output
    H = x_ref.shape[1]
    W = x_ref.shape[2]
    IC = x_ref.shape[3]
    TO = stage_ref.shape[2]

    # ---- in-kernel halo pad (zero border + interior copy; replaces the wrapper HBM pad pass) ----
    zrow = jnp.zeros((1, W + 2, IC), x_ref.dtype)
    pad_ref[0:1, :, :] = zrow
    pad_ref[H + 1:H + 2, :, :] = zrow
    zcol = jnp.zeros((H + 2, 1, IC), x_ref.dtype)
    pad_ref[:, 0:1, :] = zcol
    pad_ref[:, W + 1:W + 2, :] = zcol
    pad_ref[1:H + 1, 1:W + 1, :] = x_ref[0]

    # ---- 9 de-duplicated shifted slabs (were 16 per-phase extractions) ----
    slab = [[pad_ref[r:r + H, c:c + W, :].reshape(H * W, IC) for c in range(3)]
            for r in range(3)]

    # ---- transposed conv (phase decomposition) + fused per-channel sum / sum-of-squares ----
    #   y[2m+p, 2l+q, :] = sum_{a,b in {0,1}} xpad[m+p+a, l+q+b, :] @ W[:, :, 3-2a-p, 3-2b-q]
    s = jnp.zeros((1, TO), jnp.float32)
    ss = jnp.zeros((1, TO), jnp.float32)
    for p in range(2):
        for q in range(2):
            ph = p * 2 + q
            taps = [slab[p + a][q + b] for a in range(2) for b in range(2)]
            w_ph = w_ref[ph]                                   # (4*IC, TO)
            if fold_taps:
                # Fold the 4 taps into the contraction dim: 1 matmul with K=4*IC.
                lhs = jnp.concatenate(taps, axis=-1)           # (H*W, 4*IC)
                acc = jnp.dot(lhs, w_ph, preferred_element_type=jnp.float32)
            else:
                # K=IC already fills the MXU: skip the lane concat, 4 matmuls.
                acc = jnp.zeros((H * W, TO), jnp.float32)
                for t, sl in enumerate(taps):
                    acc = acc + jnp.dot(sl, w_ph[t * IC:(t + 1) * IC, :],
                                        preferred_element_type=jnp.float32)
            stage_ref[ph] = acc
            s = s + acc.sum(axis=0, keepdims=True)
            if not _TWO_PASS_VARIANCE:
                ss = ss + (acc * acc).sum(axis=0, keepdims=True)

    # ---- InstanceNorm2d (per-channel over all 4*H*W positions of this sample) + ReLU ----
    inv_n = 1.0 / (4.0 * H * W)
    mean = s * inv_n
    if _TWO_PASS_VARIANCE:
        css = jnp.zeros((1, TO), jnp.float32)
        for ph in range(4):
            d = stage_ref[ph] - mean
            css = css + (d * d).sum(axis=0, keepdims=True)
        var = css * inv_n
    else:
        var = jnp.maximum(ss * inv_n - mean * mean, 0.0)
    inv_std = jax.lax.rsqrt(var + EPS)

    def _norm(ph):
        y = (stage_ref[ph] - mean) * inv_std
        return jnp.maximum(y, 0.0).astype(o_ref.dtype)

    # Lane-packed output: ph occupies lanes [ph*TO, (ph+1)*TO).
    if TO % 128 == 0:
        for ph in range(4):          # 128-aligned offsets: 4 dense stores, no concat relayout
            o_ref[0, 0, :, ph * TO:(ph + 1) * TO] = _norm(ph)
    else:                            # small / unaligned TO: one lane-dense store of 4*TO lanes
        o_ref[0, 0, :, :] = jnp.concatenate([_norm(ph) for ph in range(4)], axis=-1)


# --------------------------------------------------------------------------------------------
# Wrapper-side tuning helpers
# --------------------------------------------------------------------------------------------
def _tpu_params():
    """(mxu_k, preferred_oc_tile, vmem_budget_bytes) for the current chip generation."""
    vmem_bytes = 128 * 1024 * 1024
    try:
        vmem_bytes = int(pltpu.get_tpu_info().vmem_capacity_bytes)
    except Exception:
        pass
    kind = ""
    try:
        kind = jax.devices()[0].device_kind.lower()
    except Exception:
        pass
    is_v5e = ("v5e" in kind) or ("v5 lite" in kind) or ("v5litepod" in kind)
    mxu_k = 128 if is_v5e else 256       # v5e MXU contraction is 128; 256 on v6e/v7x
    pref_to = 128 if is_v5e else 256     # bigger TO buys nothing on v5e, just VMEM
    budget = int(vmem_bytes * 0.80)      # ~51 MiB on v7x (64 MiB), ~102 MiB on v5e/v6e (128 MiB)
    return mxu_k, pref_to, budget


def _pick_oc_tile(oc, pref_to, n_batch):
    """Largest preferred lane-aligned divisor of OC; full OC if small or no aligned divisor."""
    if oc <= pref_to:
        to = oc
    else:
        to = oc  # fallback: untiled (full dim is always a legal block)
        for cand in [pref_to] + [c for c in (256, 128) if c != pref_to]:
            if cand <= oc and oc % cand == 0:
                to = cand
                break
    # v7x megacore: with a single sample make sure there are >= 2 parallel grid steps.
    if n_batch == 1 and oc // to <= 1 and oc >= 256 and oc % 256 == 0:
        to = oc // 2
    return to


def _estimate_vmem(H, W, IC, TO, xsz, fold_taps, w_bufs, x_bufs):
    return int(
        x_bufs * H * W * IC * xsz                     # pipelined input block(s)
        + w_bufs * 16 * IC * TO * xsz                 # pipelined packed-weight block(s)
        + 2 * 4 * H * W * TO * xsz                    # pipelined output block (double-buffered)
        + (H + 2) * (W + 2) * IC * xsz                # halo-pad scratch
        + 4 * H * W * TO * 4                          # f32 stage scratch
        + 9 * H * W * IC * xsz                        # hoisted de-duplicated slabs
        + (4 * H * W * IC * xsz if fold_taps else 0)  # per-phase K-folded LHS
        + H * W * TO * 4)                             # live f32 matmul result


def _block_spec(shape, index_map, buffer_count=None):
    if buffer_count is not None:
        try:
            return pl.BlockSpec(shape, index_map, pipeline_mode=pl.Buffered(buffer_count))
        except TypeError:
            pass  # older jax without pipeline_mode: fall back to default double-buffering
    return pl.BlockSpec(shape, index_map)


# --------------------------------------------------------------------------------------------
# Forward
# --------------------------------------------------------------------------------------------
def unet_up_forward(x_nchw, skip_nchw, weight):
    """UNetUp.forward.  weight: (in_size, out_size, 4, 4), PyTorch ConvTranspose2d layout."""
    N, IC, H, W = x_nchw.shape
    OC = weight.shape[1]
    xdt = x_nchw.dtype
    xsz = xdt.itemsize

    mxu_k, pref_to, vmem_budget = _tpu_params()
    fold_taps = IC < mxu_k

    # ---- OC tile: preferred size, shrunk if the footprint would blow the VMEM budget ----
    TO = _pick_oc_tile(OC, pref_to, N)
    if (_estimate_vmem(H, W, IC, TO, xsz, fold_taps, 2, 2) > vmem_budget
            and TO > 128 and OC % 128 == 0):
        TO = 128
    J = OC // TO

    # ---- grid order: put the block generating less inner-axis HBM traffic on the inner axis ----
    x_block_bytes = H * W * IC * xsz
    w_block_bytes = 16 * IC * TO * xsz
    traffic_oc_outer = J * w_block_bytes + J * N * x_block_bytes   # grid=(J, N)
    traffic_n_outer = N * x_block_bytes + N * J * w_block_bytes    # grid=(N, J)
    oc_outer = traffic_oc_outer <= traffic_n_outer
    inner_extent = N if oc_outer else J

    # Single-buffer whichever operand is constant along the inner axis (double-buffering it buys
    # nothing there); only when the inner axis actually repeats.
    w_bufs = 1 if (oc_outer and inner_extent >= 2) else 2
    x_bufs = 1 if ((not oc_outer) and inner_extent >= 2) else 2

    x_nhwc = jnp.transpose(x_nchw, (0, 2, 3, 1))                    # (N, H, W, IC); halo pad in-kernel

    # Per-phase K-folded weights: rows = the 4 taps (a,b) stacked along IC, cols = OC.
    w_phases = []
    for p in range(2):
        for q in range(2):
            taps = [weight[:, :, 3 - 2 * a - p, 3 - 2 * b - q]
                    for a in range(2) for b in range(2)]
            w_phases.append(jnp.concatenate(taps, axis=0))           # (4*IC, OC)
    w_packed = jnp.stack(w_phases, axis=0).astype(xdt)               # (4, 4*IC, OC)
    # TODO(synk): casting f32 activations/weights to bf16 here would double MXU rate and halve
    # HBM/VMEM traffic; left out as a precision sign-off (f32 reference tolerance is 1e-3).

    est = _estimate_vmem(H, W, IC, TO, xsz, fold_taps, w_bufs, x_bufs)
    vmem_limit = int(min(max(int(1.25 * est), 32 * 1024 * 1024), vmem_budget))
    # TODO(synk): if est still exceeds the budget (huge H*W with an untileable OC), an H-tile split
    # of the conv plus a two-pass InstanceNorm over HBM (or a bf16 stage) would be needed.

    if oc_outer:
        grid = (J, N)
        x_map = lambda j, n: (n, 0, 0, 0)
        w_map = lambda j, n: (0, 0, j)
        o_map = lambda j, n: (n, j, 0, 0)
    else:
        grid = (N, J)
        x_map = lambda n, j: (n, 0, 0, 0)
        w_map = lambda n, j: (0, 0, j)
        o_map = lambda n, j: (n, j, 0, 0)

    x_spec = _block_spec((1, H, W, IC), x_map, buffer_count=1 if x_bufs == 1 else None)
    w_spec = _block_spec((4, 4 * IC, TO), w_map, buffer_count=1 if w_bufs == 1 else None)

    kernel = functools.partial(_unet_up_kernel, fold_taps=fold_taps)

    out = pl.pallas_call(
        kernel,
        out_shape=jax.ShapeDtypeStruct((N, J, H * W, 4 * TO), xdt),
        grid_spec=pltpu.PrefetchScalarGridSpec(
            num_scalar_prefetch=0,
            grid=grid,
            in_specs=[x_spec, w_spec],
            out_specs=pl.BlockSpec((1, 1, H * W, 4 * TO), o_map),
            scratch_shapes=[
                pltpu.VMEM((H + 2, W + 2, IC), xdt),        # halo-padded input
                pltpu.VMEM((4, H * W, TO), jnp.float32),    # un-normalised conv stage
            ],
        ),
        compiler_params=pltpu.CompilerParams(
            dimension_semantics=("parallel", "parallel"),
            vmem_limit_bytes=vmem_limit,
        ),
    )(x_nhwc, w_packed)

    # Phase de-interleave + NHWC->NCHW in ONE fused XLA transpose (output contract is NCHW, so
    # this pass is unavoidable; in-kernel stride-2 stores would not remove it).
    # out[n, j, h*W+w, (p*2+q)*TO + to]  ->  y[n, j*TO+to, 2h+p, 2w+q]
    y = out.reshape(N, J, H, W, 2, 2, TO)
    y = jnp.transpose(y, (0, 1, 6, 2, 4, 3, 5)).reshape(N, OC, 2 * H, 2 * W)

    # torch.cat((x, skip_input), 1)
    return jnp.concatenate([y, skip_nchw], axis=1)
    # TODO(synk): dropout branch omitted (module default dropout=0.0; identity at eval anyway).


# --------------------------------------------------------------------------------------------
# Reference + test
# --------------------------------------------------------------------------------------------
def _reference(x, skip, weight):
    """Pure-JAX/XLA reference matching the PyTorch module."""
    w_flip = jnp.transpose(weight[:, :, ::-1, ::-1], (1, 0, 2, 3))   # (OC, IC, 4, 4)
    y = jax.lax.conv_general_dilated(
        x, w_flip, window_strides=(1, 1), padding=((2, 2), (2, 2)),
        lhs_dilation=(2, 2), dimension_numbers=("NCHW", "OIHW", "NCHW"))
    mean = y.mean(axis=(2, 3), keepdims=True)
    var = y.var(axis=(2, 3), keepdims=True)   # biased, like InstanceNorm2d
    y = jnp.maximum((y - mean) * jax.lax.rsqrt(var + EPS), 0.0)
    return jnp.concatenate([y, skip], axis=1)


if __name__ == "__main__":
    key = jax.random.PRNGKey(0)
    k1, k2, k3 = jax.random.split(key, 3)

    N, IC, OC, H, W = 2, 4, 8, 16, 16
    x = jax.random.normal(k1, (N, IC, H, W), jnp.float32)
    skip = jax.random.normal(k2, (N, OC, 2 * H, 2 * W), jnp.float32)
    # Deterministic synthetic ConvTranspose2d weight (in_size, out_size, 4, 4)
    weight = jax.random.normal(k3, (IC, OC, 4, 4), jnp.float32) * 0.1

    out = jax.jit(unet_up_forward)(x, skip, weight)
    out = jax.block_until_ready(out)

    assert out.shape == (N, 2 * OC, 2 * H, 2 * W), out.shape
    ref = _reference(x, skip, weight)
    max_err = float(jnp.abs(out - ref).max())
    assert jnp.allclose(out, ref, atol=1e-3, rtol=1e-3), f"max_err={max_err}"

    print("KERNEL_OK")
</pallas_src>

<mosaic_0001>
module attributes {stable_mosaic.version = 11 : i64} {
  func.func @_unet_up_kernel(%arg0: i32, %arg1: i32, %arg2: memref<1x16x16x4xf32, #tpu.memory_space<vmem>>, %arg3: memref<4x16x8xf32, #tpu.memory_space<vmem>>, %arg4: memref<1x1x256x32xf32, #tpu.memory_space<vmem>>, %arg5: memref<18x18x4xf32, #tpu.memory_space<vmem>>, %arg6: memref<4x256x8xf32, #tpu.memory_space<vmem>>) attributes {dimension_semantics = [#tpu.dimension_semantics<parallel>, #tpu.dimension_semantics<parallel>], iteration_bounds = array<i64: 1, 2>, scalar_prefetch = 0 : i64, scratch_operands = 2 : i64, tpu.core_type = #tpu.core_type<tc>, window_params = [{transform_indices = @transform_0, window_bounds = array<i64: 1, 16, 16, 4>}, {pipeline_mode = #tpu.pipeline_mode<synchronous>, transform_indices = @transform_1, window_bounds = array<i64: 4, 16, 8>}, {transform_indices = @transform_2, window_bounds = array<i64: 1, 1, 256, 32>}]} {
    %cst = arith.constant 0.000000e+00 : f32
    %0 = vector.broadcast %cst : f32 to vector<1x18x4xf32>
    %c0 = arith.constant 0 : index
    %c0_0 = arith.constant 0 : index
    %c0_1 = arith.constant 0 : index
    %1 = vector.load %arg5[%c0, %c0_0, %c0_1] : memref<18x18x4xf32, #tpu.memory_space<vmem>>, vector<1x18x4xf32>
    tpu.vector_store %arg5[%c0, %c0_0, %c0_1], %0 {strides = array<i32>} : memref<18x18x4xf32, #tpu.memory_space<vmem>>, vector<1x18x4xf32>,
    %c17 = arith.constant 17 : index
    %c0_2 = arith.constant 0 : index
    %c0_3 = arith.constant 0 : index
    %2 = vector.load %arg5[%c17, %c0_2, %c0_3] : memref<18x18x4xf32, #tpu.memory_space<vmem>>, vector<1x18x4xf32>
    tpu.vector_store %arg5[%c17, %c0_2, %c0_3], %0 {strides = array<i32>} : memref<18x18x4xf32, #tpu.memory_space<vmem>>, vector<1x18x4xf32>,
    %cst_4 = arith.constant 0.000000e+00 : f32
    %3 = vector.broadcast %cst_4 : f32 to vector<18x1x4xf32>
    %c0_5 = arith.constant 0 : index
    %c0_6 = arith.constant 0 : index
    %c0_7 = arith.constant 0 : index
    %4 = vector.load %arg5[%c0_5, %c0_6, %c0_7] : memref<18x18x4xf32, #tpu.memory_space<vmem>>, vector<18x1x4xf32>
    tpu.vector_store %arg5[%c0_5, %c0_6, %c0_7], %3 {strides = array<i32>} : memref<18x18x4xf32, #tpu.memory_space<vmem>>, vector<18x1x4xf32>,
    %c0_8 = arith.constant 0 : index
    %c17_9 = arith.constant 17 : index
    %c0_10 = arith.constant 0 : index
    %5 = vector.load %arg5[%c0_8, %c17_9, %c0_10] : memref<18x18x4xf32, #tpu.memory_space<vmem>>, vector<18x1x4xf32>
    tpu.vector_store %arg5[%c0_8, %c17_9, %c0_10], %3 {strides = array<i32>} : memref<18x18x4xf32, #tpu.memory_space<vmem>>, vector<18x1x4xf32>,
    %c0_11 = arith.constant 0 : index
    %c0_12 = arith.constant 0 : index
    %c0_13 = arith.constant 0 : index
    %c0_14 = arith.constant 0 : index
    %6 = vector.load %arg2[%c0_11, %c0_12, %c0_13, %c0_14] : memref<1x16x16x4xf32, #tpu.memory_space<vmem>>, vector<1x16x16x4xf32>
    %7 = vector.shape_cast %6 : vector<1x16x16x4xf32> to vector<16x16x4xf32>
    %c1 = arith.constant 1 : index
    %c1_15 = arith.constant 1 : index
    %c0_16 = arith.constant 0 : index
    %8 = vector.load %arg5[%c1, %c1_15, %c0_16] : memref<18x18x4xf32, #tpu.memory_space<vmem>>, vector<16x16x4xf32>
    tpu.vector_store %arg5[%c1, %c1_15, %c0_16], %7 {strides = array<i32>} : memref<18x18x4xf32, #tpu.memory_space<vmem>>, vector<16x16x4xf32>,
    %c0_17 = arith.constant 0 : index
    %c0_18 = arith.constant 0 : index
    %c0_19 = arith.constant 0 : index
    %9 = vector.load %arg5[%c0_17, %c0_18, %c0_19] : memref<18x18x4xf32, #tpu.memory_space<vmem>>, vector<16x16x4xf32>
    %10 = vector.shape_cast %9 : vector<16x16x4xf32> to vector<256x4xf32>
    %c0_20 = arith.constant 0 : index
    %c1_21 = arith.constant 1 : index
    %c0_22 = arith.constant 0 : index
    %11 = vector.load %arg5[%c0_20, %c1_21, %c0_22] : memref<18x18x4xf32, #tpu.memory_space<vmem>>, vector<16x16x4xf32>
    %12 = vector.shape_cast %11 : vector<16x16x4xf32> to vector<256x4xf32>
    %c0_23 = arith.constant 0 : index
    %c2 = arith.constant 2 : index
    %c0_24 = arith.constant 0 : index
    %13 = vector.load %arg5[%c0_23, %c2, %c0_24] : memref<18x18x4xf32, #tpu.memory_space<vmem>>, vector<16x16x4xf32>
    %14 = vector.shape_cast %13 : vector<16x16x4xf32> to vector<256x4xf32>
    %c1_25 = arith.constant 1 : index
    %c0_26 = arith.constant 0 : index
    %c0_27 = arith.constant 0 : index
    %15 = vector.load %arg5[%c1_25, %c0_26, %c0_27] : memref<18x18x4xf32, #tpu.memory_space<vmem>>, vector<16x16x4xf32>
    %16 = vector.shape_cast %15 : vector<16x16x4xf32> to vector<256x4xf32>
    %c1_28 = arith.constant 1 : index
    %c1_29 = arith.constant 1 : index
    %c0_30 = arith.constant 0 : index
    %17 = vector.load %arg5[%c1_28, %c1_29, %c0_30] : memref<18x18x4xf32, #tpu.memory_space<vmem>>, vector<16x16x4xf32>
    %18 = vector.shape_cast %17 : vector<16x16x4xf32> to vector<256x4xf32>
    %c1_31 = arith.constant 1 : index
    %c2_32 = arith.constant 2 : index
    %c0_33 = arith.constant 0 : index
    %19 = vector.load %arg5[%c1_31, %c2_32, %c0_33] : memref<18x18x4xf32, #tpu.memory_space<vmem>>, vector<16x16x4xf32>
    %20 = vector.shape_cast %19 : vector<16x16x4xf32> to vector<256x4xf32>
    %c2_34 = arith.constant 2 : index
    %c0_35 = arith.constant 0 : index
    %c0_36 = arith.constant 0 : index
    %21 = vector.load %arg5[%c2_34, %c0_35, %c0_36] : memref<18x18x4xf32, #tpu.memory_space<vmem>>, vector<16x16x4xf32>
    %22 = vector.shape_cast %21 : vector<16x16x4xf32> to vector<256x4xf32>
    %c2_37 = arith.constant 2 : index
    %c1_38 = arith.constant 1 : index
    %c0_39 = arith.constant 0 : index
    %23 = vector.load %arg5[%c2_37, %c1_38, %c0_39] : memref<18x18x4xf32, #tpu.memory_space<vmem>>, vector<16x16x4xf32>
    %24 = vector.shape_cast %23 : vector<16x16x4xf32> to vector<256x4xf32>
    %c2_40 = arith.constant 2 : index
    %c2_41 = arith.constant 2 : index
    %c0_42 = arith.constant 0 : index
    %25 = vector.load %arg5[%c2_40, %c2_41, %c0_42] : memref<18x18x4xf32, #tpu.memory_space<vmem>>, vector<16x16x4xf32>
    %26 = vector.shape_cast %25 : vector<16x16x4xf32> to vector<256x4xf32>
    %cst_43 = arith.constant 0.000000e+00 : f32
    %27 = vector.broadcast %cst_43 : f32 to vector<1x8xf32>
    %cst_44 = arith.constant 0.000000e+00 : f32
    %28 = vector.broadcast %cst_44 : f32 to vector<1x8xf32>
    %c0_45 = arith.constant 0 : index
    %c0_46 = arith.constant 0 : index
    %c0_47 = arith.constant 0 : index
    %29 = vector.load %arg3[%c0_45, %c0_46, %c0_47] : memref<4x16x8xf32, #tpu.memory_space<vmem>>, vector<1x16x8xf32>
    %30 = vector.shape_cast %29 : vector<1x16x8xf32> to vector<16x8xf32>
    %31 = tpu.concatenate %10, %12, %16, %18 in 1 : vector<256x4xf32>, vector<256x4xf32>, vector<256x4xf32>, vector<256x4xf32> -> vector<256x16xf32>
    %cst_48 = arith.constant dense<0.000000e+00> : vector<256x8xf32>
    %32 = tpu.matmul %31, %30, %cst_48 {dimension_numbers = #tpu.dot_dimension_numbers<[1], [0], [0], [1], [0, 0, 1, 1], [], []>} : vector<256x16xf32>, vector<16x8xf32>, vector<256x8xf32> -> vector<256x8xf32>
    %c0_49 = arith.constant 0 : index
    %c0_50 = arith.constant 0 : index
    %c0_51 = arith.constant 0 : index
    %33 = vector.load %arg6[%c0_49, %c0_50, %c0_51] : memref<4x256x8xf32, #tpu.memory_space<vmem>>, vector<1x256x8xf32>
    %34 = vector.shape_cast %33 : vector<1x256x8xf32> to vector<256x8xf32>
    %35 = vector.shape_cast %32 : vector<256x8xf32> to vector<1x256x8xf32>
    tpu.vector_store %arg6[%c0_49, %c0_50, %c0_51], %35 {strides = array<i32>} : memref<4x256x8xf32, #tpu.memory_space<vmem>>, vector<1x256x8xf32>,
    %cst_52 = arith.constant dense<0.000000e+00> : vector<8xf32>
    %36 = vector.multi_reduction <add>, %32, %cst_52 [0] : vector<256x8xf32> to vector<8xf32>
    %37 = vector.shape_cast %36 : vector<8xf32> to vector<1x8xf32>
    %38 = arith.addf %27, %37 : vector<1x8xf32>
    %39 = arith.mulf %32, %32 : vector<256x8xf32>
    %cst_53 = arith.constant dense<0.000000e+00> : vector<8xf32>
    %40 = vector.multi_reduction <add>, %39, %cst_53 [0] : vector<256x8xf32> to vector<8xf32>
    %41 = vector.shape_cast %40 : vector<8xf32> to vector<1x8xf32>
    %42 = arith.addf %28, %41 : vector<1x8xf32>
    %c1_54 = arith.constant 1 : index
    %c0_55 = arith.constant 0 : index
    %c0_56 = arith.constant 0 : index
    %43 = vector.load %arg3[%c1_54, %c0_55, %c0_56] : memref<4x16x8xf32, #tpu.memory_space<vmem>>, vector<1x16x8xf32>
    %44 = vector.shape_cast %43 : vector<1x16x8xf32> to vector<16x8xf32>
    %45 = tpu.concatenate %12, %14, %18, %20 in 1 : vector<256x4xf32>, vector<256x4xf32>, vector<256x4xf32>, vector<256x4xf32> -> vector<256x16xf32>
    %cst_57 = arith.constant dense<0.000000e+00> : vector<256x8xf32>
    %46 = tpu.matmul %45, %44, %cst_57 {dimension_numbers = #tpu.dot_dimension_numbers<[1], [0], [0], [1], [0, 0, 1, 1], [], []>} : vector<256x16xf32>, vector<16x8xf32>, vector<256x8xf32> -> vector<256x8xf32>
    %c1_58 = arith.constant 1 : index
    %c0_59 = arith.constant 0 : index
    %c0_60 = arith.constant 0 : index
    %47 = vector.load %arg6[%c1_58, %c0_59, %c0_60] : memref<4x256x8xf32, #tpu.memory_space<vmem>>, vector<1x256x8xf32>
    %48 = vector.shape_cast %47 : vector<1x256x8xf32> to vector<256x8xf32>
    %49 = vector.shape_cast %46 : vector<256x8xf32> to vector<1x256x8xf32>
    tpu.vector_store %arg6[%c1_58, %c0_59, %c0_60], %49 {strides = array<i32>} : memref<4x256x8xf32, #tpu.memory_space<vmem>>, vector<1x256x8xf32>,
    %cst_61 = arith.constant dense<0.000000e+00> : vector<8xf32>
    %50 = vector.multi_reduction <add>, %46, %cst_61 [0] : vector<256x8xf32> to vector<8xf32>
    %51 = vector.shape_cast %50 : vector<8xf32> to vector<1x8xf32>
    %52 = arith.addf %38, %51 : vector<1x8xf32>
    %53 = arith.mulf %46, %46 : vector<256x8xf32>
    %cst_62 = arith.constant dense<0.000000e+00> : vector<8xf32>
    %54 = vector.multi_reduction <add>, %53, %cst_62 [0] : vector<256x8xf32> to vector<8xf32>
    %55 = vector.shape_cast %54 : vector<8xf32> to vector<1x8xf32>
    %56 = arith.addf %42, %55 : vector<1x8xf32>
    %c2_63 = arith.constant 2 : index
    %c0_64 = arith.constant 0 : index
    %c0_65 = arith.constant 0 : index
    %57 = vector.load %arg3[%c2_63, %c0_64, %c0_65] : memref<4x16x8xf32, #tpu.memory_space<vmem>>, vector<1x16x8xf32>
    %58 = vector.shape_cast %57 : vector<1x16x8xf32> to vector<16x8xf32>
    %59 = tpu.concatenate %16, %18, %22, %24 in 1 : vector<256x4xf32>, vector<256x4xf32>, vector<256x4xf32>, vector<256x4xf32> -> vector<256x16xf32>
    %cst_66 = arith.constant dense<0.000000e+00> : vector<256x8xf32>
    %60 = tpu.matmul %59, %58, %cst_66 {dimension_numbers = #tpu.dot_dimension_numbers<[1], [0], [0], [1], [0, 0, 1, 1], [], []>} : vector<256x16xf32>, vector<16x8xf32>, vector<256x8xf32> -> vector<256x8xf32>
    %c2_67 = arith.constant 2 : index
    %c0_68 = arith.constant 0 : index
    %c0_69 = arith.constant 0 : index
    %61 = vector.load %arg6[%c2_67, %c0_68, %c0_69] : memref<4x256x8xf32, #tpu.memory_space<vmem>>, vector<1x256x8xf32>
    %62 = vector.shape_cast %61 : vector<1x256x8xf32> to vector<256x8xf32>
    %63 = vector.shape_cast %60 : vector<256x8xf32> to vector<1x256x8xf32>
    tpu.vector_store %arg6[%c2_67, %c0_68, %c0_69], %63 {strides = array<i32>} : memref<4x256x8xf32, #tpu.memory_space<vmem>>, vector<1x256x8xf32>,
    %cst_70 = arith.constant dense<0.000000e+00> : vector<8xf32>
    %64 = vector.multi_reduction <add>, %60, %cst_70 [0] : vector<256x8xf32> to vector<8xf32>
    %65 = vector.shape_cast %64 : vector<8xf32> to vector<1x8xf32>
    %66 = arith.addf %52, %65 : vector<1x8xf32>
    %67 = arith.mulf %60, %60 : vector<256x8xf32>
    %cst_71 = arith.constant dense<0.000000e+00> : vector<8xf32>
    %68 = vector.multi_reduction <add>, %67, %cst_71 [0] : vector<256x8xf32> to vector<8xf32>
    %69 = vector.shape_cast %68 : vector<8xf32> to vector<1x8xf32>
    %70 = arith.addf %56, %69 : vector<1x8xf32>
    %c3 = arith.constant 3 : index
    %c0_72 = arith.constant 0 : index
    %c0_73 = arith.constant 0 : index
    %71 = vector.load %arg3[%c3, %c0_72, %c0_73] : memref<4x16x8xf32, #tpu.memory_space<vmem>>, vector<1x16x8xf32>
    %72 = vector.shape_cast %71 : vector<1x16x8xf32> to vector<16x8xf32>
    %73 = tpu.concatenate %18, %20, %24, %26 in 1 : vector<256x4xf32>, vector<256x4xf32>, vector<256x4xf32>, vector<256x4xf32> -> vector<256x16xf32>
    %cst_74 = arith.constant dense<0.000000e+00> : vector<256x8xf32>
    %74 = tpu.matmul %73, %72, %cst_74 {dimension_numbers = #tpu.dot_dimension_numbers<[1], [0], [0], [1], [0, 0, 1, 1], [], []>} : vector<256x16xf32>, vector<16x8xf32>, vector<256x8xf32> -> vector<256x8xf32>
    %c3_75 = arith.constant 3 : index
    %c0_76 = arith.constant 0 : index
    %c0_77 = arith.constant 0 : index
    %75 = vector.load %arg6[%c3_75, %c0_76, %c0_77] : memref<4x256x8xf32, #tpu.memory_space<vmem>>, vector<1x256x8xf32>
    %76 = vector.shape_cast %75 : vector<1x256x8xf32> to vector<256x8xf32>
    %77 = vector.shape_cast %74 : vector<256x8xf32> to vector<1x256x8xf32>
    tpu.vector_store %arg6[%c3_75, %c0_76, %c0_77], %77 {strides = array<i32>} : memref<4x256x8xf32, #tpu.memory_space<vmem>>, vector<1x256x8xf32>,
    %cst_78 = arith.constant dense<0.000000e+00> : vector<8xf32>
    %78 = vector.multi_reduction <add>, %74, %cst_78 [0] : vector<256x8xf32> to vector<8xf32>
    %79 = vector.shape_cast %78 : vector<8xf32> to vector<1x8xf32>
    %80 = arith.addf %66, %79 : vector<1x8xf32>
    %81 = arith.mulf %74, %74 : vector<256x8xf32>
    %cst_79 = arith.constant dense<0.000000e+00> : vector<8xf32>
    %82 = vector.multi_reduction <add>, %81, %cst_79 [0] : vector<256x8xf32> to vector<8xf32>
    %83 = vector.shape_cast %82 : vector<8xf32> to vector<1x8xf32>
    %84 = arith.addf %70, %83 : vector<1x8xf32>
    %cst_80 = arith.constant 9.765625E-4 : f32
    %85 = vector.broadcast %cst_80 : f32 to vector<1x8xf32>
    %86 = arith.mulf %80, %85 : vector<1x8xf32>
    %cst_81 = arith.constant 9.765625E-4 : f32
    %87 = vector.broadcast %cst_81 : f32 to vector<1x8xf32>
    %88 = arith.mulf %84, %87 : vector<1x8xf32>
    %89 = arith.mulf %86, %86 : vector<1x8xf32>
    %90 = arith.subf %88, %89 : vector<1x8xf32>
    %cst_82 = arith.constant 0.000000e+00 : f32
    %91 = vector.broadcast %cst_82 : f32 to vector<1x8xf32>
    %92 = arith.maximumf %90, %91 : vector<1x8xf32>
    %cst_83 = arith.constant 9.99999974E-6 : f32
    %93 = vector.broadcast %cst_83 : f32 to vector<1x8xf32>
    %94 = arith.addf %92, %93 : vector<1x8xf32>
    %95 = math.rsqrt %94 : vector<1x8xf32>
    %c0_84 = arith.constant 0 : index
    %c0_85 = arith.constant 0 : index
    %c0_86 = arith.constant 0 : index
    %96 = vector.load %arg6[%c0_84, %c0_85, %c0_86] : memref<4x256x8xf32, #tpu.memory_space<vmem>>, vector<1x256x8xf32>
    %97 = vector.shape_cast %96 : vector<1x256x8xf32> to vector<256x8xf32>
    %98 = vector.broadcast %86 : vector<1x8xf32> to vector<256x8xf32>
    %99 = arith.subf %97, %98 : vector<256x8xf32>
    %100 = vector.broadcast %95 : vector<1x8xf32> to vector<256x8xf32>
    %101 = arith.mulf %99, %100 : vector<256x8xf32>
    %cst_87 = arith.constant 0.000000e+00 : f32
    %102 = vector.broadcast %cst_87 : f32 to vector<256x8xf32>
    %103 = arith.maximumf %101, %102 : vector<256x8xf32>
    %c1_88 = arith.constant 1 : index
    %c0_89 = arith.constant 0 : index
    %c0_90 = arith.constant 0 : index
    %104 = vector.load %arg6[%c1_88, %c0_89, %c0_90] : memref<4x256x8xf32, #tpu.memory_space<vmem>>, vector<1x256x8xf32>
    %105 = vector.shape_cast %104 : vector<1x256x8xf32> to vector<256x8xf32>
    %106 = vector.broadcast %86 : vector<1x8xf32> to vector<256x8xf32>
    %107 = arith.subf %105, %106 : vector<256x8xf32>
    %108 = vector.broadcast %95 : vector<1x8xf32> to vector<256x8xf32>
    %109 = arith.mulf %107, %108 : vector<256x8xf32>
    %cst_91 = arith.constant 0.000000e+00 : f32
    %110 = vector.broadcast %cst_91 : f32 to vector<256x8xf32>
    %111 = arith.maximumf %109, %110 : vector<256x8xf32>
    %c2_92 = arith.constant 2 : index
    %c0_93 = arith.constant 0 : index
    %c0_94 = arith.constant 0 : index
    %112 = vector.load %arg6[%c2_92, %c0_93, %c0_94] : memref<4x256x8xf32, #tpu.memory_space<vmem>>, vector<1x256x8xf32>
    %113 = vector.shape_cast %112 : vector<1x256x8xf32> to vector<256x8xf32>
    %114 = vector.broadcast %86 : vector<1x8xf32> to vector<256x8xf32>
    %115 = arith.subf %113, %114 : vector<256x8xf32>
    %116 = vector.broadcast %95 : vector<1x8xf32> to vector<256x8xf32>
    %117 = arith.mulf %115, %116 : vector<256x8xf32>
    %cst_95 = arith.constant 0.000000e+00 : f32
    %118 = vector.broadcast %cst_95 : f32 to vector<256x8xf32>
    %119 = arith.maximumf %117, %118 : vector<256x8xf32>
    %c3_96 = arith.constant 3 : index
    %c0_97 = arith.constant 0 : index
    %c0_98 = arith.constant 0 : index
    %120 = vector.load %arg6[%c3_96, %c0_97, %c0_98] : memref<4x256x8xf32, #tpu.memory_space<vmem>>, vector<1x256x8xf32>
    %121 = vector.shape_cast %120 : vector<1x256x8xf32> to vector<256x8xf32>
    %122 = vector.broadcast %86 : vector<1x8xf32> to vector<256x8xf32>
    %123 = arith.subf %121, %122 : vector<256x8xf32>
    %124 = vector.broadcast %95 : vector<1x8xf32> to vector<256x8xf32>
    %125 = arith.mulf %123, %124 : vector<256x8xf32>
    %cst_99 = arith.constant 0.000000e+00 : f32
    %126 = vector.broadcast %cst_99 : f32 to vector<256x8xf32>
    %127 = arith.maximumf %125, %126 : vector<256x8xf32>
    %128 = tpu.concatenate %103, %111, %119, %127 in 1 : vector<256x8xf32>, vector<256x8xf32>, vector<256x8xf32>, vector<256x8xf32> -> vector<256x32xf32>
    %c0_100 = arith.constant 0 : index
    %c0_101 = arith.constant 0 : index
    %c0_102 = arith.constant 0 : index
    %c0_103 = arith.constant 0 : index
    %129 = vector.load %arg4[%c0_100, %c0_101, %c0_102, %c0_103] : memref<1x1x256x32xf32, #tpu.memory_space<vmem>>, vector<1x1x256x32xf32>
    %130 = vector.shape_cast %129 : vector<1x1x256x32xf32> to vector<256x32xf32>
    %131 = vector.shape_cast %128 : vector<256x32xf32> to vector<1x1x256x32xf32>
    tpu.vector_store %arg4[%c0_100, %c0_101, %c0_102, %c0_103], %131 {strides = array<i32>} : memref<1x1x256x32xf32, #tpu.memory_space<vmem>>, vector<1x1x256x32xf32>,
    return
  }
  func.func @transform_0(%arg0: i32, %arg1: i32) -> (i32, i32, i32, i32) {
    %c0_i32 = arith.constant 0 : i32
    %c0_i32_0 = arith.constant 0 : i32
    %c0_i32_1 = arith.constant 0 : i32
    %c0_i32_2 = arith.constant 0 : i32
    return %arg1, %c0_i32, %c0_i32_0, %c0_i32_1 : i32, i32, i32, i32
  }
  func.func @transform_1(%arg0: i32, %arg1: i32) -> (i32, i32, i32) {
    %c0_i32 = arith.constant 0 : i32
    %c0_i32_0 = arith.constant 0 : i32
    %c0_i32_1 = arith.constant 0 : i32
    return %c0_i32, %c0_i32_0, %arg0 : i32, i32, i32
  }
  func.func @transform_2(%arg0: i32, %arg1: i32) -> (i32, i32, i32, i32) {
    %c0_i32 = arith.constant 0 : i32
    %c0_i32_0 = arith.constant 0 : i32
    %c0_i32_1 = arith.constant 0 : i32
    return %arg1, %arg0, %c0_i32, %c0_i32_0 : i32, i32, i32, i32
  }
}

</mosaic_0001>

<llo_original>
// kernel: unet_up_forward.1
$region0: #{unet_up_forward.1}
  #allocation0 [shape = 'u32[]', space=smem, size = 0x4, offset = 0x4, fixed_abs, tag = 'smem constant byte address 0x4 - core index']
  #allocation1 [shape = 'u32[144,128]{1,0:T(1,128)}', space=vmem, size = 0x12000, scoped, tag = 'internal scratch']
  #allocation2 [shape = 'f32[18,18,4]{2,1,0:T(8,128)}', space=vmem, size = 0x36000, scoped, tag = 'scratch operand']
  #allocation3 [shape = 'f32[4,256,8]{2,1,0:T(8,128)}', space=vmem, size = 0x80000, scoped, tag = 'scratch operand']
  %s0 = inlined_call_operand.vmem [shape: f32[2,16,16,4], index: 0, kind: input, shape index: {}]
  %s1 = inlined_call_operand.vmem [shape: f32[4,16,8], index: 1, kind: input, shape index: {}]
  %s2 = inlined_call_operand.vmem [shape: f32[2,1,256,32], index: 2, kind: output, shape index: {}]
  %s3 = sld [smem:[#allocation0]]
  $region41: #{unet_up_forward.1} parent=0
    _
  %s5 = ssub.s32 1, %s3
  %s6 = scalar_select 0, %s5, %s3
  loop: start=0, step=1, limit=4
  $region2: #{unet_up_forward.1} parent=0 // loop_pre_header
    _
  $region3: #{unet_up_forward.1} parent=0 // loop_header
    %s8 = sphi 0, %s12
    %p9 = scmp.ge.s32.totalorder %s8, 4
    %s15 = sphi 0, %s27
    %s16 = sphi 0, %s23
    %s17 = sphi 0, %s15
    %s18 = sphi 0, %s16
    %s19 = sphi 0, %s17
    %s20 = sphi 0, %s18
    %s30 = sphi 0, %s32
    %s33 = sphi 0, %s30
    %s34 = sphi 0, %s33
    %s50 = sphi 0, %s34
    %s56 = sphi 0, %s58
    %s59 = sphi 0, %s56
    %s60 = sphi 0, %s59
    %s76 = sphi 0, %s60
    %s84 = sphi 0, %s86
    %s87 = sphi 0, %s84
    %s88 = sphi 0, %s87
    %s104 = sphi 0, %s88
  $region4: #{unet_up_forward.1} parent=0 // loop_header_branch
    %11 = sbr.rel (%p9) target = $region8
  $region5: #{unet_up_forward.1} parent=0 // loop_body
    %s13 = ssub.s32 %s8, 1
    %s14 = ssub.s32 %s8, 2
    %s21 = sadd.s32 1, %s16
    %p22 = scmp.ge.s32.totalorder %s21, 2
    %s23 = scalar_select %p22, 0, %s21
    %s24 = sadd.s32 1, %s15
    %s25 = scalar_select %p22, %s24, %s15
    %p26 = scmp.ge.s32.totalorder %s25, 1
    %s27 = scalar_select %p26, 0, %s25
    %s28 = ssub.s32 %s16, %s23
    %p29 = scmp.eq.s32.totalorder %s28, 0
    %s31 = sadd.s32 %s30, 1
    %s32 = scalar_select %p29, %s30, %s31
    %p35 = pneg %p29
    %p36 = scmp.eq.s32.totalorder %s8, 1
    %p37 = por %p35, %p36
    %p38 = scmp.ne.s32.totalorder %s30, %s33
    %p39 = scmp.eq.s32.totalorder %s8, 0
    %p40 = por %p38, %p39
    %p41 = scmp.ne.s32.totalorder %s30, %s33
    %p42 = scmp.eq.s32.totalorder %s13, 1
    %p43 = por %p41, %p42
    %p44 = scmp.ne.s32.totalorder %s33, %s34
    %p45 = scmp.eq.s32.totalorder %s13, 0
    %p46 = por %p44, %p45
    %p47 = scmp.ne.s32.totalorder %s33, %s34
    %p48 = scmp.eq.s32.totalorder %s14, 1
    %p49 = por %p47, %p48
    %p51 = scmp.ne.s32.totalorder %s34, %s50
    %p52 = scmp.eq.s32.totalorder %s14, 0
    %p53 = por %p51, %p52
    %s54 = ssub.s32 %s15, %s27
    %p55 = scmp.eq.s32.totalorder %s54, 0
    %s57 = sadd.s32 %s56, 1
    %s58 = scalar_select %p55, %s56, %s57
    %p61 = pneg %p55
    %p62 = scmp.eq.s32.totalorder %s8, 1
    %p63 = por %p61, %p62
    %p64 = scmp.ne.s32.totalorder %s56, %s59
    %p65 = scmp.eq.s32.totalorder %s8, 0
    %p66 = por %p64, %p65
    %p67 = scmp.ne.s32.totalorder %s56, %s59
    %p68 = scmp.eq.s32.totalorder %s13, 1
    %p69 = por %p67, %p68
    %p70 = scmp.ne.s32.totalorder %s59, %s60
    %p71 = scmp.eq.s32.totalorder %s13, 0
    %p72 = por %p70, %p71
    %p73 = scmp.ne.s32.totalorder %s59, %s60
    %p74 = scmp.eq.s32.totalorder %s14, 1
    %p75 = por %p73, %p74
    %p77 = scmp.ne.s32.totalorder %s60, %s76
    %p78 = scmp.eq.s32.totalorder %s14, 0
    %p79 = por %p77, %p78
    %s80 = ssub.s32 %s16, %s23
    %s81 = ssub.s32 %s15, %s27
    %s82 = sor.u32 %s80, %s81
    %p83 = scmp.eq.s32.totalorder %s82, 0
    %s85 = sadd.s32 %s84, 1
    %s86 = scalar_select %p83, %s84, %s85
    %p89 = pneg %p83
    %p90 = scmp.eq.s32.totalorder %s8, 1
    %p91 = por %p89, %p90
    %p92 = scmp.ne.s32.totalorder %s84, %s87
    %p93 = scmp.eq.s32.totalorder %s8, 0
    %p94 = por %p92, %p93
    %p95 = scmp.ne.s32.totalorder %s84, %s87
    %p96 = scmp.eq.s32.totalorder %s13, 1
    %p97 = por %p95, %p96
    %p98 = scmp.ne.s32.totalorder %s87, %s88
    %p99 = scmp.eq.s32.totalorder %s13, 0
    %p100 = por %p98, %p99
    %p101 = scmp.ne.s32.totalorder %s87, %s88
    %p102 = scmp.eq.s32.totalorder %s14, 1
    %p103 = por %p101, %p102
    %p105 = scmp.ne.s32.totalorder %s88, %s104
    %p106 = scmp.eq.s32.totalorder %s14, 0
    %p107 = por %p105, %p106
    %p108 = scmp.le.s32.totalorder 1, %s8
    %p109 = scmp.lt.s32.totalorder %s8, 3
    %p110 = pnand %p108, %p109
    %p111 = pneg %p110
    // Predicated region
    $region9: #{unet_up_forward.1} parent=5 // pred_check
      _
    $region10: #{unet_up_forward.1} parent=5 // pred_check_branch
      %113 = sbr.rel (%p110) target = $region12
    $region11: #{unet_up_forward.1} parent=5 // pred_region
      %s114 = ssub.s32 %s8, 1
      // Predicated region
      $region13: #{unet_up_forward.1} parent=11 // pred_check
        %p115 = pneg %p72
      $region14: #{unet_up_forward.1} parent=11 // pred_check_branch
        %117 = sbr.rel (%p115) target = $region16
      $region15: #{unet_up_forward.1} parent=11 // pred_region
        %p118 = scmp.lt.s32.totalorder %s17, 0
        %s119 = scalar_select %p118, %s17, 0
        %s120 = smul.addr %s119, 8
        %s121 = scalar_lea.vmem %s1, %s120
      $region16: #{unet_up_forward.1} parent=11 // pred_fallthru
        _
    $region12: #{unet_up_forward.1} parent=5 // pred_fallthru
      _
    %p122 = scmp.lt.s32.totalorder %s8, 2
    // Predicated region
    $region17: #{unet_up_forward.1} parent=5 // pred_check
      %p123 = pneg %p122
    $region18: #{unet_up_forward.1} parent=5 // pred_check_branch
      %125 = sbr.rel (%p123) target = $region20
    $region19: #{unet_up_forward.1} parent=5 // pred_region
      // Predicated region
      $region21: #{unet_up_forward.1} parent=19 // pred_check
        %p126 = pneg %p40
      $region22: #{unet_up_forward.1} parent=19 // pred_check_branch
        %128 = sbr.rel (%p126) target = $region24
      $region23: #{unet_up_forward.1} parent=19 // pred_region
        %p129 = scmp.lt.s32.totalorder %s16, 1
        %s130 = scalar_select %p129, %s16, 1
        %s131 = smul.addr %s130, 32
        %s132 = smul.addr %s131, 8
        %s133 = scalar_lea.vmem %s0, %s132
      $region24: #{unet_up_forward.1} parent=19 // pred_fallthru
        _
    $region20: #{unet_up_forward.1} parent=5 // pred_fallthru
      _
    %p134 = scmp.le.s32.totalorder 1, %s8
    %p135 = scmp.lt.s32.totalorder %s8, 3
    %p136 = pnand %p134, %p135
    %p137 = pneg %p136
    // Predicated region
    $region25: #{unet_up_forward.1} parent=5 // pred_check
      _
    $region26: #{unet_up_forward.1} parent=5 // pred_check_branch
      %139 = sbr.rel (%p136) target = $region28
    $region27: #{unet_up_forward.1} parent=5 // pred_region
      %s140 = ssub.s32 %s8, 1
      %p141 = scmp.lt.s32.totalorder %s18, 1
      %s142 = scalar_select %p141, %s18, 1
      %s143 = smul.addr %s142, 32
      %s144 = smul.addr %s143, 8
      %s145 = scalar_lea.vmem %s0, %s144
      %p146 = pneg %p46
      %p147 = pneg %p43
      %p148 = scmp.lt.s32.totalorder %s17, 0
      %s149 = scalar_select %p148, %s17, 0
      %s150 = smul.addr %s149, 8
      %s151 = scalar_lea.vmem %s1, %s150
      %p152 = pneg %p72
      %p153 = pneg %p69
      %p154 = pneg %p100
      %p155 = pneg %p97
      %p156 = scmp.lt.s32.totalorder %s18, 1
      %s157 = scalar_select %p156, %s18, 1
      %p158 = scmp.lt.s32.totalorder %s17, 0
      %s159 = scalar_select %p158, %s17, 0
      %s160 = smul.addr %s159, 32
      %s161 = smul.addr %s157, 32
      %s162 = sadd.s32 %s160, %s161
      %s163 = smul.addr %s162, 8
      %s164 = scalar_lea.vmem %s2, %s163
      %p165 = scmp.lt.s32.totalorder %s18, 1
      %s166 = scalar_select %p165, %s18, 1
      %s167 = smul.addr %s166, 32
      %s168 = smul.addr %s167, 8
      %s169 = scalar_lea.vmem %s0, %s168
      %p170 = scmp.lt.s32.totalorder %s17, 0
      %s171 = scalar_select %p170, %s17, 0
      %s172 = smul.addr %s171, 8
      %s173 = scalar_lea.vmem %s1, %s172
      %p174 = scmp.lt.s32.totalorder %s18, 1
      %s175 = scalar_select %p174, %s18, 1
      %p176 = scmp.lt.s32.totalorder %s17, 0
      %s177 = scalar_select %p176, %s17, 0
      %s178 = smul.addr %s177, 32
      %s179 = smul.addr %s175, 32
      %s180 = sadd.s32 %s178, %s179
      %s181 = smul.addr %s180, 8
      %s182 = scalar_lea.vmem %s2, %s181
      %vm183 = vcmask 31744
      %184 = vst.msk [vmem:[#allocation2] sm:$0xff] %vm183, 0.0
      %185 = vst.msk [vmem:[#allocation2 + $0x8] sm:$0xff] %vm183, 0.0
      %vm186 = vcmask 25600
      %187 = vst.msk [vmem:[#allocation2 + $0x10] sm:$0x3] %vm186, 0.0
      %s188 = scalar_lea.vmem [#allocation2], 408
      %189 = vst.msk [vmem:[%s188] sm:$0xff] %vm183, 0.0
      %190 = vst.msk [vmem:[%s188 + $0x8] sm:$0xff] %vm183, 0.0
      %191 = vst.msk [vmem:[%s188 + $0x10] sm:$0x3] %vm186, 0.0
      %vm192 = vcmask 24576
      %193 = vst.msk [vmem:[#allocation2] sm:$0x1] %vm192, 0.0
      %194 = vst.msk [vmem:[#allocation2 + $0x18] sm:$0x1] %vm192, 0.0
      %195 = vst.msk [vmem:[#allocation2 + $0x30] sm:$0x1] %vm192, 0.0
      %196 = vst.msk [vmem:[#allocation2 + $0x48] sm:$0x1] %vm192, 0.0
      %197 = vst.msk [vmem:[#allocation2 + $0x60] sm:$0x1] %vm192, 0.0
      %198 = vst.msk [vmem:[#allocation2 + $0x78] sm:$0x1] %vm192, 0.0
      %199 = vst.msk [vmem:[#allocation2 + $0x90] sm:$0x1] %vm192, 0.0
      %200 = vst.msk [vmem:[#allocation2 + $0xa8] sm:$0x1] %vm192, 0.0
      %201 = vst.msk [vmem:[#allocation2 + $0xc0] sm:$0x1] %vm192, 0.0
      %202 = vst.msk [vmem:[#allocation2 + $0xd8] sm:$0x1] %vm192, 0.0
      %203 = vst.msk [vmem:[#allocation2 + $0xf0] sm:$0x1] %vm192, 0.0
      %204 = vst.msk [vmem:[#allocation2 + $0x108] sm:$0x1] %vm192, 0.0
      %205 = vst.msk [vmem:[#allocation2 + $0x120] sm:$0x1] %vm192, 0.0
      %206 = vst.msk [vmem:[#allocation2 + $0x138] sm:$0x1] %vm192, 0.0
      %207 = vst.msk [vmem:[#allocation2 + $0x150] sm:$0x1] %vm192, 0.0
      %208 = vst.msk [vmem:[#allocation2 + $0x168] sm:$0x1] %vm192, 0.0
      %209 = vst.msk [vmem:[#allocation2 + $0x180] sm:$0x1] %vm192, 0.0
      %210 = vst.msk [vmem:[#allocation2 + $0x198] sm:$0x1] %vm192, 0.0
      %211 = vst.msk [vmem:[#allocation2 + $0x11] sm:$0x1] %vm192, 0.0
      %212 = vst.msk [vmem:[#allocation2 + $0x29] sm:$0x1] %vm192, 0.0
      %213 = vst.msk [vmem:[#allocation2 + $0x41] sm:$0x1] %vm192, 0.0
      %214 = vst.msk [vmem:[#allocation2 + $0x59] sm:$0x1] %vm192, 0.0
      %215 = vst.msk [vmem:[#allocation2 + $0x71] sm:$0x1] %vm192, 0.0
      %216 = vst.msk [vmem:[#allocation2 + $0x89] sm:$0x1] %vm192, 0.0
      %217 = vst.msk [vmem:[#allocation2 + $0xa1] sm:$0x1] %vm192, 0.0
      %218 = vst.msk [vmem:[#allocation2 + $0xb9] sm:$0x1] %vm192, 0.0
      %219 = vst.msk [vmem:[#allocation2 + $0xd1] sm:$0x1] %vm192, 0.0
      %220 = vst.msk [vmem:[#allocation2 + $0xe9] sm:$0x1] %vm192, 0.0
      %221 = vst.msk [vmem:[#allocation2 + $0x101] sm:$0x1] %vm192, 0.0
      %222 = vst.msk [vmem:[#allocation2 + $0x119] sm:$0x1] %vm192, 0.0
      %223 = vst.msk [vmem:[#allocation2 + $0x131] sm:$0x1] %vm192, 0.0
      %224 = vst.msk [vmem:[#allocation2 + $0x149] sm:$0x1] %vm192, 0.0
      %225 = vst.msk [vmem:[#allocation2 + $0x161] sm:$0x1] %vm192, 0.0
      %226 = vst.msk [vmem:[#allocation2 + $0x179] sm:$0x1] %vm192, 0.0
      %227 = vst.msk [vmem:[#allocation2 + $0x191] sm:$0x1] %vm192, 0.0
      %228 = vst.msk [vmem:[#allocation2 + $0x1a9] sm:$0x1] %vm192, 0.0
      %v229 = vld [vmem:[%s169] sm:$0xff]
      %v230 = vld [vmem:[%s169 + $0x8] sm:$0xff]
      %v231 = vld [vmem:[%s169 + $0x10] sm:$0xff]
      %v232 = vld [vmem:[%s169 + $0x18] sm:$0xff]
      %v233 = vld [vmem:[%s169 + $0x20] sm:$0xff]
      %v234 = vld [vmem:[%s169 + $0x28] sm:$0xff]
      %v235 = vld [vmem:[%s169 + $0x30] sm:$0xff]
      %v236 = vld [vmem:[%s169 + $0x38] sm:$0xff]
      %v237 = vld [vmem:[%s169 + $0x40] sm:$0xff]
      %v238 = vld [vmem:[%s169 + $0x48] sm:$0xff]
      %v239 = vld [vmem:[%s169 + $0x50] sm:$0xff]
      %v240 = vld [vmem:[%s169 + $0x58] sm:$0xff]
      %v241 = vld [vmem:[%s169 + $0x60] sm:$0xff]
      %v242 = vld [vmem:[%s169 + $0x68] sm:$0xff]
      %v243 = vld [vmem:[%s169 + $0x70] sm:$0xff]
      %v244 = vld [vmem:[%s169 + $0x78] sm:$0xff]
      %v245 = vld [vmem:[%s169 + $0x80] sm:$0xff]
      %v246 = vld [vmem:[%s169 + $0x88] sm:$0xff]
      %v247 = vld [vmem:[%s169 + $0x90] sm:$0xff]
      %v248 = vld [vmem:[%s169 + $0x98] sm:$0xff]
      %v249 = vld [vmem:[%s169 + $0xa0] sm:$0xff]
      %v250 = vld [vmem:[%s169 + $0xa8] sm:$0xff]
      %v251 = vld [vmem:[%s169 + $0xb0] sm:$0xff]
      %v252 = vld [vmem:[%s169 + $0xb8] sm:$0xff]
      %v253 = vld [vmem:[%s169 + $0xc0] sm:$0xff]
      %v254 = vld [vmem:[%s169 + $0xc8] sm:$0xff]
      %v255 = vld [vmem:[%s169 + $0xd0] sm:$0xff]
      %v256 = vld [vmem:[%s169 + $0xd8] sm:$0xff]
      %v257 = vld [vmem:[%s169 + $0xe0] sm:$0xff]
      %v258 = vld [vmem:[%s169 + $0xe8] sm:$0xff]
      %v259 = vld [vmem:[%s169 + $0xf0] sm:$0xff]
      %v260 = vld [vmem:[%s169 + $0xf8] sm:$0xff]
      %s261 = scalar_lea.vmem [#allocation2], 24
      %262 = vst.msk [vmem:[%s261 + $0x1] sm:$0xff] %vm183, %v229
      %263 = vst.msk [vmem:[%s261 + $0x9] sm:$0xff] %vm183, %v230
      %264 = vst.msk [vmem:[%s261 + $0x19] sm:$0xff] %vm183, %v231
      %265 = vst.msk [vmem:[%s261 + $0x21] sm:$0xff] %vm183, %v232
      %266 = vst.msk [vmem:[%s261 + $0x31] sm:$0xff] %vm183, %v233
      %267 = vst.msk [vmem:[%s261 + $0x39] sm:$0xff] %vm183, %v234
      %268 = vst.msk [vmem:[%s261 + $0x49] sm:$0xff] %vm183, %v235
      %269 = vst.msk [vmem:[%s261 + $0x51] sm:$0xff] %vm183, %v236
      %270 = vst.msk [vmem:[%s261 + $0x61] sm:$0xff] %vm183, %v237
      %271 = vst.msk [vmem:[%s261 + $0x69] sm:$0xff] %vm183, %v238
      %272 = vst.msk [vmem:[%s261 + $0x79] sm:$0xff] %vm183, %v239
      %273 = vst.msk [vmem:[%s261 + $0x81] sm:$0xff] %vm183, %v240
      %274 = vst.msk [vmem:[%s261 + $0x91] sm:$0xff] %vm183, %v241
      %275 = vst.msk [vmem:[%s261 + $0x99] sm:$0xff] %vm183, %v242
      %276 = vst.msk [vmem:[%s261 + $0xa9] sm:$0xff] %vm183, %v243
      %277 = vst.msk [vmem:[%s261 + $0xb1] sm:$0xff] %vm183, %v244
      %278 = vst.msk [vmem:[%s261 + $0xc1] sm:$0xff] %vm183, %v245
      %279 = vst.msk [vmem:[%s261 + $0xc9] sm:$0xff] %vm183, %v246
      %280 = vst.msk [vmem:[%s261 + $0xd9] sm:$0xff] %vm183, %v247
      %281 = vst.msk [vmem:[%s261 + $0xe1] sm:$0xff] %vm183, %v248
      %282 = vst.msk [vmem:[%s261 + $0xf1] sm:$0xff] %vm183, %v249
      %283 = vst.msk [vmem:[%s261 + $0xf9] sm:$0xff] %vm183, %v250
      %284 = vst.msk [vmem:[%s261 + $0x109] sm:$0xff] %vm183, %v251
      %285 = vst.msk [vmem:[%s261 + $0x111] sm:$0xff] %vm183, %v252
      %286 = vst.msk [vmem:[%s261 + $0x121] sm:$0xff] %vm183, %v253
      %287 = vst.msk [vmem:[%s261 + $0x129] sm:$0xff] %vm183, %v254
      %288 = vst.msk [vmem:[%s261 + $0x139] sm:$0xff] %vm183, %v255
      %289 = vst.msk [vmem:[%s261 + $0x141] sm:$0xff] %vm183, %v256
      %290 = vst.msk [vmem:[%s261 + $0x151] sm:$0xff] %vm183, %v257
      %291 = vst.msk [vmem:[%s261 + $0x159] sm:$0xff] %vm183, %v258
      %292 = vst.msk [vmem:[%s261 + $0x169] sm:$0xff] %vm183, %v259
      %293 = vst.msk [vmem:[%s261 + $0x171] sm:$0xff] %vm183, %v260
      %v294 = vld [vmem:[#allocation2] sm:$0xff]
      %v295 = vld [vmem:[#allocation2 + $0x8] sm:$0xff]
      %v296 = vld [vmem:[#allocation2 + $0x18] sm:$0xff]
      %v297 = vld [vmem:[#allocation2 + $0x20] sm:$0xff]
      %v298 = vld [vmem:[#allocation2 + $0x30] sm:$0xff]
      %v299 = vld [vmem:[#allocation2 + $0x38] sm:$0xff]
      %v300 = vld [vmem:[#allocation2 + $0x48] sm:$0xff]
      %v301 = vld [vmem:[#allocation2 + $0x50] sm:$0xff]
      %v302 = vld [vmem:[#allocation2 + $0x60] sm:$0xff]
      %v303 = vld [vmem:[#allocation2 + $0x68] sm:$0xff]
      %v304 = vld [vmem:[#allocation2 + $0x78] sm:$0xff]
      %v305 = vld [vmem:[#allocation2 + $0x80] sm:$0xff]
      %v306 = vld [vmem:[#allocation2 + $0x90] sm:$0xff]
      %v307 = vld [vmem:[#allocation2 + $0x98] sm:$0xff]
      %v308 = vld [vmem:[#allocation2 + $0xa8] sm:$0xff]
      %v309 = vld [vmem:[#allocation2 + $0xb0] sm:$0xff]
      %v310 = vld [vmem:[#allocation2 + $0xc0] sm:$0xff]
      %v311 = vld [vmem:[#allocation2 + $0xc8] sm:$0xff]
      %v312 = vld [vmem:[#allocation2 + $0xd8] sm:$0xff]
      %v313 = vld [vmem:[#allocation2 + $0xe0] sm:$0xff]
      %v314 = vld [vmem:[#allocation2 + $0xf0] sm:$0xff]
      %v315 = vld [vmem:[#allocation2 + $0xf8] sm:$0xff]
      %v316 = vld [vmem:[#allocation2 + $0x108] sm:$0xff]
      %v317 = vld [vmem:[#allocation2 + $0x110] sm:$0xff]
      %v318 = vld [vmem:[#allocation2 + $0x120] sm:$0xff]
      %v319 = vld [vmem:[#allocation2 + $0x128] sm:$0xff]
      %v320 = vld [vmem:[#allocation2 + $0x138] sm:$0xff]
      %v321 = vld [vmem:[#allocation2 + $0x140] sm:$0xff]
      %v322 = vld [vmem:[#allocation2 + $0x150] sm:$0xff]
      %v323 = vld [vmem:[#allocation2 + $0x158] sm:$0xff]
      %v324 = vld [vmem:[#allocation2 + $0x168] sm:$0xff]
      %v325 = vld [vmem:[#allocation2 + $0x170] sm:$0xff]
      %v326 = vld [vmem:[#allocation2 + $0x1] sm:$0xff]
      %v327 = vld [vmem:[#allocation2 + $0x9] sm:$0xff]
      %v328 = vld [vmem:[#allocation2 + $0x19] sm:$0xff]
      %v329 = vld [vmem:[#allocation2 + $0x21] sm:$0xff]
      %v330 = vld [vmem:[#allocation2 + $0x31] sm:$0xff]
      %v331 = vld [vmem:[#allocation2 + $0x39] sm:$0xff]
      %v332 = vld [vmem:[#allocation2 + $0x49] sm:$0xff]
      %v333 = vld [vmem:[#allocation2 + $0x51] sm:$0xff]
      %v334 = vld [vmem:[#allocation2 + $0x61] sm:$0xff]
      %v335 = vld [vmem:[#allocation2 + $0x69] sm:$0xff]
      %v336 = vld [vmem:[#allocation2 + $0x79] sm:$0xff]
      %v337 = vld [vmem:[#allocation2 + $0x81] sm:$0xff]
      %v338 = vld [vmem:[#allocation2 + $0x91] sm:$0xff]
      %v339 = vld [vmem:[#allocation2 + $0x99] sm:$0xff]
      %v340 = vld [vmem:[#allocation2 + $0xa9] sm:$0xff]
      %v341 = vld [vmem:[#allocation2 + $0xb1] sm:$0xff]
      %v342 = vld [vmem:[#allocation2 + $0xc1] sm:$0xff]
      %v343 = vld [vmem:[#allocation2 + $0xc9] sm:$0xff]
      %v344 = vld [vmem:[#allocation2 + $0xd9] sm:$0xff]
      %v345 = vld [vmem:[#allocation2 + $0xe1] sm:$0xff]
      %v346 = vld [vmem:[#allocation2 + $0xf1] sm:$0xff]
      %v347 = vld [vmem:[#allocation2 + $0xf9] sm:$0xff]
      %v348 = vld [vmem:[#allocation2 + $0x109] sm:$0xff]
      %v349 = vld [vmem:[#allocation2 + $0x111] sm:$0xff]
      %v350 = vld [vmem:[#allocation2 + $0x121] sm:$0xff]
      %v351 = vld [vmem:[#allocation2 + $0x129] sm:$0xff]
      %v352 = vld [vmem:[#allocation2 + $0x139] sm:$0xff]
      %v353 = vld [vmem:[#allocation2 + $0x141] sm:$0xff]
      %v354 = vld [vmem:[#allocation2 + $0x151] sm:$0xff]
      %v355 = vld [vmem:[#allocation2 + $0x159] sm:$0xff]
      %v356 = vld [vmem:[#allocation2 + $0x169] sm:$0xff]
      %v357 = vld [vmem:[#allocation2 + $0x171] sm:$0xff]
      %v358 = vld [vmem:[#allocation2 + $0x2] sm:$0xff]
      %v359 = vld [vmem:[#allocation2 + $0xa] sm:$0xff]
      %v360 = vld [vmem:[#allocation2 + $0x1a] sm:$0xff]
      %v361 = vld [vmem:[#allocation2 + $0x22] sm:$0xff]
      %v362 = vld [vmem:[#allocation2 + $0x32] sm:$0xff]
      %v363 = vld [vmem:[#allocation2 + $0x3a] sm:$0xff]
      %v364 = vld [vmem:[#allocation2 + $0x4a] sm:$0xff]
      %v365 = vld [vmem:[#allocation2 + $0x52] sm:$0xff]
      %v366 = vld [vmem:[#allocation2 + $0x62] sm:$0xff]
      %v367 = vld [vmem:[#allocation2 + $0x6a] sm:$0xff]
      %v368 = vld [vmem:[#allocation2 + $0x7a] sm:$0xff]
      %v369 = vld [vmem:[#allocation2 + $0x82] sm:$0xff]
      %v370 = vld [vmem:[#allocation2 + $0x92] sm:$0xff]
      %v371 = vld [vmem:[#allocation2 + $0x9a] sm:$0xff]
      %v372 = vld [vmem:[#allocation2 + $0xaa] sm:$0xff]
      %v373 = vld [vmem:[#allocation2 + $0xb2] sm:$0xff]
      %v374 = vld [vmem:[#allocation2 + $0xc2] sm:$0xff]
      %v375 = vld [vmem:[#allocation2 + $0xca] sm:$0xff]
      %v376 = vld [vmem:[#allocation2 + $0xda] sm:$0xff]
      %v377 = vld [vmem:[#allocation2 + $0xe2] sm:$0xff]
      %v378 = vld [vmem:[#allocation2 + $0xf2] sm:$0xff]
      %v379 = vld [vmem:[#allocation2 + $0xfa] sm:$0xff]
      %v380 = vld [vmem:[#allocation2 + $0x10a] sm:$0xff]
      %v381 = vld [vmem:[#allocation2 + $0x112] sm:$0xff]
      %v382 = vld [vmem:[#allocation2 + $0x122] sm:$0xff]
      %v383 = vld [vmem:[#allocation2 + $0x12a] sm:$0xff]
      %v384 = vld [vmem:[#allocation2 + $0x13a] sm:$0xff]
      %v385 = vld [vmem:[#allocation2 + $0x142] sm:$0xff]
      %v386 = vld [vmem:[#allocation2 + $0x152] sm:$0xff]
      %v387 = vld [vmem:[#allocation2 + $0x15a] sm:$0xff]
      %v388 = vld [vmem:[#allocation2 + $0x16a] sm:$0xff]
      %v389 = vld [vmem:[#allocation2 + $0x172] sm:$0xff]
      %v390 = vld [vmem:[%s261] sm:$0xff]
      %v391 = vld [vmem:[%s261 + $0x8] sm:$0xff]
      %v392 = vld [vmem:[%s261 + $0x18] sm:$0xff]
      %v393 = vld [vmem:[%s261 + $0x20] sm:$0xff]
      %v394 = vld [vmem:[%s261 + $0x30] sm:$0xff]
      %v395 = vld [vmem:[%s261 + $0x38] sm:$0xff]
      %v396 = vld [vmem:[%s261 + $0x48] sm:$0xff]
      %v397 = vld [vmem:[%s261 + $0x50] sm:$0xff]
      %v398 = vld [vmem:[%s261 + $0x60] sm:$0xff]
      %v399 = vld [vmem:[%s261 + $0x68] sm:$0xff]
      %v400 = vld [vmem:[%s261 + $0x78] sm:$0xff]
      %v401 = vld [vmem:[%s261 + $0x80] sm:$0xff]
      %v402 = vld [vmem:[%s261 + $0x90] sm:$0xff]
      %v403 = vld [vmem:[%s261 + $0x98] sm:$0xff]
      %v404 = vld [vmem:[%s261 + $0xa8] sm:$0xff]
      %v405 = vld [vmem:[%s261 + $0xb0] sm:$0xff]
      %v406 = vld [vmem:[%s261 + $0xc0] sm:$0xff]
      %v407 = vld [vmem:[%s261 + $0xc8] sm:$0xff]
      %v408 = vld [vmem:[%s261 + $0xd8] sm:$0xff]
      %v409 = vld [vmem:[%s261 + $0xe0] sm:$0xff]
      %v410 = vld [vmem:[%s261 + $0xf0] sm:$0xff]
      %v411 = vld [vmem:[%s261 + $0xf8] sm:$0xff]
      %v412 = vld [vmem:[%s261 + $0x108] sm:$0xff]
      %v413 = vld [vmem:[%s261 + $0x110] sm:$0xff]
      %v414 = vld [vmem:[%s261 + $0x120] sm:$0xff]
      %v415 = vld [vmem:[%s261 + $0x128] sm:$0xff]
      %v416 = vld [vmem:[%s261 + $0x138] sm:$0xff]
      %v417 = vld [vmem:[%s261 + $0x140] sm:$0xff]
      %v418 = vld [vmem:[%s261 + $0x150] sm:$0xff]
      %v419 = vld [vmem:[%s261 + $0x158] sm:$0xff]
      %v420 = vld [vmem:[%s261 + $0x168] sm:$0xff]
      %v421 = vld [vmem:[%s261 + $0x170] sm:$0xff]
      %v422 = vld [vmem:[%s261 + $0x1] sm:$0xff]
      %v423 = vld [vmem:[%s261 + $0x9] sm:$0xff]
      %v424 = vld [vmem:[%s261 + $0x19] sm:$0xff]
      %v425 = vld [vmem:[%s261 + $0x21] sm:$0xff]
      %v426 = vld [vmem:[%s261 + $0x31] sm:$0xff]
      %v427 = vld [vmem:[%s261 + $0x39] sm:$0xff]
      %v428 = vld [vmem:[%s261 + $0x49] sm:$0xff]
      %v429 = vld [vmem:[%s261 + $0x51] sm:$0xff]
      %v430 = vld [vmem:[%s261 + $0x61] sm:$0xff]
      %v431 = vld [vmem:[%s261 + $0x69] sm:$0xff]
      %v432 = vld [vmem:[%s261 + $0x79] sm:$0xff]
      %v433 = vld [vmem:[%s261 + $0x81] sm:$0xff]
      %v434 = vld [vmem:[%s261 + $0x91] sm:$0xff]
      %v435 = vld [vmem:[%s261 + $0x99] sm:$0xff]
      %v436 = vld [vmem:[%s261 + $0xa9] sm:$0xff]
      %v437 = vld [vmem:[%s261 + $0xb1] sm:$0xff]
      %v438 = vld [vmem:[%s261 + $0xc1] sm:$0xff]
      %v439 = vld [vmem:[%s261 + $0xc9] sm:$0xff]
      %v440 = vld [vmem:[%s261 + $0xd9] sm:$0xff]
      %v441 = vld [vmem:[%s261 + $0xe1] sm:$0xff]
      %v442 = vld [vmem:[%s261 + $0xf1] sm:$0xff]
      %v443 = vld [vmem:[%s261 + $0xf9] sm:$0xff]
      %v444 = vld [vmem:[%s261 + $0x109] sm:$0xff]
      %v445 = vld [vmem:[%s261 + $0x111] sm:$0xff]
      %v446 = vld [vmem:[%s261 + $0x121] sm:$0xff]
      %v447 = vld [vmem:[%s261 + $0x129] sm:$0xff]
      %v448 = vld [vmem:[%s261 + $0x139] sm:$0xff]
      %v449 = vld [vmem:[%s261 + $0x141] sm:$0xff]
      %v450 = vld [vmem:[%s261 + $0x151] sm:$0xff]
      %v451 = vld [vmem:[%s261 + $0x159] sm:$0xff]
      %v452 = vld [vmem:[%s261 + $0x169] sm:$0xff]
      %v453 = vld [vmem:[%s261 + $0x171] sm:$0xff]
      %v454 = vld [vmem:[%s261 + $0x2] sm:$0xff]
      %v455 = vld [vmem:[%s261 + $0xa] sm:$0xff]
      %v456 = vld [vmem:[%s261 + $0x1a] sm:$0xff]
      %v457 = vld [vmem:[%s261 + $0x22] sm:$0xff]
      %v458 = vld [vmem:[%s261 + $0x32] sm:$0xff]
      %v459 = vld [vmem:[%s261 + $0x3a] sm:$0xff]
      %v460 = vld [vmem:[%s261 + $0x4a] sm:$0xff]
      %v461 = vld [vmem:[%s261 + $0x52] sm:$0xff]
      %v462 = vld [vmem:[%s261 + $0x62] sm:$0xff]
      %v463 = vld [vmem:[%s261 + $0x6a] sm:$0xff]
      %v464 = vld [vmem:[%s261 + $0x7a] sm:$0xff]
      %v465 = vld [vmem:[%s261 + $0x82] sm:$0xff]
      %v466 = vld [vmem:[%s261 + $0x92] sm:$0xff]
      %v467 = vld [vmem:[%s261 + $0x9a] sm:$0xff]
      %v468 = vld [vmem:[%s261 + $0xaa] sm:$0xff]
      %v469 = vld [vmem:[%s261 + $0xb2] sm:$0xff]
      %v470 = vld [vmem:[%s261 + $0xc2] sm:$0xff]
      %v471 = vld [vmem:[%s261 + $0xca] sm:$0xff]
      %v472 = vld [vmem:[%s261 + $0xda] sm:$0xff]
      %v473 = vld [vmem:[%s261 + $0xe2] sm:$0xff]
      %v474 = vld [vmem:[%s261 + $0xf2] sm:$0xff]
      %v475 = vld [vmem:[%s261 + $0xfa] sm:$0xff]
      %v476 = vld [vmem:[%s261 + $0x10a] sm:$0xff]
      %v477 = vld [vmem:[%s261 + $0x112] sm:$0xff]
      %v478 = vld [vmem:[%s261 + $0x122] sm:$0xff]
      %v479 = vld [vmem:[%s261 + $0x12a] sm:$0xff]
      %v480 = vld [vmem:[%s261 + $0x13a] sm:$0xff]
      %v481 = vld [vmem:[%s261 + $0x142] sm:$0xff]
      %v482 = vld [vmem:[%s261 + $0x152] sm:$0xff]
      %v483 = vld [vmem:[%s261 + $0x15a] sm:$0xff]
      %v484 = vld [vmem:[%s261 + $0x16a] sm:$0xff]
      %v485 = vld [vmem:[%s261 + $0x172] sm:$0xff]
      %s486 = scalar_lea.vmem [#allocation2], 48
      %v487 = vld [vmem:[%s486] sm:$0xff]
      %v488 = vld [vmem:[%s486 + $0x8] sm:$0xff]
      %v489 = vld [vmem:[%s486 + $0x18] sm:$0xff]
      %v490 = vld [vmem:[%s486 + $0x20] sm:$0xff]
      %v491 = vld [vmem:[%s486 + $0x30] sm:$0xff]
      %v492 = vld [vmem:[%s486 + $0x38] sm:$0xff]
      %v493 = vld [vmem:[%s486 + $0x48] sm:$0xff]
      %v494 = vld [vmem:[%s486 + $0x50] sm:$0xff]
      %v495 = vld [vmem:[%s486 + $0x60] sm:$0xff]
      %v496 = vld [vmem:[%s486 + $0x68] sm:$0xff]
      %v497 = vld [vmem:[%s486 + $0x78] sm:$0xff]
      %v498 = vld [vmem:[%s486 + $0x80] sm:$0xff]
      %v499 = vld [vmem:[%s486 + $0x90] sm:$0xff]
      %v500 = vld [vmem:[%s486 + $0x98] sm:$0xff]
      %v501 = vld [vmem:[%s486 + $0xa8] sm:$0xff]
      %v502 = vld [vmem:[%s486 + $0xb0] sm:$0xff]
      %v503 = vld [vmem:[%s486 + $0xc0] sm:$0xff]
      %v504 = vld [vmem:[%s486 + $0xc8] sm:$0xff]
      %v505 = vld [vmem:[%s486 + $0xd8] sm:$0xff]
      %v506 = vld [vmem:[%s486 + $0xe0] sm:$0xff]
      %v507 = vld [vmem:[%s486 + $0xf0] sm:$0xff]
      %v508 = vld [vmem:[%s486 + $0xf8] sm:$0xff]
      %v509 = vld [vmem:[%s486 + $0x108] sm:$0xff]
      %v510 = vld [vmem:[%s486 + $0x110] sm:$0xff]
      %v511 = vld [vmem:[%s486 + $0x120] sm:$0xff]
      %v512 = vld [vmem:[%s486 + $0x128] sm:$0xff]
      %v513 = vld [vmem:[%s486 + $0x138] sm:$0xff]
      %v514 = vld [vmem:[%s486 + $0x140] sm:$0xff]
      %v515 = vld [vmem:[%s486 + $0x150] sm:$0xff]
      %v516 = vld [vmem:[%s486 + $0x158] sm:$0xff]
      %v517 = vld [vmem:[%s486 + $0x168] sm:$0xff]
      %v518 = vld [vmem:[%s486 + $0x170] sm:$0xff]
      %v519 = vld [vmem:[%s486 + $0x1] sm:$0xff]
      %v520 = vld [vmem:[%s486 + $0x9] sm:$0xff]
      %v521 = vld [vmem:[%s486 + $0x19] sm:$0xff]
      %v522 = vld [vmem:[%s486 + $0x21] sm:$0xff]
      %v523 = vld [vmem:[%s486 + $0x31] sm:$0xff]
      %v524 = vld [vmem:[%s486 + $0x39] sm:$0xff]
      %v525 = vld [vmem:[%s486 + $0x49] sm:$0xff]
      %v526 = vld [vmem:[%s486 + $0x51] sm:$0xff]
      %v527 = vld [vmem:[%s486 + $0x61] sm:$0xff]
      %v528 = vld [vmem:[%s486 + $0x69] sm:$0xff]
      %v529 = vld [vmem:[%s486 + $0x79] sm:$0xff]
      %v530 = vld [vmem:[%s486 + $0x81] sm:$0xff]
      %v531 = vld [vmem:[%s486 + $0x91] sm:$0xff]
      %v532 = vld [vmem:[%s486 + $0x99] sm:$0xff]
      %v533 = vld [vmem:[%s486 + $0xa9] sm:$0xff]
      %v534 = vld [vmem:[%s486 + $0xb1] sm:$0xff]
      %v535 = vld [vmem:[%s486 + $0xc1] sm:$0xff]
      %v536 = vld [vmem:[%s486 + $0xc9] sm:$0xff]
      %v537 = vld [vmem:[%s486 + $0xd9] sm:$0xff]
      %v538 = vld [vmem:[%s486 + $0xe1] sm:$0xff]
      %v539 = vld [vmem:[%s486 + $0xf1] sm:$0xff]
      %v540 = vld [vmem:[%s486 + $0xf9] sm:$0xff]
      %v541 = vld [vmem:[%s486 + $0x109] sm:$0xff]
      %v542 = vld [vmem:[%s486 + $0x111] sm:$0xff]
      %v543 = vld [vmem:[%s486 + $0x121] sm:$0xff]
      %v544 = vld [vmem:[%s486 + $0x129] sm:$0xff]
      %v545 = vld [vmem:[%s486 + $0x139] sm:$0xff]
      %v546 = vld [vmem:[%s486 + $0x141] sm:$0xff]
      %v547 = vld [vmem:[%s486 + $0x151] sm:$0xff]
      %v548 = vld [vmem:[%s486 + $0x159] sm:$0xff]
      %v549 = vld [vmem:[%s486 + $0x169] sm:$0xff]
      %v550 = vld [vmem:[%s486 + $0x171] sm:$0xff]
      %v551 = vld [vmem:[%s486 + $0x2] sm:$0xff]
      %v552 = vld [vmem:[%s486 + $0xa] sm:$0xff]
      %v553 = vld [vmem:[%s486 + $0x1a] sm:$0xff]
      %v554 = vld [vmem:[%s486 + $0x22] sm:$0xff]
      %v555 = vld [vmem:[%s486 + $0x32] sm:$0xff]
      %v556 = vld [vmem:[%s486 + $0x3a] sm:$0xff]
      %v557 = vld [vmem:[%s486 + $0x4a] sm:$0xff]
      %v558 = vld [vmem:[%s486 + $0x52] sm:$0xff]
      %v559 = vld [vmem:[%s486 + $0x62] sm:$0xff]
      %v560 = vld [vmem:[%s486 + $0x6a] sm:$0xff]
      %v561 = vld [vmem:[%s486 + $0x7a] sm:$0xff]
      %v562 = vld [vmem:[%s486 + $0x82] sm:$0xff]
      %v563 = vld [vmem:[%s486 + $0x92] sm:$0xff]
      %v564 = vld [vmem:[%s486 + $0x9a] sm:$0xff]
      %v565 = vld [vmem:[%s486 + $0xaa] sm:$0xff]
      %v566 = vld [vmem:[%s486 + $0xb2] sm:$0xff]
      %v567 = vld [vmem:[%s486 + $0xc2] sm:$0xff]
      %v568 = vld [vmem:[%s486 + $0xca] sm:$0xff]
      %v569 = vld [vmem:[%s486 + $0xda] sm:$0xff]
      %v570 = vld [vmem:[%s486 + $0xe2] sm:$0xff]
      %v571 = vld [vmem:[%s486 + $0xf2] sm:$0xff]
      %v572 = vld [vmem:[%s486 + $0xfa] sm:$0xff]
      %v573 = vld [vmem:[%s486 + $0x10a] sm:$0xff]
      %v574 = vld [vmem:[%s486 + $0x112] sm:$0xff]
      %v575 = vld [vmem:[%s486 + $0x122] sm:$0xff]
      %v576 = vld [vmem:[%s486 + $0x12a] sm:$0xff]
      %v577 = vld [vmem:[%s486 + $0x13a] sm:$0xff]
      %v578 = vld [vmem:[%s486 + $0x142] sm:$0xff]
      %v579 = vld [vmem:[%s486 + $0x152] sm:$0xff]
      %v580 = vld [vmem:[%s486 + $0x15a] sm:$0xff]
      %v581 = vld [vmem:[%s486 + $0x16a] sm:$0xff]
      %v582 = vld [vmem:[%s486 + $0x172] sm:$0xff]
      %v583 = vld [vmem:[%s173] sm:$0xff]
      %v584 = vld [vmem:[%s173 + $0x8] sm:$0xff]
      %617 = vrot.lane.b32.xlu0 %v326, 4
      %v618 = vpop.permute.xlu0 %617
      %619 = vrot.lane.b32.xlu0 %v327, 4
      %v620 = vpop.permute.xlu0 %619
      %621 = vrot.lane.b32.xlu0 %v328, 4
      %v622 = vpop.permute.xlu0 %621
      %623 = vrot.lane.b32.xlu0 %v329, 4
      %v624 = vpop.permute.xlu0 %623
      %625 = vrot.lane.b32.xlu0 %v330, 4
      %v626 = vpop.permute.xlu0 %625
      %627 = vrot.lane.b32.xlu0 %v331, 4
      %v628 = vpop.permute.xlu0 %627
      %629 = vrot.lane.b32.xlu0 %v332, 4
      %v630 = vpop.permute.xlu0 %629
      %631 = vrot.lane.b32.xlu0 %v333, 4
      %v632 = vpop.permute.xlu0 %631
      %633 = vrot.lane.b32.xlu0 %v334, 4
      %v634 = vpop.permute.xlu0 %633
      %635 = vrot.lane.b32.xlu0 %v335, 4
      %v636 = vpop.permute.xlu0 %635
      %637 = vrot.lane.b32.xlu0 %v336, 4
      %v638 = vpop.permute.xlu0 %637
      %639 = vrot.lane.b32.xlu0 %v337, 4
      %v640 = vpop.permute.xlu0 %639
      %641 = vrot.lane.b32.xlu0 %v338, 4
      %v642 = vpop.permute.xlu0 %641
      %643 = vrot.lane.b32.xlu0 %v339, 4
      %v644 = vpop.permute.xlu0 %643
      %645 = vrot.lane.b32.xlu0 %v340, 4
      %v646 = vpop.permute.xlu0 %645
      %647 = vrot.lane.b32.xlu0 %v341, 4
      %v648 = vpop.permute.xlu0 %647
      %649 = vrot.lane.b32.xlu0 %v342, 4
      %v650 = vpop.permute.xlu0 %649
      %651 = vrot.lane.b32.xlu0 %v343, 4
      %v652 = vpop.permute.xlu0 %651
      %653 = vrot.lane.b32.xlu0 %v344, 4
      %v654 = vpop.permute.xlu0 %653
      %655 = vrot.lane.b32.xlu0 %v345, 4
      %v656 = vpop.permute.xlu0 %655
      %657 = vrot.lane.b32.xlu0 %v346, 4
      %v658 = vpop.permute.xlu0 %657
      %659 = vrot.lane.b32.xlu0 %v347, 4
      %v660 = vpop.permute.xlu0 %659
      %661 = vrot.lane.b32.xlu0 %v348, 4
      %v662 = vpop.permute.xlu0 %661
      %663 = vrot.lane.b32.xlu0 %v349, 4
      %v664 = vpop.permute.xlu0 %663
      %665 = vrot.lane.b32.xlu0 %v350, 4
      %v666 = vpop.permute.xlu0 %665
      %667 = vrot.lane.b32.xlu0 %v351, 4
      %v668 = vpop.permute.xlu0 %667
      %669 = vrot.lane.b32.xlu0 %v352, 4
      %v670 = vpop.permute.xlu0 %669
      %671 = vrot.lane.b32.xlu0 %v353, 4
      %v672 = vpop.permute.xlu0 %671
      %673 = vrot.lane.b32.xlu0 %v354, 4
      %v674 = vpop.permute.xlu0 %673
      %675 = vrot.lane.b32.xlu0 %v355, 4
      %v676 = vpop.permute.xlu0 %675
      %677 = vrot.lane.b32.xlu0 %v356, 4
      %v678 = vpop.permute.xlu0 %677
      %679 = vrot.lane.b32.xlu0 %v357, 4
      %v680 = vpop.permute.xlu0 %679
      %745 = vrot.lane.b32.xlu0 %v390, 8
      %v746 = vpop.permute.xlu0 %745
      %747 = vrot.lane.b32.xlu0 %v391, 8
      %v748 = vpop.permute.xlu0 %747
      %749 = vrot.lane.b32.xlu0 %v392, 8
      %v750 = vpop.permute.xlu0 %749
      %751 = vrot.lane.b32.xlu0 %v393, 8
      %v752 = vpop.permute.xlu0 %751
      %753 = vrot.lane.b32.xlu0 %v394, 8
      %v754 = vpop.permute.xlu0 %753
      %755 = vrot.lane.b32.xlu0 %v395, 8
      %v756 = vpop.permute.xlu0 %755
      %757 = vrot.lane.b32.xlu0 %v396, 8
      %v758 = vpop.permute.xlu0 %757
      %759 = vrot.lane.b32.xlu0 %v397, 8
      %v760 = vpop.permute.xlu0 %759
      %761 = vrot.lane.b32.xlu0 %v398, 8
      %v762 = vpop.permute.xlu0 %761
      %763 = vrot.lane.b32.xlu0 %v399, 8
      %v764 = vpop.permute.xlu0 %763
      %765 = vrot.lane.b32.xlu0 %v400, 8
      %v766 = vpop.permute.xlu0 %765
      %767 = vrot.lane.b32.xlu0 %v401, 8
      %v768 = vpop.permute.xlu0 %767
      %769 = vrot.lane.b32.xlu0 %v402, 8
      %v770 = vpop.permute.xlu0 %769
      %771 = vrot.lane.b32.xlu0 %v403, 8
      %v772 = vpop.permute.xlu0 %771
      %773 = vrot.lane.b32.xlu0 %v404, 8
      %v774 = vpop.permute.xlu0 %773
      %775 = vrot.lane.b32.xlu0 %v405, 8
      %v776 = vpop.permute.xlu0 %775
      %777 = vrot.lane.b32.xlu0 %v406, 8
      %v778 = vpop.permute.xlu0 %777
      %779 = vrot.lane.b32.xlu0 %v407, 8
      %v780 = vpop.permute.xlu0 %779
      %781 = vrot.lane.b32.xlu0 %v408, 8
      %v782 = vpop.permute.xlu0 %781
      %783 = vrot.lane.b32.xlu0 %v409, 8
      %v784 = vpop.permute.xlu0 %783
      %785 = vrot.lane.b32.xlu0 %v410, 8
      %v786 = vpop.permute.xlu0 %785
      %787 = vrot.lane.b32.xlu0 %v411, 8
      %v788 = vpop.permute.xlu0 %787
      %789 = vrot.lane.b32.xlu0 %v412, 8
      %v790 = vpop.permute.xlu0 %789
      %791 = vrot.lane.b32.xlu0 %v413, 8
      %v792 = vpop.permute.xlu0 %791
      %793 = vrot.lane.b32.xlu0 %v414, 8
      %v794 = vpop.permute.xlu0 %793
      %795 = vrot.lane.b32.xlu0 %v415, 8
      %v796 = vpop.permute.xlu0 %795
      %797 = vrot.lane.b32.xlu0 %v416, 8
      %v798 = vpop.permute.xlu0 %797
      %799 = vrot.lane.b32.xlu0 %v417, 8
      %v800 = vpop.permute.xlu0 %799
      %801 = vrot.lane.b32.xlu0 %v418, 8
      %v802 = vpop.permute.xlu0 %801
      %803 = vrot.lane.b32.xlu0 %v419, 8
      %v804 = vpop.permute.xlu0 %803
      %805 = vrot.lane.b32.xlu0 %v420, 8
      %v806 = vpop.permute.xlu0 %805
      %807 = vrot.lane.b32.xlu0 %v421, 8
      %v808 = vpop.permute.xlu0 %807
      %873 = vrot.lane.b32.xlu0 %v422, 12
      %v874 = vpop.permute.xlu0 %873
      %875 = vrot.lane.b32.xlu0 %v423, 12
      %v876 = vpop.permute.xlu0 %875
      %877 = vrot.lane.b32.xlu0 %v424, 12
      %v878 = vpop.permute.xlu0 %877
      %879 = vrot.lane.b32.xlu0 %v425, 12
      %v880 = vpop.permute.xlu0 %879
      %881 = vrot.lane.b32.xlu0 %v426, 12
      %v882 = vpop.permute.xlu0 %881
      %883 = vrot.lane.b32.xlu0 %v427, 12
      %v884 = vpop.permute.xlu0 %883
      %885 = vrot.lane.b32.xlu0 %v428, 12
      %v886 = vpop.permute.xlu0 %885
      %887 = vrot.lane.b32.xlu0 %v429, 12
      %v888 = vpop.permute.xlu0 %887
      %889 = vrot.lane.b32.xlu0 %v430, 12
      %v890 = vpop.permute.xlu0 %889
      %891 = vrot.lane.b32.xlu0 %v431, 12
      %v892 = vpop.permute.xlu0 %891
      %893 = vrot.lane.b32.xlu0 %v432, 12
      %v894 = vpop.permute.xlu0 %893
      %895 = vrot.lane.b32.xlu0 %v433, 12
      %v896 = vpop.permute.xlu0 %895
      %897 = vrot.lane.b32.xlu0 %v434, 12
      %v898 = vpop.permute.xlu0 %897
      %899 = vrot.lane.b32.xlu0 %v435, 12
      %v900 = vpop.permute.xlu0 %899
      %901 = vrot.lane.b32.xlu0 %v436, 12
      %v902 = vpop.permute.xlu0 %901
      %903 = vrot.lane.b32.xlu0 %v437, 12
      %v904 = vpop.permute.xlu0 %903
      %905 = vrot.lane.b32.xlu0 %v438, 12
      %v906 = vpop.permute.xlu0 %905
      %907 = vrot.lane.b32.xlu0 %v439, 12
      %v908 = vpop.permute.xlu0 %907
      %909 = vrot.lane.b32.xlu0 %v440, 12
      %v910 = vpop.permute.xlu0 %909
      %911 = vrot.lane.b32.xlu0 %v441, 12
      %v912 = vpop.permute.xlu0 %911
      %913 = vrot.lane.b32.xlu0 %v442, 12
      %v914 = vpop.permute.xlu0 %913
      %915 = vrot.lane.b32.xlu0 %v443, 12
      %v916 = vpop.permute.xlu0 %915
      %917 = vrot.lane.b32.xlu0 %v444, 12
      %v918 = vpop.permute.xlu0 %917
      %919 = vrot.lane.b32.xlu0 %v445, 12
      %v920 = vpop.permute.xlu0 %919
      %921 = vrot.lane.b32.xlu0 %v446, 12
      %v922 = vpop.permute.xlu0 %921
      %923 = vrot.lane.b32.xlu0 %v447, 12
      %v924 = vpop.permute.xlu0 %923
      %925 = vrot.lane.b32.xlu0 %v448, 12
      %v926 = vpop.permute.xlu0 %925
      %927 = vrot.lane.b32.xlu0 %v449, 12
      %v928 = vpop.permute.xlu0 %927
      %929 = vrot.lane.b32.xlu0 %v450, 12
      %v930 = vpop.permute.xlu0 %929
      %931 = vrot.lane.b32.xlu0 %v451, 12
      %v932 = vpop.permute.xlu0 %931
      %933 = vrot.lane.b32.xlu0 %v452, 12
      %v934 = vpop.permute.xlu0 %933
      %935 = vrot.lane.b32.xlu0 %v453, 12
      %v936 = vpop.permute.xlu0 %935
      %v969 = vsel %vm183, %v294, %v618
      %v970 = vsel %vm183, %v295, %v620
      %v971 = vsel %vm183, %v296, %v622
      %v972 = vsel %vm183, %v297, %v624
      %v973 = vsel %vm183, %v298, %v626
      %v974 = vsel %vm183, %v299, %v628
      %v975 = vsel %vm183, %v300, %v630
      %v976 = vsel %vm183, %v301, %v632
      %v977 = vsel %vm183, %v302, %v634
      %v978 = vsel %vm183, %v303, %v636
      %v979 = vsel %vm183, %v304, %v638
      %v980 = vsel %vm183, %v305, %v640
      %v981 = vsel %vm183, %v306, %v642
      %v982 = vsel %vm183, %v307, %v644
      %v983 = vsel %vm183, %v308, %v646
      %v984 = vsel %vm183, %v309, %v648
      %v985 = vsel %vm183, %v310, %v650
      %v986 = vsel %vm183, %v311, %v652
      %v987 = vsel %vm183, %v312, %v654
      %v988 = vsel %vm183, %v313, %v656
      %v989 = vsel %vm183, %v314, %v658
      %v990 = vsel %vm183, %v315, %v660
      %v991 = vsel %vm183, %v316, %v662
      %v992 = vsel %vm183, %v317, %v664
      %v993 = vsel %vm183, %v318, %v666
      %v994 = vsel %vm183, %v319, %v668
      %v995 = vsel %vm183, %v320, %v670
      %v996 = vsel %vm183, %v321, %v672
      %v997 = vsel %vm183, %v322, %v674
      %v998 = vsel %vm183, %v323, %v676
      %v999 = vsel %vm183, %v324, %v678
      %v1000 = vsel %vm183, %v325, %v680
      %vm1001 = vcmask 64512
      %v1002 = vsel %vm1001, %v969, %v746
      %v1003 = vsel %vm1001, %v970, %v748
      %v1004 = vsel %vm1001, %v971, %v750
      %v1005 = vsel %vm1001, %v972, %v752
      %v1006 = vsel %vm1001, %v973, %v754
      %v1007 = vsel %vm1001, %v974, %v756
      %v1008 = vsel %vm1001, %v975, %v758
      %v1009 = vsel %vm1001, %v976, %v760
      %v1010 = vsel %vm1001, %v977, %v762
      %v1011 = vsel %vm1001, %v978, %v764
      %v1012 = vsel %vm1001, %v979, %v766
      %v1013 = vsel %vm1001, %v980, %v768
      %v1014 = vsel %vm1001, %v981, %v770
      %v1015 = vsel %vm1001, %v982, %v772
      %v1016 = vsel %vm1001, %v983, %v774
      %v1017 = vsel %vm1001, %v984, %v776
      %v1018 = vsel %vm1001, %v985, %v778
      %v1019 = vsel %vm1001, %v986, %v780
      %v1020 = vsel %vm1001, %v987, %v782
      %v1021 = vsel %vm1001, %v988, %v784
      %v1022 = vsel %vm1001, %v989, %v786
      %v1023 = vsel %vm1001, %v990, %v788
      %v1024 = vsel %vm1001, %v991, %v790
      %v1025 = vsel %vm1001, %v992, %v792
      %v1026 = vsel %vm1001, %v993, %v794
      %v1027 = vsel %vm1001, %v994, %v796
      %v1028 = vsel %vm1001, %v995, %v798
      %v1029 = vsel %vm1001, %v996, %v800
      %v1030 = vsel %vm1001, %v997, %v802
      %v1031 = vsel %vm1001, %v998, %v804
      %v1032 = vsel %vm1001, %v999, %v806
      %v1033 = vsel %vm1001, %v1000, %v808
      %vm1034 = vcmask 97280
      %v1035 = vsel %vm1034, %v1002, %v874
      %v1036 = vsel %vm1034, %v1003, %v876
      %v1037 = vsel %vm1034, %v1004, %v878
      %v1038 = vsel %vm1034, %v1005, %v880
      %v1039 = vsel %vm1034, %v1006, %v882
      %v1040 = vsel %vm1034, %v1007, %v884
      %v1041 = vsel %vm1034, %v1008, %v886
      %v1042 = vsel %vm1034, %v1009, %v888
      %v1043 = vsel %vm1034, %v1010, %v890
      %v1044 = vsel %vm1034, %v1011, %v892
      %v1045 = vsel %vm1034, %v1012, %v894
      %v1046 = vsel %vm1034, %v1013, %v896
      %v1047 = vsel %vm1034, %v1014, %v898
      %v1048 = vsel %vm1034, %v1015, %v900
      %v1049 = vsel %vm1034, %v1016, %v902
      %v1050 = vsel %vm1034, %v1017, %v904
      %v1051 = vsel %vm1034, %v1018, %v906
      %v1052 = vsel %vm1034, %v1019, %v908
      %v1053 = vsel %vm1034, %v1020, %v910
      %v1054 = vsel %vm1034, %v1021, %v912
      %v1055 = vsel %vm1034, %v1022, %v914
      %v1056 = vsel %vm1034, %v1023, %v916
      %v1057 = vsel %vm1034, %v1024, %v918
      %v1058 = vsel %vm1034, %v1025, %v920
      %v1059 = vsel %vm1034, %v1026, %v922
      %v1060 = vsel %vm1034, %v1027, %v924
      %v1061 = vsel %vm1034, %v1028, %v926
      %v1062 = vsel %vm1034, %v1029, %v928
      %v1063 = vsel %vm1034, %v1030, %v930
      %v1064 = vsel %vm1034, %v1031, %v932
      %v1065 = vsel %vm1034, %v1032, %v934
      %v1066 = vsel %vm1034, %v1033, %v936
      %vm1067 = vcmask 130048
      %v1069 = vsel %vm1067, %v1035, 0
      %v1072 = vsel %vm1067, %v1036, 0
      %v1075 = vsel %vm1067, %v1037, 0
      %v1078 = vsel %vm1067, %v1038, 0
      %v1081 = vsel %vm1067, %v1039, 0
      %v1084 = vsel %vm1067, %v1040, 0
      %v1087 = vsel %vm1067, %v1041, 0
      %v1090 = vsel %vm1067, %v1042, 0
      %v1093 = vsel %vm1067, %v1043, 0
      %v1096 = vsel %vm1067, %v1044, 0
      %v1099 = vsel %vm1067, %v1045, 0
      %v1102 = vsel %vm1067, %v1046, 0
      %v1105 = vsel %vm1067, %v1047, 0
      %v1108 = vsel %vm1067, %v1048, 0
      %v1111 = vsel %vm1067, %v1049, 0
      %v1114 = vsel %vm1067, %v1050, 0
      %v1117 = vsel %vm1067, %v1051, 0
      %v1120 = vsel %vm1067, %v1052, 0
      %v1123 = vsel %vm1067, %v1053, 0
      %v1126 = vsel %vm1067, %v1054, 0
      %v1129 = vsel %vm1067, %v1055, 0
      %v1132 = vsel %vm1067, %v1056, 0
      %v1135 = vsel %vm1067, %v1057, 0
      %v1138 = vsel %vm1067, %v1058, 0
      %v1141 = vsel %vm1067, %v1059, 0
      %v1144 = vsel %vm1067, %v1060, 0
      %v1147 = vsel %vm1067, %v1061, 0
      %v1150 = vsel %vm1067, %v1062, 0
      %v1153 = vsel %vm1067, %v1063, 0
      %v1156 = vsel %vm1067, %v1064, 0
      %v1159 = vsel %vm1067, %v1065, 0
      %v1162 = vsel %vm1067, %v1066, 0
      %1164 = vmatprep.subr.mxu0 0.0
      %1165 = vmatpush1.msra.mxu0 %v583
      %1166 = vmatprep.subr.mxu0 0.0
      %1167 = vmatpush1.msra.mxu0 %v584
      %1168 = vmatprep.subr.mxu0 0.0
      %1169 = vmatpush1.msra.mxu0 0.0
      %1170 = vmatprep.subr.mxu0 0.0
      %1171 = vmatpush1.msra.mxu0 0.0
      %1172 = vmatprep.subr.mxu0 0.0
      %1173 = vmatpush1.msra.mxu0 0.0
      %1174 = vmatprep.subr.mxu0 0.0
      %1175 = vmatpush1.msra.mxu0 0.0
      %1176 = vmatprep.subr.mxu0 0.0
      %1177 = vmatpush1.msra.mxu0 0.0
      %1178 = vmatprep.subr.mxu0 0.0
      %1179 = vmatpush1.msra.mxu0 0.0
      %1180 = vmatprep.subr.mxu0 0.0
      %1181 = vmatpush1.msra.mxu0 0.0
      %1182 = vmatprep.subr.mxu0 0.0
      %1183 = vmatpush1.msra.mxu0 0.0
      %1184 = vmatprep.subr.mxu0 0.0
      %1185 = vmatpush1.msra.mxu0 0.0
      %1186 = vmatprep.subr.mxu0 0.0
      %1187 = vmatpush1.msra.mxu0 0.0
      %1188 = vmatprep.subr.mxu0 0.0
      %1189 = vmatpush1.msra.mxu0 0.0
      %1190 = vmatprep.subr.mxu0 0.0
      %1191 = vmatpush1.msra.mxu0 0.0
      %1192 = vmatprep.subr.mxu0 0.0
      %1193 = vmatpush1.msra.mxu0 0.0
      %1194 = vmatprep.subr.mxu0 0.0
      %1195 = vmatpush1.msra.mxu0 0.0
      %1196 = vmatprep.subr.mxu0 0.0
      %1197 = vmatpush1.msra.mxu0 0.0
      %1198 = vmatprep.subr.mxu0 0.0
      %1199 = vmatpush1.msra.mxu0 0.0
      %1200 = vmatprep.subr.mxu0 0.0
      %1201 = vmatpush1.msra.mxu0 0.0
      %1202 = vmatprep.subr.mxu0 0.0
      %1203 = vmatpush1.msra.mxu0 0.0
      %1204 = vmatprep.subr.mxu0 0.0
      %1205 = vmatpush1.msra.mxu0 0.0
      %1206 = vmatprep.subr.mxu0 0.0
      %1207 = vmatpush1.msra.mxu0 0.0
      %1208 = vmatprep.subr.mxu0 0.0
      %1209 = vmatpush1.msra.mxu0 0.0
      %1210 = vmatprep.subr.mxu0 0.0
      %1211 = vmatpush1.msra.mxu0 0.0
      %1212 = vmatprep.subr.mxu0 0.0
      %1213 = vmatpush1.msra.mxu0 0.0
      %1214 = vmatprep.subr.mxu0 0.0
      %1215 = vmatpush1.msra.mxu0 0.0
      %1216 = vmatprep.subr.mxu0 0.0
      %1217 = vmatpush1.msra.mxu0 0.0
      %1218 = vmatprep.subr.mxu0 0.0
      %1219 = vmatpush1.msra.mxu0 0.0
      %1220 = vmatprep.subr.mxu0 0.0
      %1221 = vmatpush1.msra.mxu0 0.0
      %1222 = vmatprep.subr.mxu0 0.0
      %1223 = vmatpush1.msra.mxu0 0.0
      %1224 = vmatprep.subr.mxu0 0.0
      %1225 = vmatpush1.msra.mxu0 0.0
      %1226 = vmatprep.subr.mxu0 0.0
      %1227 = vmatpush1.msra.mxu0 0.0
      %1228 = vmatprep.mubr.f32.mxu0 0.0
      %1229 = vmatmul.mubr.f32.gmra.mrb[0].mxu0 %v1069
      %v1230 = vpop.f32.mrb[0].mxu0
      %v1231 = vadd.f32 0.0, %v1230
      %v1232 = vpop.f32.mrb[0].mxu0
      %1233 = vmatprep.mubr.f32.mxu0 0.0
      %1234 = vmatmul.mubr.f32.gmra.mrb[0].mxu0 %v1072
      %v1235 = vpop.f32.mrb[0].mxu0
      %v1236 = vadd.f32 0.0, %v1235
      %v1237 = vpop.f32.mrb[0].mxu0
      %1238 = vmatprep.mubr.f32.mxu0 0.0
      %1239 = vmatmul.mubr.f32.gmra.mrb[0].mxu0 %v1075
      %v1240 = vpop.f32.mrb[0].mxu0
      %v1241 = vadd.f32 0.0, %v1240
      %v1242 = vpop.f32.mrb[0].mxu0
      %1243 = vmatprep.mubr.f32.mxu0 0.0
      %1244 = vmatmul.mubr.f32.gmra.mrb[0].mxu0 %v1078
      %v1245 = vpop.f32.mrb[0].mxu0
      %v1246 = vadd.f32 0.0, %v1245
      %v1247 = vpop.f32.mrb[0].mxu0
      %1248 = vmatprep.mubr.f32.mxu0 0.0
      %1249 = vmatmul.mubr.f32.gmra.mrb[0].mxu0 %v1081
      %v1250 = vpop.f32.mrb[0].mxu0
      %v1251 = vadd.f32 0.0, %v1250
      %v1252 = vpop.f32.mrb[0].mxu0
      %1253 = vmatprep.mubr.f32.mxu0 0.0
      %1254 = vmatmul.mubr.f32.gmra.mrb[0].mxu0 %v1084
      %v1255 = vpop.f32.mrb[0].mxu0
      %v1256 = vadd.f32 0.0, %v1255
      %v1257 = vpop.f32.mrb[0].mxu0
      %1258 = vmatprep.mubr.f32.mxu0 0.0
      %1259 = vmatmul.mubr.f32.gmra.mrb[0].mxu0 %v1087
      %v1260 = vpop.f32.mrb[0].mxu0
      %v1261 = vadd.f32 0.0, %v1260
      %v1262 = vpop.f32.mrb[0].mxu0
      %1263 = vmatprep.mubr.f32.mxu0 0.0
      %1264 = vmatmul.mubr.f32.gmra.mrb[0].mxu0 %v1090
      %v1265 = vpop.f32.mrb[0].mxu0
      %v1266 = vadd.f32 0.0, %v1265
      %v1267 = vpop.f32.mrb[0].mxu0
      %1268 = vmatprep.mubr.f32.mxu0 0.0
      %1269 = vmatmul.mubr.f32.gmra.mrb[0].mxu0 %v1093
      %v1270 = vpop.f32.mrb[0].mxu0
      %v1271 = vadd.f32 0.0, %v1270
      %v1272 = vpop.f32.mrb[0].mxu0
      %1273 = vmatprep.mubr.f32.mxu0 0.0
      %1274 = vmatmul.mubr.f32.gmra.mrb[0].mxu0 %v1096
      %v1275 = vpop.f32.mrb[0].mxu0
      %v1276 = vadd.f32 0.0, %v1275
      %v1277 = vpop.f32.mrb[0].mxu0
      %1278 = vmatprep.mubr.f32.mxu0 0.0
      %1279 = vmatmul.mubr.f32.gmra.mrb[0].mxu0 %v1099
      %v1280 = vpop.f32.mrb[0].mxu0
      %v1281 = vadd.f32 0.0, %v1280
      %v1282 = vpop.f32.mrb[0].mxu0
      %1283 = vmatprep.mubr.f32.mxu0 0.0
      %1284 = vmatmul.mubr.f32.gmra.mrb[0].mxu0 %v1102
      %v1285 = vpop.f32.mrb[0].mxu0
      %v1286 = vadd.f32 0.0, %v1285
      %v1287 = vpop.f32.mrb[0].mxu0
      %1288 = vmatprep.mubr.f32.mxu0 0.0
      %1289 = vmatmul.mubr.f32.gmra.mrb[0].mxu0 %v1105
      %v1290 = vpop.f32.mrb[0].mxu0
      %v1291 = vadd.f32 0.0, %v1290
      %v1292 = vpop.f32.mrb[0].mxu0
      %1293 = vmatprep.mubr.f32.mxu0 0.0
      %1294 = vmatmul.mubr.f32.gmra.mrb[0].mxu0 %v1108
      %v1295 = vpop.f32.mrb[0].mxu0
      %v1296 = vadd.f32 0.0, %v1295
      %v1297 = vpop.f32.mrb[0].mxu0
      %1298 = vmatprep.mubr.f32.mxu0 0.0
      %1299 = vmatmul.mubr.f32.gmra.mrb[0].mxu0 %v1111
      %v1300 = vpop.f32.mrb[0].mxu0
      %v1301 = vadd.f32 0.0, %v1300
      %v1302 = vpop.f32.mrb[0].mxu0
      %1303 = vmatprep.mubr.f32.mxu0 0.0
      %1304 = vmatmul.mubr.f32.gmra.mrb[0].mxu0 %v1114
      %v1305 = vpop.f32.mrb[0].mxu0
      %v1306 = vadd.f32 0.0, %v1305
      %v1307 = vpop.f32.mrb[0].mxu0
      %1308 = vmatprep.mubr.f32.mxu0 0.0
      %1309 = vmatmul.mubr.f32.gmra.mrb[0].mxu0 %v1117
      %v1310 = vpop.f32.mrb[0].mxu0
      %v1311 = vadd.f32 0.0, %v1310
      %v1312 = vpop.f32.mrb[0].mxu0
      %1313 = vmatprep.mubr.f32.mxu0 0.0
      %1314 = vmatmul.mubr.f32.gmra.mrb[0].mxu0 %v1120
      %v1315 = vpop.f32.mrb[0].mxu0
      %v1316 = vadd.f32 0.0, %v1315
      %v1317 = vpop.f32.mrb[0].mxu0
      %1318 = vmatprep.mubr.f32.mxu0 0.0
      %1319 = vmatmul.mubr.f32.gmra.mrb[0].mxu0 %v1123
      %v1320 = vpop.f32.mrb[0].mxu0
      %v1321 = vadd.f32 0.0, %v1320
      %v1322 = vpop.f32.mrb[0].mxu0
      %1323 = vmatprep.mubr.f32.mxu0 0.0
      %1324 = vmatmul.mubr.f32.gmra.mrb[0].mxu0 %v1126
      %v1325 = vpop.f32.mrb[0].mxu0
      %v1326 = vadd.f32 0.0, %v1325
      %v1327 = vpop.f32.mrb[0].mxu0
      %1328 = vmatprep.mubr.f32.mxu0 0.0
      %1329 = vmatmul.mubr.f32.gmra.mrb[0].mxu0 %v1129
      %v1330 = vpop.f32.mrb[0].mxu0
      %v1331 = vadd.f32 0.0, %v1330
      %v1332 = vpop.f32.mrb[0].mxu0
      %1333 = vmatprep.mubr.f32.mxu0 0.0
      %1334 = vmatmul.mubr.f32.gmra.mrb[0].mxu0 %v1132
      %v1335 = vpop.f32.mrb[0].mxu0
      %v1336 = vadd.f32 0.0, %v1335
      %v1337 = vpop.f32.mrb[0].mxu0
      %1338 = vmatprep.mubr.f32.mxu0 0.0
      %1339 = vmatmul.mubr.f32.gmra.mrb[0].mxu0 %v1135
      %v1340 = vpop.f32.mrb[0].mxu0
      %v1341 = vadd.f32 0.0, %v1340
      %v1342 = vpop.f32.mrb[0].mxu0
      %1343 = vmatprep.mubr.f32.mxu0 0.0
      %1344 = vmatmul.mubr.f32.gmra.mrb[0].mxu0 %v1138
      %v1345 = vpop.f32.mrb[0].mxu0
      %v1346 = vadd.f32 0.0, %v1345
      %v1347 = vpop.f32.mrb[0].mxu0
      %1348 = vmatprep.mubr.f32.mxu0 0.0
      %1349 = vmatmul.mubr.f32.gmra.mrb[0].mxu0 %v1141
      %v1350 = vpop.f32.mrb[0].mxu0
      %v1351 = vadd.f32 0.0, %v1350
      %v1352 = vpop.f32.mrb[0].mxu0
      %1353 = vmatprep.mubr.f32.mxu0 0.0
      %1354 = vmatmul.mubr.f32.gmra.mrb[0].mxu0 %v1144
      %v1355 = vpop.f32.mrb[0].mxu0
      %v1356 = vadd.f32 0.0, %v1355
      %v1357 = vpop.f32.mrb[0].mxu0
      %1358 = vmatprep.mubr.f32.mxu0 0.0
      %1359 = vmatmul.mubr.f32.gmra.mrb[0].mxu0 %v1147
      %v1360 = vpop.f32.mrb[0].mxu0
      %v1361 = vadd.f32 0.0, %v1360
      %v1362 = vpop.f32.mrb[0].mxu0
      %1363 = vmatprep.mubr.f32.mxu0 0.0
      %1364 = vmatmul.mubr.f32.gmra.mrb[0].mxu0 %v1150
      %v1365 = vpop.f32.mrb[0].mxu0
      %v1366 = vadd.f32 0.0, %v1365
      %v1367 = vpop.f32.mrb[0].mxu0
      %1368 = vmatprep.mubr.f32.mxu0 0.0
      %1369 = vmatmul.mubr.f32.gmra.mrb[0].mxu0 %v1153
      %v1370 = vpop.f32.mrb[0].mxu0
      %v1371 = vadd.f32 0.0, %v1370
      %v1372 = vpop.f32.mrb[0].mxu0
      %1373 = vmatprep.mubr.f32.mxu0 0.0
      %1374 = vmatmul.mubr.f32.gmra.mrb[0].mxu0 %v1156
      %v1375 = vpop.f32.mrb[0].mxu0
      %v1376 = vadd.f32 0.0, %v1375
      %v1377 = vpop.f32.mrb[0].mxu0
      %1378 = vmatprep.mubr.f32.mxu0 0.0
      %1379 = vmatmul.mubr.f32.gmra.mrb[0].mxu0 %v1159
      %v1380 = vpop.f32.mrb[0].mxu0
      %v1381 = vadd.f32 0.0, %v1380
      %v1382 = vpop.f32.mrb[0].mxu0
      %1383 = vmatprep.mubr.f32.mxu0 0.0
      %1384 = vmatmul.mubr.f32.gmra.mrb[0].mxu0 %v1162
      %v1385 = vpop.f32.mrb[0].mxu0
      %v1386 = vadd.f32 0.0, %v1385
      %v1387 = vpop.f32.mrb[0].mxu0
      %1388 = vdwg.mxu0
      %1389 = vst.msk [vmem:[#allocation3] sm:$0xff] %vm1001, %v1231
      %1390 = vst.msk [vmem:[#allocation3 + $0x8] sm:$0xff] %vm1001, %v1236
      %1391 = vst.msk [vmem:[#allocation3 + $0x10] sm:$0xff] %vm1001, %v1241
      %1392 = vst.msk [vmem:[#allocation3 + $0x18] sm:$0xff] %vm1001, %v1246
      %1393 = vst.msk [vmem:[#allocation3 + $0x20] sm:$0xff] %vm1001, %v1251
      %1394 = vst.msk [vmem:[#allocation3 + $0x28] sm:$0xff] %vm1001, %v1256
      %1395 = vst.msk [vmem:[#allocation3 + $0x30] sm:$0xff] %vm1001, %v1261
      %1396 = vst.msk [vmem:[#allocation3 + $0x38] sm:$0xff] %vm1001, %v1266
      %1397 = vst.msk [vmem:[#allocation3 + $0x40] sm:$0xff] %vm1001, %v1271
      %1398 = vst.msk [vmem:[#allocation3 + $0x48] sm:$0xff] %vm1001, %v1276
      %1399 = vst.msk [vmem:[#allocation3 + $0x50] sm:$0xff] %vm1001, %v1281
      %1400 = vst.msk [vmem:[#allocation3 + $0x58] sm:$0xff] %vm1001, %v1286
      %1401 = vst.msk [vmem:[#allocation3 + $0x60] sm:$0xff] %vm1001, %v1291
      %1402 = vst.msk [vmem:[#allocation3 + $0x68] sm:$0xff] %vm1001, %v1296
      %1403 = vst.msk [vmem:[#allocation3 + $0x70] sm:$0xff] %vm1001, %v1301
      %1404 = vst.msk [vmem:[#allocation3 + $0x78] sm:$0xff] %vm1001, %v1306
      %1405 = vst.msk [vmem:[#allocation3 + $0x80] sm:$0xff] %vm1001, %v1311
      %1406 = vst.msk [vmem:[#allocation3 + $0x88] sm:$0xff] %vm1001, %v1316
      %1407 = vst.msk [vmem:[#allocation3 + $0x90] sm:$0xff] %vm1001, %v1321
      %1408 = vst.msk [vmem:[#allocation3 + $0x98] sm:$0xff] %vm1001, %v1326
      %1409 = vst.msk [vmem:[#allocation3 + $0xa0] sm:$0xff] %vm1001, %v1331
      %1410 = vst.msk [vmem:[#allocation3 + $0xa8] sm:$0xff] %vm1001, %v1336
      %1411 = vst.msk [vmem:[#allocation3 + $0xb0] sm:$0xff] %vm1001, %v1341
      %1412 = vst.msk [vmem:[#allocation3 + $0xb8] sm:$0xff] %vm1001, %v1346
      %1413 = vst.msk [vmem:[#allocation3 + $0xc0] sm:$0xff] %vm1001, %v1351
      %1414 = vst.msk [vmem:[#allocation3 + $0xc8] sm:$0xff] %vm1001, %v1356
      %1415 = vst.msk [vmem:[#allocation3 + $0xd0] sm:$0xff] %vm1001, %v1361
      %1416 = vst.msk [vmem:[#allocation3 + $0xd8] sm:$0xff] %vm1001, %v1366
      %1417 = vst.msk [vmem:[#allocation3 + $0xe0] sm:$0xff] %vm1001, %v1371
      %1418 = vst.msk [vmem:[#allocation3 + $0xe8] sm:$0xff] %vm1001, %v1376
      %1419 = vst.msk [vmem:[#allocation3 + $0xf0] sm:$0xff] %vm1001, %v1381
      %1420 = vst.msk [vmem:[#allocation3 + $0xf8] sm:$0xff] %vm1001, %v1386
      %v1421 = vsel %vm1001, %v1231, 0.0
      %v1422 = vsel %vm1001, %v1236, 0.0
      %v1423 = vadd.f32 %v1421, %v1422
      %v1424 = vsel %vm1001, %v1241, 0.0
      %v1425 = vadd.f32 %v1423, %v1424
      %v1426 = vsel %vm1001, %v1246, 0.0
      %v1427 = vadd.f32 %v1425, %v1426
      %v1428 = vsel %vm1001, %v1251, 0.0
      %v1429 = vadd.f32 %v1427, %v1428
      %v1430 = vsel %vm1001, %v1256, 0.0
      %v1431 = vadd.f32 %v1429, %v1430
      %v1432 = vsel %vm1001, %v1261, 0.0
      %v1433 = vadd.f32 %v1431, %v1432
      %v1434 = vsel %vm1001, %v1266, 0.0
      %v1435 = vadd.f32 %v1433, %v1434
      %v1436 = vsel %vm1001, %v1271, 0.0
      %v1437 = vadd.f32 %v1435, %v1436
      %v1438 = vsel %vm1001, %v1276, 0.0
      %v1439 = vadd.f32 %v1437, %v1438
      %v1440 = vsel %vm1001, %v1281, 0.0
      %v1441 = vadd.f32 %v1439, %v1440
      %v1442 = vsel %vm1001, %v1286, 0.0
      %v1443 = vadd.f32 %v1441, %v1442
      %v1444 = vsel %vm1001, %v1291, 0.0
      %v1445 = vadd.f32 %v1443, %v1444
      %v1446 = vsel %vm1001, %v1296, 0.0
      %v1447 = vadd.f32 %v1445, %v1446
      %v1448 = vsel %vm1001, %v1301, 0.0
      %v1449 = vadd.f32 %v1447, %v1448
      %v1450 = vsel %vm1001, %v1306, 0.0
      %v1451 = vadd.f32 %v1449, %v1450
      %v1452 = vsel %vm1001, %v1311, 0.0
      %v1453 = vadd.f32 %v1451, %v1452
      %v1454 = vsel %vm1001, %v1316, 0.0
      %v1455 = vadd.f32 %v1453, %v1454
      %v1456 = vsel %vm1001, %v1321, 0.0
      %v1457 = vadd.f32 %v1455, %v1456
      %v1458 = vsel %vm1001, %v1326, 0.0
      %v1459 = vadd.f32 %v1457, %v1458
      %v1460 = vsel %vm1001, %v1331, 0.0
      %v1461 = vadd.f32 %v1459, %v1460
      %v1462 = vsel %vm1001, %v1336, 0.0
      %v1463 = vadd.f32 %v1461, %v1462
      %v1464 = vsel %vm1001, %v1341, 0.0
      %v1465 = vadd.f32 %v1463, %v1464
      %v1466 = vsel %vm1001, %v1346, 0.0
      %v1467 = vadd.f32 %v1465, %v1466
      %v1468 = vsel %vm1001, %v1351, 0.0
      %v1469 = vadd.f32 %v1467, %v1468
      %v1470 = vsel %vm1001, %v1356, 0.0
      %v1471 = vadd.f32 %v1469, %v1470
      %v1472 = vsel %vm1001, %v1361, 0.0
      %v1473 = vadd.f32 %v1471, %v1472
      %v1474 = vsel %vm1001, %v1366, 0.0
      %v1475 = vadd.f32 %v1473, %v1474
      %v1476 = vsel %vm1001, %v1371, 0.0
      %v1477 = vadd.f32 %v1475, %v1476
      %v1478 = vsel %vm1001, %v1376, 0.0
      %v1479 = vadd.f32 %v1477, %v1478
      %v1480 = vsel %vm1001, %v1381, 0.0
      %v1481 = vadd.f32 %v1479, %v1480
      %v1482 = vsel %vm1001, %v1386, 0.0
      %v1483 = vadd.f32 %v1481, %v1482
      %v1484 = vrot.slane %v1483, 4
      %v1485 = vadd.f32 %v1483, %v1484
      %v1486 = vrot.slane %v1485, 2
      %v1487 = vadd.f32 %v1485, %v1486
      %v1488 = vrot.slane %v1487, 1
      %v1489 = vadd.f32 %v1487, %v1488
      %v1490 = vadd.f32 %v1489, 0.0
      %v1491 = vmul.f32 %v1231, %v1231
      %v1492 = vmul.f32 %v1236, %v1236
      %v1493 = vmul.f32 %v1241, %v1241
      %v1494 = vmul.f32 %v1246, %v1246
      %v1495 = vmul.f32 %v1251, %v1251
      %v1496 = vmul.f32 %v1256, %v1256
      %v1497 = vmul.f32 %v1261, %v1261
      %v1498 = vmul.f32 %v1266, %v1266
      %v1499 = vmul.f32 %v1271, %v1271
      %v1500 = vmul.f32 %v1276, %v1276
      %v1501 = vmul.f32 %v1281, %v1281
      %v1502 = vmul.f32 %v1286, %v1286
      %v1503 = vmul.f32 %v1291, %v1291
      %v1504 = vmul.f32 %v1296, %v1296
      %v1505 = vmul.f32 %v1301, %v1301
      %v1506 = vmul.f32 %v1306, %v1306
      %v1507 = vmul.f32 %v1311, %v1311
      %v1508 = vmul.f32 %v1316, %v1316
      %v1509 = vmul.f32 %v1321, %v1321
      %v1510 = vmul.f32 %v1326, %v1326
      %v1511 = vmul.f32 %v1331, %v1331
      %v1512 = vmul.f32 %v1336, %v1336
      %v1513 = vmul.f32 %v1341, %v1341
      %v1514 = vmul.f32 %v1346, %v1346
      %v1515 = vmul.f32 %v1351, %v1351
      %v1516 = vmul.f32 %v1356, %v1356
      %v1517 = vmul.f32 %v1361, %v1361
      %v1518 = vmul.f32 %v1366, %v1366
      %v1519 = vmul.f32 %v1371, %v1371
      %v1520 = vmul.f32 %v1376, %v1376
      %v1521 = vmul.f32 %v1381, %v1381
      %v1522 = vmul.f32 %v1386, %v1386
      %v1523 = vsel %vm1001, %v1491, 0.0
      %v1524 = vsel %vm1001, %v1492, 0.0
      %v1525 = vadd.f32 %v1523, %v1524
      %v1526 = vsel %vm1001, %v1493, 0.0
      %v1527 = vadd.f32 %v1525, %v1526
      %v1528 = vsel %vm1001, %v1494, 0.0
      %v1529 = vadd.f32 %v1527, %v1528
      %v1530 = vsel %vm1001, %v1495, 0.0
      %v1531 = vadd.f32 %v1529, %v1530
      %v1532 = vsel %vm1001, %v1496, 0.0
      %v1533 = vadd.f32 %v1531, %v1532
      %v1534 = vsel %vm1001, %v1497, 0.0
      %v1535 = vadd.f32 %v1533, %v1534
      %v1536 = vsel %vm1001, %v1498, 0.0
      %v1537 = vadd.f32 %v1535, %v1536
      %v1538 = vsel %vm1001, %v1499, 0.0
      %v1539 = vadd.f32 %v1537, %v1538
      %v1540 = vsel %vm1001, %v1500, 0.0
      %v1541 = vadd.f32 %v1539, %v1540
      %v1542 = vsel %vm1001, %v1501, 0.0
      %v1543 = vadd.f32 %v1541, %v1542
      %v1544 = vsel %vm1001, %v1502, 0.0
      %v1545 = vadd.f32 %v1543, %v1544
      %v1546 = vsel %vm1001, %v1503, 0.0
      %v1547 = vadd.f32 %v1545, %v1546
      %v1548 = vsel %vm1001, %v1504, 0.0
      %v1549 = vadd.f32 %v1547, %v1548
      %v1550 = vsel %vm1001, %v1505, 0.0
      %v1551 = vadd.f32 %v1549, %v1550
      %v1552 = vsel %vm1001, %v1506, 0.0
      %v1553 = vadd.f32 %v1551, %v1552
      %v1554 = vsel %vm1001, %v1507, 0.0
      %v1555 = vadd.f32 %v1553, %v1554
      %v1556 = vsel %vm1001, %v1508, 0.0
      %v1557 = vadd.f32 %v1555, %v1556
      %v1558 = vsel %vm1001, %v1509, 0.0
      %v1559 = vadd.f32 %v1557, %v1558
      %v1560 = vsel %vm1001, %v1510, 0.0
      %v1561 = vadd.f32 %v1559, %v1560
      %v1562 = vsel %vm1001, %v1511, 0.0
      %v1563 = vadd.f32 %v1561, %v1562
      %v1564 = vsel %vm1001, %v1512, 0.0
      %v1565 = vadd.f32 %v1563, %v1564
      %v1566 = vsel %vm1001, %v1513, 0.0
      %v1567 = vadd.f32 %v1565, %v1566
      %v1568 = vsel %vm1001, %v1514, 0.0
      %v1569 = vadd.f32 %v1567, %v1568
      %v1570 = vsel %vm1001, %v1515, 0.0
      %v1571 = vadd.f32 %v1569, %v1570
      %v1572 = vsel %vm1001, %v1516, 0.0
      %v1573 = vadd.f32 %v1571, %v1572
      %v1574 = vsel %vm1001, %v1517, 0.0
      %v1575 = vadd.f32 %v1573, %v1574
      %v1576 = vsel %vm1001, %v1518, 0.0
      %v1577 = vadd.f32 %v1575, %v1576
      %v1578 = vsel %vm1001, %v1519, 0.0
      %v1579 = vadd.f32 %v1577, %v1578
      %v1580 = vsel %vm1001, %v1520, 0.0
      %v1581 = vadd.f32 %v1579, %v1580
      %v1582 = vsel %vm1001, %v1521, 0.0
      %v1583 = vadd.f32 %v1581, %v1582
      %v1584 = vsel %vm1001, %v1522, 0.0
      %v1585 = vadd.f32 %v1583, %v1584
      %v1586 = vrot.slane %v1585, 4
      %v1587 = vadd.f32 %v1585, %v1586
      %v1588 = vrot.slane %v1587, 2
      %v1589 = vadd.f32 %v1587, %v1588
      %v1590 = vrot.slane %v1589, 1
      %v1591 = vadd.f32 %v1589, %v1590
      %v1592 = vadd.f32 %v1591, 0.0
      %s1593 = scalar_lea.vmem %s173, 16
      %v1594 = vld [vmem:[%s1593] sm:$0xff]
      %v1595 = vld [vmem:[%s1593 + $0x8] sm:$0xff]
      %1628 = vrot.lane.b32.xlu0 %v358, 4
      %v1629 = vpop.permute.xlu0 %1628
      %1630 = vrot.lane.b32.xlu0 %v359, 4
      %v1631 = vpop.permute.xlu0 %1630
      %1632 = vrot.lane.b32.xlu0 %v360, 4
      %v1633 = vpop.permute.xlu0 %1632
      %1634 = vrot.lane.b32.xlu0 %v361, 4
      %v1635 = vpop.permute.xlu0 %1634
      %1636 = vrot.lane.b32.xlu0 %v362, 4
      %v1637 = vpop.permute.xlu0 %1636
      %1638 = vrot.lane.b32.xlu0 %v363, 4
      %v1639 = vpop.permute.xlu0 %1638
      %1640 = vrot.lane.b32.xlu0 %v364, 4
      %v1641 = vpop.permute.xlu0 %1640
      %1642 = vrot.lane.b32.xlu0 %v365, 4
      %v1643 = vpop.permute.xlu0 %1642
      %1644 = vrot.lane.b32.xlu0 %v366, 4
      %v1645 = vpop.permute.xlu0 %1644
      %1646 = vrot.lane.b32.xlu0 %v367, 4
      %v1647 = vpop.permute.xlu0 %1646
      %1648 = vrot.lane.b32.xlu0 %v368, 4
      %v1649 = vpop.permute.xlu0 %1648
      %1650 = vrot.lane.b32.xlu0 %v369, 4
      %v1651 = vpop.permute.xlu0 %1650
      %1652 = vrot.lane.b32.xlu0 %v370, 4
      %v1653 = vpop.permute.xlu0 %1652
      %1654 = vrot.lane.b32.xlu0 %v371, 4
      %v1655 = vpop.permute.xlu0 %1654
      %1656 = vrot.lane.b32.xlu0 %v372, 4
      %v1657 = vpop.permute.xlu0 %1656
      %1658 = vrot.lane.b32.xlu0 %v373, 4
      %v1659 = vpop.permute.xlu0 %1658
      %1660 = vrot.lane.b32.xlu0 %v374, 4
      %v1661 = vpop.permute.xlu0 %1660
      %1662 = vrot.lane.b32.xlu0 %v375, 4
      %v1663 = vpop.permute.xlu0 %1662
      %1664 = vrot.lane.b32.xlu0 %v376, 4
      %v1665 = vpop.permute.xlu0 %1664
      %1666 = vrot.lane.b32.xlu0 %v377, 4
      %v1667 = vpop.permute.xlu0 %1666
      %1668 = vrot.lane.b32.xlu0 %v378, 4
      %v1669 = vpop.permute.xlu0 %1668
      %1670 = vrot.lane.b32.xlu0 %v379, 4
      %v1671 = vpop.permute.xlu0 %1670
      %1672 = vrot.lane.b32.xlu0 %v380, 4
      %v1673 = vpop.permute.xlu0 %1672
      %1674 = vrot.lane.b32.xlu0 %v381, 4
      %v1675 = vpop.permute.xlu0 %1674
      %1676 = vrot.lane.b32.xlu0 %v382, 4
      %v1677 = vpop.permute.xlu0 %1676
      %1678 = vrot.lane.b32.xlu0 %v383, 4
      %v1679 = vpop.permute.xlu0 %1678
      %1680 = vrot.lane.b32.xlu0 %v384, 4
      %v1681 = vpop.permute.xlu0 %1680
      %1682 = vrot.lane.b32.xlu0 %v385, 4
      %v1683 = vpop.permute.xlu0 %1682
      %1684 = vrot.lane.b32.xlu0 %v386, 4
      %v1685 = vpop.permute.xlu0 %1684
      %1686 = vrot.lane.b32.xlu0 %v387, 4
      %v1687 = vpop.permute.xlu0 %1686
      %1688 = vrot.lane.b32.xlu0 %v388, 4
      %v1689 = vpop.permute.xlu0 %1688
      %1690 = vrot.lane.b32.xlu0 %v389, 4
      %v1691 = vpop.permute.xlu0 %1690
      %1724 = vrot.lane.b32.xlu0 %v422, 8
      %v1725 = vpop.permute.xlu0 %1724
      %1726 = vrot.lane.b32.xlu0 %v423, 8
      %v1727 = vpop.permute.xlu0 %1726
      %1728 = vrot.lane.b32.xlu0 %v424, 8
      %v1729 = vpop.permute.xlu0 %1728
      %1730 = vrot.lane.b32.xlu0 %v425, 8
      %v1731 = vpop.permute.xlu0 %1730
      %1732 = vrot.lane.b32.xlu0 %v426, 8
      %v1733 = vpop.permute.xlu0 %1732
      %1734 = vrot.lane.b32.xlu0 %v427, 8
      %v1735 = vpop.permute.xlu0 %1734
      %1736 = vrot.lane.b32.xlu0 %v428, 8
      %v1737 = vpop.permute.xlu0 %1736
      %1738 = vrot.lane.b32.xlu0 %v429, 8
      %v1739 = vpop.permute.xlu0 %1738
      %1740 = vrot.lane.b32.xlu0 %v430, 8
      %v1741 = vpop.permute.xlu0 %1740
      %1742 = vrot.lane.b32.xlu0 %v431, 8
      %v1743 = vpop.permute.xlu0 %1742
      %1744 = vrot.lane.b32.xlu0 %v432, 8
      %v1745 = vpop.permute.xlu0 %1744
      %1746 = vrot.lane.b32.xlu0 %v433, 8
      %v1747 = vpop.permute.xlu0 %1746
      %1748 = vrot.lane.b32.xlu0 %v434, 8
      %v1749 = vpop.permute.xlu0 %1748
      %1750 = vrot.lane.b32.xlu0 %v435, 8
      %v1751 = vpop.permute.xlu0 %1750
      %1752 = vrot.lane.b32.xlu0 %v436, 8
      %v1753 = vpop.permute.xlu0 %1752
      %1754 = vrot.lane.b32.xlu0 %v437, 8
      %v1755 = vpop.permute.xlu0 %1754
      %1756 = vrot.lane.b32.xlu0 %v438, 8
      %v1757 = vpop.permute.xlu0 %1756
      %1758 = vrot.lane.b32.xlu0 %v439, 8
      %v1759 = vpop.permute.xlu0 %1758
      %1760 = vrot.lane.b32.xlu0 %v440, 8
      %v1761 = vpop.permute.xlu0 %1760
      %1762 = vrot.lane.b32.xlu0 %v441, 8
      %v1763 = vpop.permute.xlu0 %1762
      %1764 = vrot.lane.b32.xlu0 %v442, 8
      %v1765 = vpop.permute.xlu0 %1764
      %1766 = vrot.lane.b32.xlu0 %v443, 8
      %v1767 = vpop.permute.xlu0 %1766
      %1768 = vrot.lane.b32.xlu0 %v444, 8
      %v1769 = vpop.permute.xlu0 %1768
      %1770 = vrot.lane.b32.xlu0 %v445, 8
      %v1771 = vpop.permute.xlu0 %1770
      %1772 = vrot.lane.b32.xlu0 %v446, 8
      %v1773 = vpop.permute.xlu0 %1772
      %1774 = vrot.lane.b32.xlu0 %v447, 8
      %v1775 = vpop.permute.xlu0 %1774
      %1776 = vrot.lane.b32.xlu0 %v448, 8
      %v1777 = vpop.permute.xlu0 %1776
      %1778 = vrot.lane.b32.xlu0 %v449, 8
      %v1779 = vpop.permute.xlu0 %1778
      %1780 = vrot.lane.b32.xlu0 %v450, 8
      %v1781 = vpop.permute.xlu0 %1780
      %1782 = vrot.lane.b32.xlu0 %v451, 8
      %v1783 = vpop.permute.xlu0 %1782
      %1784 = vrot.lane.b32.xlu0 %v452, 8
      %v1785 = vpop.permute.xlu0 %1784
      %1786 = vrot.lane.b32.xlu0 %v453, 8
      %v1787 = vpop.permute.xlu0 %1786
      %1852 = vrot.lane.b32.xlu0 %v454, 12
      %v1853 = vpop.permute.xlu0 %1852
      %1854 = vrot.lane.b32.xlu0 %v455, 12
      %v1855 = vpop.permute.xlu0 %1854
      %1856 = vrot.lane.b32.xlu0 %v456, 12
      %v1857 = vpop.permute.xlu0 %1856
      %1858 = vrot.lane.b32.xlu0 %v457, 12
      %v1859 = vpop.permute.xlu0 %1858
      %1860 = vrot.lane.b32.xlu0 %v458, 12
      %v1861 = vpop.permute.xlu0 %1860
      %1862 = vrot.lane.b32.xlu0 %v459, 12
      %v1863 = vpop.permute.xlu0 %1862
      %1864 = vrot.lane.b32.xlu0 %v460, 12
      %v1865 = vpop.permute.xlu0 %1864
      %1866 = vrot.lane.b32.xlu0 %v461, 12
      %v1867 = vpop.permute.xlu0 %1866
      %1868 = vrot.lane.b32.xlu0 %v462, 12
      %v1869 = vpop.permute.xlu0 %1868
      %1870 = vrot.lane.b32.xlu0 %v463, 12
      %v1871 = vpop.permute.xlu0 %1870
      %1872 = vrot.lane.b32.xlu0 %v464, 12
      %v1873 = vpop.permute.xlu0 %1872
      %1874 = vrot.lane.b32.xlu0 %v465, 12
      %v1875 = vpop.permute.xlu0 %1874
      %1876 = vrot.lane.b32.xlu0 %v466, 12
      %v1877 = vpop.permute.xlu0 %1876
      %1878 = vrot.lane.b32.xlu0 %v467, 12
      %v1879 = vpop.permute.xlu0 %1878
      %1880 = vrot.lane.b32.xlu0 %v468, 12
      %v1881 = vpop.permute.xlu0 %1880
      %1882 = vrot.lane.b32.xlu0 %v469, 12
      %v1883 = vpop.permute.xlu0 %1882
      %1884 = vrot.lane.b32.xlu0 %v470, 12
      %v1885 = vpop.permute.xlu0 %1884
      %1886 = vrot.lane.b32.xlu0 %v471, 12
      %v1887 = vpop.permute.xlu0 %1886
      %1888 = vrot.lane.b32.xlu0 %v472, 12
      %v1889 = vpop.permute.xlu0 %1888
      %1890 = vrot.lane.b32.xlu0 %v473, 12
      %v1891 = vpop.permute.xlu0 %1890
      %1892 = vrot.lane.b32.xlu0 %v474, 12
      %v1893 = vpop.permute.xlu0 %1892
      %1894 = vrot.lane.b32.xlu0 %v475, 12
      %v1895 = vpop.permute.xlu0 %1894
      %1896 = vrot.lane.b32.xlu0 %v476, 12
      %v1897 = vpop.permute.xlu0 %1896
      %1898 = vrot.lane.b32.xlu0 %v477, 12
      %v1899 = vpop.permute.xlu0 %1898
      %1900 = vrot.lane.b32.xlu0 %v478, 12
      %v1901 = vpop.permute.xlu0 %1900
      %1902 = vrot.lane.b32.xlu0 %v479, 12
      %v1903 = vpop.permute.xlu0 %1902
      %1904 = vrot.lane.b32.xlu0 %v480, 12
      %v1905 = vpop.permute.xlu0 %1904
      %1906 = vrot.lane.b32.xlu0 %v481, 12
      %v1907 = vpop.permute.xlu0 %1906
      %1908 = vrot.lane.b32.xlu0 %v482, 12
      %v1909 = vpop.permute.xlu0 %1908
      %1910 = vrot.lane.b32.xlu0 %v483, 12
      %v1911 = vpop.permute.xlu0 %1910
      %1912 = vrot.lane.b32.xlu0 %v484, 12
      %v1913 = vpop.permute.xlu0 %1912
      %1914 = vrot.lane.b32.xlu0 %v485, 12
      %v1915 = vpop.permute.xlu0 %1914
      %v1948 = vsel %vm183, %v326, %v1629
      %v1949 = vsel %vm183, %v327, %v1631
      %v1950 = vsel %vm183, %v328, %v1633
      %v1951 = vsel %vm183, %v329, %v1635
      %v1952 = vsel %vm183, %v330, %v1637
      %v1953 = vsel %vm183, %v331, %v1639
      %v1954 = vsel %vm183, %v332, %v1641
      %v1955 = vsel %vm183, %v333, %v1643
      %v1956 = vsel %vm183, %v334, %v1645
      %v1957 = vsel %vm183, %v335, %v1647
      %v1958 = vsel %vm183, %v336, %v1649
      %v1959 = vsel %vm183, %v337, %v1651
      %v1960 = vsel %vm183, %v338, %v1653
      %v1961 = vsel %vm183, %v339, %v1655
      %v1962 = vsel %vm183, %v340, %v1657
      %v1963 = vsel %vm183, %v341, %v1659
      %v1964 = vsel %vm183, %v342, %v1661
      %v1965 = vsel %vm183, %v343, %v1663
      %v1966 = vsel %vm183, %v344, %v1665
      %v1967 = vsel %vm183, %v345, %v1667
      %v1968 = vsel %vm183, %v346, %v1669
      %v1969 = vsel %vm183, %v347, %v1671
      %v1970 = vsel %vm183, %v348, %v1673
      %v1971 = vsel %vm183, %v349, %v1675
      %v1972 = vsel %vm183, %v350, %v1677
      %v1973 = vsel %vm183, %v351, %v1679
      %v1974 = vsel %vm183, %v352, %v1681
      %v1975 = vsel %vm183, %v353, %v1683
      %v1976 = vsel %vm183, %v354, %v1685
      %v1977 = vsel %vm183, %v355, %v1687
      %v1978 = vsel %vm183, %v356, %v1689
      %v1979 = vsel %vm183, %v357, %v1691
      %v1980 = vsel %vm1001, %v1948, %v1725
      %v1981 = vsel %vm1001, %v1949, %v1727
      %v1982 = vsel %vm1001, %v1950, %v1729
      %v1983 = vsel %vm1001, %v1951, %v1731
      %v1984 = vsel %vm1001, %v1952, %v1733
      %v1985 = vsel %vm1001, %v1953, %v1735
      %v1986 = vsel %vm1001, %v1954, %v1737
      %v1987 = vsel %vm1001, %v1955, %v1739
      %v1988 = vsel %vm1001, %v1956, %v1741
      %v1989 = vsel %vm1001, %v1957, %v1743
      %v1990 = vsel %vm1001, %v1958, %v1745
      %v1991 = vsel %vm1001, %v1959, %v1747
      %v1992 = vsel %vm1001, %v1960, %v1749
      %v1993 = vsel %vm1001, %v1961, %v1751
      %v1994 = vsel %vm1001, %v1962, %v1753
      %v1995 = vsel %vm1001, %v1963, %v1755
      %v1996 = vsel %vm1001, %v1964, %v1757
      %v1997 = vsel %vm1001, %v1965, %v1759
      %v1998 = vsel %vm1001, %v1966, %v1761
      %v1999 = vsel %vm1001, %v1967, %v1763
      %v2000 = vsel %vm1001, %v1968, %v1765
      %v2001 = vsel %vm1001, %v1969, %v1767
      %v2002 = vsel %vm1001, %v1970, %v1769
      %v2003 = vsel %vm1001, %v1971, %v1771
      %v2004 = vsel %vm1001, %v1972, %v1773
      %v2005 = vsel %vm1001, %v1973, %v1775
      %v2006 = vsel %vm1001, %v1974, %v1777
      %v2007 = vsel %vm1001, %v1975, %v1779
      %v2008 = vsel %vm1001, %v1976, %v1781
      %v2009 = vsel %vm1001, %v1977, %v1783
      %v2010 = vsel %vm1001, %v1978, %v1785
      %v2011 = vsel %vm1001, %v1979, %v1787
      %v2012 = vsel %vm1034, %v1980, %v1853
      %v2013 = vsel %vm1034, %v1981, %v1855
      %v2014 = vsel %vm1034, %v1982, %v1857
      %v2015 = vsel %vm1034, %v1983, %v1859
      %v2016 = vsel %vm1034, %v1984, %v1861
      %v2017 = vsel %vm1034, %v1985, %v1863
      %v2018 = vsel %vm1034, %v1986, %v1865
      %v2019 = vsel %vm1034, %v1987, %v1867
      %v2020 = vsel %vm1034, %v1988, %v1869
      %v2021 = vsel %vm1034, %v1989, %v1871
      %v2022 = vsel %vm1034, %v1990, %v1873
      %v2023 = vsel %vm1034, %v1991, %v1875
      %v2024 = vsel %vm1034, %v1992, %v1877
      %v2025 = vsel %vm1034, %v1993, %v1879
      %v2026 = vsel %vm1034, %v1994, %v1881
      %v2027 = vsel %vm1034, %v1995, %v1883
      %v2028 = vsel %vm1034, %v1996, %v1885
      %v2029 = vsel %vm1034, %v1997, %v1887
      %v2030 = vsel %vm1034, %v1998, %v1889
      %v2031 = vsel %vm1034, %v1999, %v1891
      %v2032 = vsel %vm1034, %v2000, %v1893
      %v2033 = vsel %vm1034, %v2001, %v1895
      %v2034 = vsel %vm1034, %v2002, %v1897
      %v2035 = vsel %vm1034, %v2003, %v1899
      %v2036 = vsel %vm1034, %v2004, %v1901
      %v2037 = vsel %vm1034, %v2005, %v1903
      %v2038 = vsel %vm1034, %v2006, %v1905
      %v2039 = vsel %vm1034, %v2007, %v1907
      %v2040 = vsel %vm1034, %v2008, %v1909
      %v2041 = vsel %vm1034, %v2009, %v1911
      %v2042 = vsel %vm1034, %v2010, %v1913
      %v2043 = vsel %vm1034, %v2011, %v1915
      %v2045 = vsel %vm1067, %v2012, 0
      %v2048 = vsel %vm1067, %v2013, 0
      %v2051 = vsel %vm1067, %v2014, 0
      %v2054 = vsel %vm1067, %v2015, 0
      %v2057 = vsel %vm1067, %v2016, 0
      %v2060 = vsel %vm1067, %v2017, 0
      %v2063 = vsel %vm1067, %v2018, 0
      %v2066 = vsel %vm1067, %v2019, 0
      %v2069 = vsel %vm1067, %v2020, 0
      %v2072 = vsel %vm1067, %v2021, 0
      %v2075 = vsel %vm1067, %v2022, 0
      %v2078 = vsel %vm1067, %v2023, 0
      %v2081 = vsel %vm1067, %v2024, 0
      %v2084 = vsel %vm1067, %v2025, 0
      %v2087 = vsel %vm1067, %v2026, 0
      %v2090 = vsel %vm1067, %v2027, 0
      %v2093 = vsel %vm1067, %v2028, 0
      %v2096 = vsel %vm1067, %v2029, 0
      %v2099 = vsel %vm1067, %v2030, 0
      %v2102 = vsel %vm1067, %v2031, 0
      %v2105 = vsel %vm1067, %v2032, 0
      %v2108 = vsel %vm1067, %v2033, 0
      %v2111 = vsel %vm1067, %v2034, 0
      %v2114 = vsel %vm1067, %v2035, 0
      %v2117 = vsel %vm1067, %v2036, 0
      %v2120 = vsel %vm1067, %v2037, 0
      %v2123 = vsel %vm1067, %v2038, 0
      %v2126 = vsel %vm1067, %v2039, 0
      %v2129 = vsel %vm1067, %v2040, 0
      %v2132 = vsel %vm1067, %v2041, 0
      %v2135 = vsel %vm1067, %v2042, 0
      %v2138 = vsel %vm1067, %v2043, 0
      %2140 = vmatprep.subr.mxu0 0.0
      %2141 = vmatpush1.msra.mxu0 %v1594
      %2142 = vmatprep.subr.mxu0 0.0
      %2143 = vmatpush1.msra.mxu0 %v1595
      %2144 = vmatprep.subr.mxu0 0.0
      %2145 = vmatpush1.msra.mxu0 0.0
      %2146 = vmatprep.subr.mxu0 0.0
      %2147 = vmatpush1.msra.mxu0 0.0
      %2148 = vmatprep.subr.mxu0 0.0
      %2149 = vmatpush1.msra.mxu0 0.0
      %2150 = vmatprep.subr.mxu0 0.0
      %2151 = vmatpush1.msra.mxu0 0.0
      %2152 = vmatprep.subr.mxu0 0.0
      %2153 = vmatpush1.msra.mxu0 0.0
      %2154 = vmatprep.subr.mxu0 0.0
      %2155 = vmatpush1.msra.mxu0 0.0
      %2156 = vmatprep.subr.mxu0 0.0
      %2157 = vmatpush1.msra.mxu0 0.0
      %2158 = vmatprep.subr.mxu0 0.0
      %2159 = vmatpush1.msra.mxu0 0.0
      %2160 = vmatprep.subr.mxu0 0.0
      %2161 = vmatpush1.msra.mxu0 0.0
      %2162 = vmatprep.subr.mxu0 0.0
      %2163 = vmatpush1.msra.mxu0 0.0
      %2164 = vmatprep.subr.mxu0 0.0
      %2165 = vmatpush1.msra.mxu0 0.0
      %2166 = vmatprep.subr.mxu0 0.0
      %2167 = vmatpush1.msra.mxu0 0.0
      %2168 = vmatprep.subr.mxu0 0.0
      %2169 = vmatpush1.msra.mxu0 0.0
      %2170 = vmatprep.subr.mxu0 0.0
      %2171 = vmatpush1.msra.mxu0 0.0
      %2172 = vmatprep.subr.mxu0 0.0
      %2173 = vmatpush1.msra.mxu0 0.0
      %2174 = vmatprep.subr.mxu0 0.0
      %2175 = vmatpush1.msra.mxu0 0.0
      %2176 = vmatprep.subr.mxu0 0.0
      %2177 = vmatpush1.msra.mxu0 0.0
      %2178 = vmatprep.subr.mxu0 0.0
      %2179 = vmatpush1.msra.mxu0 0.0
      %2180 = vmatprep.subr.mxu0 0.0
      %2181 = vmatpush1.msra.mxu0 0.0
      %2182 = vmatprep.subr.mxu0 0.0
      %2183 = vmatpush1.msra.mxu0 0.0
      %2184 = vmatprep.subr.mxu0 0.0
      %2185 = vmatpush1.msra.mxu0 0.0
      %2186 = vmatprep.subr.mxu0 0.0
      %2187 = vmatpush1.msra.mxu0 0.0
      %2188 = vmatprep.subr.mxu0 0.0
      %2189 = vmatpush1.msra.mxu0 0.0
      %2190 = vmatprep.subr.mxu0 0.0
      %2191 = vmatpush1.msra.mxu0 0.0
      %2192 = vmatprep.subr.mxu0 0.0
      %2193 = vmatpush1.msra.mxu0 0.0
      %2194 = vmatprep.subr.mxu0 0.0
      %2195 = vmatpush1.msra.mxu0 0.0
      %2196 = vmatprep.subr.mxu0 0.0
      %2197 = vmatpush1.msra.mxu0 0.0
      %2198 = vmatprep.subr.mxu0 0.0
      %2199 = vmatpush1.msra.mxu0 0.0
      %2200 = vmatprep.subr.mxu0 0.0
      %2201 = vmatpush1.msra.mxu0 0.0
      %2202 = vmatprep.subr.mxu0 0.0
      %2203 = vmatpush1.msra.mxu0 0.0
      %2204 = vmatprep.mubr.f32.mxu0 0.0
      %2205 = vmatmul.mubr.f32.gmra.mrb[0].mxu0 %v2045
      %v2206 = vpop.f32.mrb[0].mxu0
      %v2207 = vadd.f32 0.0, %v2206
      %v2208 = vpop.f32.mrb[0].mxu0
      %2209 = vmatprep.mubr.f32.mxu0 0.0
      %2210 = vmatmul.mubr.f32.gmra.mrb[0].mxu0 %v2048
      %v2211 = vpop.f32.mrb[0].mxu0
      %v2212 = vadd.f32 0.0, %v2211
      %v2213 = vpop.f32.mrb[0].mxu0
      %2214 = vmatprep.mubr.f32.mxu0 0.0
      %2215 = vmatmul.mubr.f32.gmra.mrb[0].mxu0 %v2051
      %v2216 = vpop.f32.mrb[0].mxu0
      %v2217 = vadd.f32 0.0, %v2216
      %v2218 = vpop.f32.mrb[0].mxu0
      %2219 = vmatprep.mubr.f32.mxu0 0.0
      %2220 = vmatmul.mubr.f32.gmra.mrb[0].mxu0 %v2054
      %v2221 = vpop.f32.mrb[0].mxu0
      %v2222 = vadd.f32 0.0, %v2221
      %v2223 = vpop.f32.mrb[0].mxu0
      %2224 = vmatprep.mubr.f32.mxu0 0.0
      %2225 = vmatmul.mubr.f32.gmra.mrb[0].mxu0 %v2057
      %v2226 = vpop.f32.mrb[0].mxu0
      %v2227 = vadd.f32 0.0, %v2226
      %v2228 = vpop.f32.mrb[0].mxu0
      %2229 = vmatprep.mubr.f32.mxu0 0.0
      %2230 = vmatmul.mubr.f32.gmra.mrb[0].mxu0 %v2060
      %v2231 = vpop.f32.mrb[0].mxu0
      %v2232 = vadd.f32 0.0, %v2231
      %v2233 = vpop.f32.mrb[0].mxu0
      %2234 = vmatprep.mubr.f32.mxu0 0.0
      %2235 = vmatmul.mubr.f32.gmra.mrb[0].mxu0 %v2063
      %v2236 = vpop.f32.mrb[0].mxu0
      %v2237 = vadd.f32 0.0, %v2236
      %v2238 = vpop.f32.mrb[0].mxu0
      %2239 = vmatprep.mubr.f32.mxu0 0.0
      %2240 = vmatmul.mubr.f32.gmra.mrb[0].mxu0 %v2066
      %v2241 = vpop.f32.mrb[0].mxu0
      %v2242 = vadd.f32 0.0, %v2241
      %v2243 = vpop.f32.mrb[0].mxu0
      %2244 = vmatprep.mubr.f32.mxu0 0.0
      %2245 = vmatmul.mubr.f32.gmra.mrb[0].mxu0 %v2069
      %v2246 = vpop.f32.mrb[0].mxu0
      %v2247 = vadd.f32 0.0, %v2246
      %v2248 = vpop.f32.mrb[0].mxu0
      %2249 = vmatprep.mubr.f32.mxu0 0.0
      %2250 = vmatmul.mubr.f32.gmra.mrb[0].mxu0 %v2072
      %v2251 = vpop.f32.mrb[0].mxu0
      %v2252 = vadd.f32 0.0, %v2251
      %v2253 = vpop.f32.mrb[0].mxu0
      %2254 = vmatprep.mubr.f32.mxu0 0.0
      %2255 = vmatmul.mubr.f32.gmra.mrb[0].mxu0 %v2075
      %v2256 = vpop.f32.mrb[0].mxu0
      %v2257 = vadd.f32 0.0, %v2256
      %v2258 = vpop.f32.mrb[0].mxu0
      %2259 = vmatprep.mubr.f32.mxu0 0.0
      %2260 = vmatmul.mubr.f32.gmra.mrb[0].mxu0 %v2078
      %v2261 = vpop.f32.mrb[0].mxu0
      %v2262 = vadd.f32 0.0, %v2261
      %v2263 = vpop.f32.mrb[0].mxu0
      %2264 = vmatprep.mubr.f32.mxu0 0.0
      %2265 = vmatmul.mubr.f32.gmra.mrb[0].mxu0 %v2081
      %v2266 = vpop.f32.mrb[0].mxu0
      %v2267 = vadd.f32 0.0, %v2266
      %v2268 = vpop.f32.mrb[0].mxu0
      %2269 = vmatprep.mubr.f32.mxu0 0.0
      %2270 = vmatmul.mubr.f32.gmra.mrb[0].mxu0 %v2084
      %v2271 = vpop.f32.mrb[0].mxu0
      %v2272 = vadd.f32 0.0, %v2271
      %v2273 = vpop.f32.mrb[0].mxu0
      %2274 = vmatprep.mubr.f32.mxu0 0.0
      %2275 = vmatmul.mubr.f32.gmra.mrb[0].mxu0 %v2087
      %v2276 = vpop.f32.mrb[0].mxu0
      %v2277 = vadd.f32 0.0, %v2276
      %v2278 = vpop.f32.mrb[0].mxu0
      %2279 = vmatprep.mubr.f32.mxu0 0.0
      %2280 = vmatmul.mubr.f32.gmra.mrb[0].mxu0 %v2090
      %v2281 = vpop.f32.mrb[0].mxu0
      %v2282 = vadd.f32 0.0, %v2281
      %v2283 = vpop.f32.mrb[0].mxu0
      %2284 = vmatprep.mubr.f32.mxu0 0.0
      %2285 = vmatmul.mubr.f32.gmra.mrb[0].mxu0 %v2093
      %v2286 = vpop.f32.mrb[0].mxu0
      %v2287 = vadd.f32 0.0, %v2286
      %v2288 = vpop.f32.mrb[0].mxu0
      %2289 = vmatprep.mubr.f32.mxu0 0.0
      %2290 = vmatmul.mubr.f32.gmra.mrb[0].mxu0 %v2096
      %v2291 = vpop.f32.mrb[0].mxu0
      %v2292 = vadd.f32 0.0, %v2291
      %v2293 = vpop.f32.mrb[0].mxu0
      %2294 = vmatprep.mubr.f32.mxu0 0.0
      %2295 = vmatmul.mubr.f32.gmra.mrb[0].mxu0 %v2099
      %v2296 = vpop.f32.mrb[0].mxu0
      %v2297 = vadd.f32 0.0, %v2296
      %v2298 = vpop.f32.mrb[0].mxu0
      %2299 = vmatprep.mubr.f32.mxu0 0.0
      %2300 = vmatmul.mubr.f32.gmra.mrb[0].mxu0 %v2102
      %v2301 = vpop.f32.mrb[0].mxu0
      %v2302 = vadd.f32 0.0, %v2301
      %v2303 = vpop.f32.mrb[0].mxu0
      %2304 = vmatprep.mubr.f32.mxu0 0.0
      %2305 = vmatmul.mubr.f32.gmra.mrb[0].mxu0 %v2105
      %v2306 = vpop.f32.mrb[0].mxu0
      %v2307 = vadd.f32 0.0, %v2306
      %v2308 = vpop.f32.mrb[0].mxu0
      %2309 = vmatprep.mubr.f32.mxu0 0.0
      %2310 = vmatmul.mubr.f32.gmra.mrb[0].mxu0 %v2108
      %v2311 = vpop.f32.mrb[0].mxu0
      %v2312 = vadd.f32 0.0, %v2311
      %v2313 = vpop.f32.mrb[0].mxu0
      %2314 = vmatprep.mubr.f32.mxu0 0.0
      %2315 = vmatmul.mubr.f32.gmra.mrb[0].mxu0 %v2111
      %v2316 = vpop.f32.mrb[0].mxu0
      %v2317 = vadd.f32 0.0, %v2316
      %v2318 = vpop.f32.mrb[0].mxu0
      %2319 = vmatprep.mubr.f32.mxu0 0.0
      %2320 = vmatmul.mubr.f32.gmra.mrb[0].mxu0 %v2114
      %v2321 = vpop.f32.mrb[0].mxu0
      %v2322 = vadd.f32 0.0, %v2321
      %v2323 = vpop.f32.mrb[0].mxu0
      %2324 = vmatprep.mubr.f32.mxu0 0.0
      %2325 = vmatmul.mubr.f32.gmra.mrb[0].mxu0 %v2117
      %v2326 = vpop.f32.mrb[0].mxu0
      %v2327 = vadd.f32 0.0, %v2326
      %v2328 = vpop.f32.mrb[0].mxu0
      %2329 = vmatprep.mubr.f32.mxu0 0.0
      %2330 = vmatmul.mubr.f32.gmra.mrb[0].mxu0 %v2120
      %v2331 = vpop.f32.mrb[0].mxu0
      %v2332 = vadd.f32 0.0, %v2331
      %v2333 = vpop.f32.mrb[0].mxu0
      %2334 = vmatprep.mubr.f32.mxu0 0.0
      %2335 = vmatmul.mubr.f32.gmra.mrb[0].mxu0 %v2123
      %v2336 = vpop.f32.mrb[0].mxu0
      %v2337 = vadd.f32 0.0, %v2336
      %v2338 = vpop.f32.mrb[0].mxu0
      %2339 = vmatprep.mubr.f32.mxu0 0.0
      %2340 = vmatmul.mubr.f32.gmra.mrb[0].mxu0 %v2126
      %v2341 = vpop.f32.mrb[0].mxu0
      %v2342 = vadd.f32 0.0, %v2341
      %v2343 = vpop.f32.mrb[0].mxu0
      %2344 = vmatprep.mubr.f32.mxu0 0.0
      %2345 = vmatmul.mubr.f32.gmra.mrb[0].mxu0 %v2129
      %v2346 = vpop.f32.mrb[0].mxu0
      %v2347 = vadd.f32 0.0, %v2346
      %v2348 = vpop.f32.mrb[0].mxu0
      %2349 = vmatprep.mubr.f32.mxu0 0.0
      %2350 = vmatmul.mubr.f32.gmra.mrb[0].mxu0 %v2132
      %v2351 = vpop.f32.mrb[0].mxu0
      %v2352 = vadd.f32 0.0, %v2351
      %v2353 = vpop.f32.mrb[0].mxu0
      %2354 = vmatprep.mubr.f32.mxu0 0.0
      %2355 = vmatmul.mubr.f32.gmra.mrb[0].mxu0 %v2135
      %v2356 = vpop.f32.mrb[0].mxu0
      %v2357 = vadd.f32 0.0, %v2356
      %v2358 = vpop.f32.mrb[0].mxu0
      %2359 = vmatprep.mubr.f32.mxu0 0.0
      %2360 = vmatmul.mubr.f32.gmra.mrb[0].mxu0 %v2138
      %v2361 = vpop.f32.mrb[0].mxu0
      %v2362 = vadd.f32 0.0, %v2361
      %v2363 = vpop.f32.mrb[0].mxu0
      %2364 = vdwg.mxu0
      %s2365 = scalar_lea.vmem [#allocation3], 256
      %2366 = vst.msk [vmem:[%s2365] sm:$0xff] %vm1001, %v2207
      %2367 = vst.msk [vmem:[%s2365 + $0x8] sm:$0xff] %vm1001, %v2212
      %2368 = vst.msk [vmem:[%s2365 + $0x10] sm:$0xff] %vm1001, %v2217
      %2369 = vst.msk [vmem:[%s2365 + $0x18] sm:$0xff] %vm1001, %v2222
      %2370 = vst.msk [vmem:[%s2365 + $0x20] sm:$0xff] %vm1001, %v2227
      %2371 = vst.msk [vmem:[%s2365 + $0x28] sm:$0xff] %vm1001, %v2232
      %2372 = vst.msk [vmem:[%s2365 + $0x30] sm:$0xff] %vm1001, %v2237
      %2373 = vst.msk [vmem:[%s2365 + $0x38] sm:$0xff] %vm1001, %v2242
      %2374 = vst.msk [vmem:[%s2365 + $0x40] sm:$0xff] %vm1001, %v2247
      %2375 = vst.msk [vmem:[%s2365 + $0x48] sm:$0xff] %vm1001, %v2252
      %2376 = vst.msk [vmem:[%s2365 + $0x50] sm:$0xff] %vm1001, %v2257
      %2377 = vst.msk [vmem:[%s2365 + $0x58] sm:$0xff] %vm1001, %v2262
      %2378 = vst.msk [vmem:[%s2365 + $0x60] sm:$0xff] %vm1001, %v2267
      %2379 = vst.msk [vmem:[%s2365 + $0x68] sm:$0xff] %vm1001, %v2272
      %2380 = vst.msk [vmem:[%s2365 + $0x70] sm:$0xff] %vm1001, %v2277
      %2381 = vst.msk [vmem:[%s2365 + $0x78] sm:$0xff] %vm1001, %v2282
      %2382 = vst.msk [vmem:[%s2365 + $0x80] sm:$0xff] %vm1001, %v2287
      %2383 = vst.msk [vmem:[%s2365 + $0x88] sm:$0xff] %vm1001, %v2292
      %2384 = vst.msk [vmem:[%s2365 + $0x90] sm:$0xff] %vm1001, %v2297
      %2385 = vst.msk [vmem:[%s2365 + $0x98] sm:$0xff] %vm1001, %v2302
      %2386 = vst.msk [vmem:[%s2365 + $0xa0] sm:$0xff] %vm1001, %v2307
      %2387 = vst.msk [vmem:[%s2365 + $0xa8] sm:$0xff] %vm1001, %v2312
      %2388 = vst.msk [vmem:[%s2365 + $0xb0] sm:$0xff] %vm1001, %v2317
      %2389 = vst.msk [vmem:[%s2365 + $0xb8] sm:$0xff] %vm1001, %v2322
      %2390 = vst.msk [vmem:[%s2365 + $0xc0] sm:$0xff] %vm1001, %v2327
      %2391 = vst.msk [vmem:[%s2365 + $0xc8] sm:$0xff] %vm1001, %v2332
      %2392 = vst.msk [vmem:[%s2365 + $0xd0] sm:$0xff] %vm1001, %v2337
      %2393 = vst.msk [vmem:[%s2365 + $0xd8] sm:$0xff] %vm1001, %v2342
      %2394 = vst.msk [vmem:[%s2365 + $0xe0] sm:$0xff] %vm1001, %v2347
      %2395 = vst.msk [vmem:[%s2365 + $0xe8] sm:$0xff] %vm1001, %v2352
      %2396 = vst.msk [vmem:[%s2365 + $0xf0] sm:$0xff] %vm1001, %v2357
      %2397 = vst.msk [vmem:[%s2365 + $0xf8] sm:$0xff] %vm1001, %v2362
      %v2398 = vsel %vm1001, %v2207, 0.0
      %v2399 = vsel %vm1001, %v2212, 0.0
      %v2400 = vadd.f32 %v2398, %v2399
      %v2401 = vsel %vm1001, %v2217, 0.0
      %v2402 = vadd.f32 %v2400, %v2401
      %v2403 = vsel %vm1001, %v2222, 0.0
      %v2404 = vadd.f32 %v2402, %v2403
      %v2405 = vsel %vm1001, %v2227, 0.0
      %v2406 = vadd.f32 %v2404, %v2405
      %v2407 = vsel %vm1001, %v2232, 0.0
      %v2408 = vadd.f32 %v2406, %v2407
      %v2409 = vsel %vm1001, %v2237, 0.0
      %v2410 = vadd.f32 %v2408, %v2409
      %v2411 = vsel %vm1001, %v2242, 0.0
      %v2412 = vadd.f32 %v2410, %v2411
      %v2413 = vsel %vm1001, %v2247, 0.0
      %v2414 = vadd.f32 %v2412, %v2413
      %v2415 = vsel %vm1001, %v2252, 0.0
      %v2416 = vadd.f32 %v2414, %v2415
      %v2417 = vsel %vm1001, %v2257, 0.0
      %v2418 = vadd.f32 %v2416, %v2417
      %v2419 = vsel %vm1001, %v2262, 0.0
      %v2420 = vadd.f32 %v2418, %v2419
      %v2421 = vsel %vm1001, %v2267, 0.0
      %v2422 = vadd.f32 %v2420, %v2421
      %v2423 = vsel %vm1001, %v2272, 0.0
      %v2424 = vadd.f32 %v2422, %v2423
      %v2425 = vsel %vm1001, %v2277, 0.0
      %v2426 = vadd.f32 %v2424, %v2425
      %v2427 = vsel %vm1001, %v2282, 0.0
      %v2428 = vadd.f32 %v2426, %v2427
      %v2429 = vsel %vm1001, %v2287, 0.0
      %v2430 = vadd.f32 %v2428, %v2429
      %v2431 = vsel %vm1001, %v2292, 0.0
      %v2432 = vadd.f32 %v2430, %v2431
      %v2433 = vsel %vm1001, %v2297, 0.0
      %v2434 = vadd.f32 %v2432, %v2433
      %v2435 = vsel %vm1001, %v2302, 0.0
      %v2436 = vadd.f32 %v2434, %v2435
      %v2437 = vsel %vm1001, %v2307, 0.0
      %v2438 = vadd.f32 %v2436, %v2437
      %v2439 = vsel %vm1001, %v2312, 0.0
      %v2440 = vadd.f32 %v2438, %v2439
      %v2441 = vsel %vm1001, %v2317, 0.0
      %v2442 = vadd.f32 %v2440, %v2441
      %v2443 = vsel %vm1001, %v2322, 0.0
      %v2444 = vadd.f32 %v2442, %v2443
      %v2445 = vsel %vm1001, %v2327, 0.0
      %v2446 = vadd.f32 %v2444, %v2445
      %v2447 = vsel %vm1001, %v2332, 0.0
      %v2448 = vadd.f32 %v2446, %v2447
      %v2449 = vsel %vm1001, %v2337, 0.0
      %v2450 = vadd.f32 %v2448, %v2449
      %v2451 = vsel %vm1001, %v2342, 0.0
      %v2452 = vadd.f32 %v2450, %v2451
      %v2453 = vsel %vm1001, %v2347, 0.0
      %v2454 = vadd.f32 %v2452, %v2453
      %v2455 = vsel %vm1001, %v2352, 0.0
      %v2456 = vadd.f32 %v2454, %v2455
      %v2457 = vsel %vm1001, %v2357, 0.0
      %v2458 = vadd.f32 %v2456, %v2457
      %v2459 = vsel %vm1001, %v2362, 0.0
      %v2460 = vadd.f32 %v2458, %v2459
      %v2461 = vrot.slane %v2460, 4
      %v2462 = vadd.f32 %v2460, %v2461
      %v2463 = vrot.slane %v2462, 2
      %v2464 = vadd.f32 %v2462, %v2463
      %v2465 = vrot.slane %v2464, 1
      %v2466 = vadd.f32 %v2464, %v2465
      %v2467 = vadd.f32 %v1490, %v2466
      %v2468 = vmul.f32 %v2207, %v2207
      %v2469 = vmul.f32 %v2212, %v2212
      %v2470 = vmul.f32 %v2217, %v2217
      %v2471 = vmul.f32 %v2222, %v2222
      %v2472 = vmul.f32 %v2227, %v2227
      %v2473 = vmul.f32 %v2232, %v2232
      %v2474 = vmul.f32 %v2237, %v2237
      %v2475 = vmul.f32 %v2242, %v2242
      %v2476 = vmul.f32 %v2247, %v2247
      %v2477 = vmul.f32 %v2252, %v2252
      %v2478 = vmul.f32 %v2257, %v2257
      %v2479 = vmul.f32 %v2262, %v2262
      %v2480 = vmul.f32 %v2267, %v2267
      %v2481 = vmul.f32 %v2272, %v2272
      %v2482 = vmul.f32 %v2277, %v2277
      %v2483 = vmul.f32 %v2282, %v2282
      %v2484 = vmul.f32 %v2287, %v2287
      %v2485 = vmul.f32 %v2292, %v2292
      %v2486 = vmul.f32 %v2297, %v2297
      %v2487 = vmul.f32 %v2302, %v2302
      %v2488 = vmul.f32 %v2307, %v2307
      %v2489 = vmul.f32 %v2312, %v2312
      %v2490 = vmul.f32 %v2317, %v2317
      %v2491 = vmul.f32 %v2322, %v2322
      %v2492 = vmul.f32 %v2327, %v2327
      %v2493 = vmul.f32 %v2332, %v2332
      %v2494 = vmul.f32 %v2337, %v2337
      %v2495 = vmul.f32 %v2342, %v2342
      %v2496 = vmul.f32 %v2347, %v2347
      %v2497 = vmul.f32 %v2352, %v2352
      %v2498 = vmul.f32 %v2357, %v2357
      %v2499 = vmul.f32 %v2362, %v2362
      %v2500 = vsel %vm1001, %v2468, 0.0
      %v2501 = vsel %vm1001, %v2469, 0.0
      %v2502 = vadd.f32 %v2500, %v2501
      %v2503 = vsel %vm1001, %v2470, 0.0
      %v2504 = vadd.f32 %v2502, %v2503
      %v2505 = vsel %vm1001, %v2471, 0.0
      %v2506 = vadd.f32 %v2504, %v2505
      %v2507 = vsel %vm1001, %v2472, 0.0
      %v2508 = vadd.f32 %v2506, %v2507
      %v2509 = vsel %vm1001, %v2473, 0.0
      %v2510 = vadd.f32 %v2508, %v2509
      %v2511 = vsel %vm1001, %v2474, 0.0
      %v2512 = vadd.f32 %v2510, %v2511
      %v2513 = vsel %vm1001, %v2475, 0.0
      %v2514 = vadd.f32 %v2512, %v2513
      %v2515 = vsel %vm1001, %v2476, 0.0
      %v2516 = vadd.f32 %v2514, %v2515
      %v2517 = vsel %vm1001, %v2477, 0.0
      %v2518 = vadd.f32 %v2516, %v2517
      %v2519 = vsel %vm1001, %v2478, 0.0
      %v2520 = vadd.f32 %v2518, %v2519
      %v2521 = vsel %vm1001, %v2479, 0.0
      %v2522 = vadd.f32 %v2520, %v2521
      %v2523 = vsel %vm1001, %v2480, 0.0
      %v2524 = vadd.f32 %v2522, %v2523
      %v2525 = vsel %vm1001, %v2481, 0.0
      %v2526 = vadd.f32 %v2524, %v2525
      %v2527 = vsel %vm1001, %v2482, 0.0
      %v2528 = vadd.f32 %v2526, %v2527
      %v2529 = vsel %vm1001, %v2483, 0.0
      %v2530 = vadd.f32 %v2528, %v2529
      %v2531 = vsel %vm1001, %v2484, 0.0
      %v2532 = vadd.f32 %v2530, %v2531
      %v2533 = vsel %vm1001, %v2485, 0.0
      %v2534 = vadd.f32 %v2532, %v2533
      %v2535 = vsel %vm1001, %v2486, 0.0
      %v2536 = vadd.f32 %v2534, %v2535
      %v2537 = vsel %vm1001, %v2487, 0.0
      %v2538 = vadd.f32 %v2536, %v2537
      %v2539 = vsel %vm1001, %v2488, 0.0
      %v2540 = vadd.f32 %v2538, %v2539
      %v2541 = vsel %vm1001, %v2489, 0.0
      %v2542 = vadd.f32 %v2540, %v2541
      %v2543 = vsel %vm1001, %v2490, 0.0
      %v2544 = vadd.f32 %v2542, %v2543
      %v2545 = vsel %vm1001, %v2491, 0.0
      %v2546 = vadd.f32 %v2544, %v2545
      %v2547 = vsel %vm1001, %v2492, 0.0
      %v2548 = vadd.f32 %v2546, %v2547
      %v2549 = vsel %vm1001, %v2493, 0.0
      %v2550 = vadd.f32 %v2548, %v2549
      %v2551 = vsel %vm1001, %v2494, 0.0
      %v2552 = vadd.f32 %v2550, %v2551
      %v2553 = vsel %vm1001, %v2495, 0.0
      %v2554 = vadd.f32 %v2552, %v2553
      %v2555 = vsel %vm1001, %v2496, 0.0
      %v2556 = vadd.f32 %v2554, %v2555
      %v2557 = vsel %vm1001, %v2497, 0.0
      %v2558 = vadd.f32 %v2556, %v2557
      %v2559 = vsel %vm1001, %v2498, 0.0
      %v2560 = vadd.f32 %v2558, %v2559
      %v2561 = vsel %vm1001, %v2499, 0.0
      %v2562 = vadd.f32 %v2560, %v2561
      %v2563 = vrot.slane %v2562, 4
      %v2564 = vadd.f32 %v2562, %v2563
      %v2565 = vrot.slane %v2564, 2
      %v2566 = vadd.f32 %v2564, %v2565
      %v2567 = vrot.slane %v2566, 1
      %v2568 = vadd.f32 %v2566, %v2567
      %v2569 = vadd.f32 %v1592, %v2568
      %s2570 = scalar_lea.vmem %s173, 32
      %v2571 = vld [vmem:[%s2570] sm:$0xff]
      %v2572 = vld [vmem:[%s2570 + $0x8] sm:$0xff]
      %2573 = vrot.lane.b32.xlu0 %v422, 4
      %v2574 = vpop.permute.xlu0 %2573
      %2575 = vrot.lane.b32.xlu0 %v423, 4
      %v2576 = vpop.permute.xlu0 %2575
      %2577 = vrot.lane.b32.xlu0 %v424, 4
      %v2578 = vpop.permute.xlu0 %2577
      %2579 = vrot.lane.b32.xlu0 %v425, 4
      %v2580 = vpop.permute.xlu0 %2579
      %2581 = vrot.lane.b32.xlu0 %v426, 4
      %v2582 = vpop.permute.xlu0 %2581
      %2583 = vrot.lane.b32.xlu0 %v427, 4
      %v2584 = vpop.permute.xlu0 %2583
      %2585 = vrot.lane.b32.xlu0 %v428, 4
      %v2586 = vpop.permute.xlu0 %2585
      %2587 = vrot.lane.b32.xlu0 %v429, 4
      %v2588 = vpop.permute.xlu0 %2587
      %2589 = vrot.lane.b32.xlu0 %v430, 4
      %v2590 = vpop.permute.xlu0 %2589
      %2591 = vrot.lane.b32.xlu0 %v431, 4
      %v2592 = vpop.permute.xlu0 %2591
      %2593 = vrot.lane.b32.xlu0 %v432, 4
      %v2594 = vpop.permute.xlu0 %2593
      %2595 = vrot.lane.b32.xlu0 %v433, 4
      %v2596 = vpop.permute.xlu0 %2595
      %2597 = vrot.lane.b32.xlu0 %v434, 4
      %v2598 = vpop.permute.xlu0 %2597
      %2599 = vrot.lane.b32.xlu0 %v435, 4
      %v2600 = vpop.permute.xlu0 %2599
      %2601 = vrot.lane.b32.xlu0 %v436, 4
      %v2602 = vpop.permute.xlu0 %2601
      %2603 = vrot.lane.b32.xlu0 %v437, 4
      %v2604 = vpop.permute.xlu0 %2603
      %2605 = vrot.lane.b32.xlu0 %v438, 4
      %v2606 = vpop.permute.xlu0 %2605
      %2607 = vrot.lane.b32.xlu0 %v439, 4
      %v2608 = vpop.permute.xlu0 %2607
      %2609 = vrot.lane.b32.xlu0 %v440, 4
      %v2610 = vpop.permute.xlu0 %2609
      %2611 = vrot.lane.b32.xlu0 %v441, 4
      %v2612 = vpop.permute.xlu0 %2611
      %2613 = vrot.lane.b32.xlu0 %v442, 4
      %v2614 = vpop.permute.xlu0 %2613
      %2615 = vrot.lane.b32.xlu0 %v443, 4
      %v2616 = vpop.permute.xlu0 %2615
      %2617 = vrot.lane.b32.xlu0 %v444, 4
      %v2618 = vpop.permute.xlu0 %2617
      %2619 = vrot.lane.b32.xlu0 %v445, 4
      %v2620 = vpop.permute.xlu0 %2619
      %2621 = vrot.lane.b32.xlu0 %v446, 4
      %v2622 = vpop.permute.xlu0 %2621
      %2623 = vrot.lane.b32.xlu0 %v447, 4
      %v2624 = vpop.permute.xlu0 %2623
      %2625 = vrot.lane.b32.xlu0 %v448, 4
      %v2626 = vpop.permute.xlu0 %2625
      %2627 = vrot.lane.b32.xlu0 %v449, 4
      %v2628 = vpop.permute.xlu0 %2627
      %2629 = vrot.lane.b32.xlu0 %v450, 4
      %v2630 = vpop.permute.xlu0 %2629
      %2631 = vrot.lane.b32.xlu0 %v451, 4
      %v2632 = vpop.permute.xlu0 %2631
      %2633 = vrot.lane.b32.xlu0 %v452, 4
      %v2634 = vpop.permute.xlu0 %2633
      %2635 = vrot.lane.b32.xlu0 %v453, 4
      %v2636 = vpop.permute.xlu0 %2635
      %2701 = vrot.lane.b32.xlu0 %v487, 8
      %v2702 = vpop.permute.xlu0 %2701
      %2703 = vrot.lane.b32.xlu0 %v488, 8
      %v2704 = vpop.permute.xlu0 %2703
      %2705 = vrot.lane.b32.xlu0 %v489, 8
      %v2706 = vpop.permute.xlu0 %2705
      %2707 = vrot.lane.b32.xlu0 %v490, 8
      %v2708 = vpop.permute.xlu0 %2707
      %2709 = vrot.lane.b32.xlu0 %v491, 8
      %v2710 = vpop.permute.xlu0 %2709
      %2711 = vrot.lane.b32.xlu0 %v492, 8
      %v2712 = vpop.permute.xlu0 %2711
      %2713 = vrot.lane.b32.xlu0 %v493, 8
      %v2714 = vpop.permute.xlu0 %2713
      %2715 = vrot.lane.b32.xlu0 %v494, 8
      %v2716 = vpop.permute.xlu0 %2715
      %2717 = vrot.lane.b32.xlu0 %v495, 8
      %v2718 = vpop.permute.xlu0 %2717
      %2719 = vrot.lane.b32.xlu0 %v496, 8
      %v2720 = vpop.permute.xlu0 %2719
      %2721 = vrot.lane.b32.xlu0 %v497, 8
      %v2722 = vpop.permute.xlu0 %2721
      %2723 = vrot.lane.b32.xlu0 %v498, 8
      %v2724 = vpop.permute.xlu0 %2723
      %2725 = vrot.lane.b32.xlu0 %v499, 8
      %v2726 = vpop.permute.xlu0 %2725
      %2727 = vrot.lane.b32.xlu0 %v500, 8
      %v2728 = vpop.permute.xlu0 %2727
      %2729 = vrot.lane.b32.xlu0 %v501, 8
      %v2730 = vpop.permute.xlu0 %2729
      %2731 = vrot.lane.b32.xlu0 %v502, 8
      %v2732 = vpop.permute.xlu0 %2731
      %2733 = vrot.lane.b32.xlu0 %v503, 8
      %v2734 = vpop.permute.xlu0 %2733
      %2735 = vrot.lane.b32.xlu0 %v504, 8
      %v2736 = vpop.permute.xlu0 %2735
      %2737 = vrot.lane.b32.xlu0 %v505, 8
      %v2738 = vpop.permute.xlu0 %2737
      %2739 = vrot.lane.b32.xlu0 %v506, 8
      %v2740 = vpop.permute.xlu0 %2739
      %2741 = vrot.lane.b32.xlu0 %v507, 8
      %v2742 = vpop.permute.xlu0 %2741
      %2743 = vrot.lane.b32.xlu0 %v508, 8
      %v2744 = vpop.permute.xlu0 %2743
      %2745 = vrot.lane.b32.xlu0 %v509, 8
      %v2746 = vpop.permute.xlu0 %2745
      %2747 = vrot.lane.b32.xlu0 %v510, 8
      %v2748 = vpop.permute.xlu0 %2747
      %2749 = vrot.lane.b32.xlu0 %v511, 8
      %v2750 = vpop.permute.xlu0 %2749
      %2751 = vrot.lane.b32.xlu0 %v512, 8
      %v2752 = vpop.permute.xlu0 %2751
      %2753 = vrot.lane.b32.xlu0 %v513, 8
      %v2754 = vpop.permute.xlu0 %2753
      %2755 = vrot.lane.b32.xlu0 %v514, 8
      %v2756 = vpop.permute.xlu0 %2755
      %2757 = vrot.lane.b32.xlu0 %v515, 8
      %v2758 = vpop.permute.xlu0 %2757
      %2759 = vrot.lane.b32.xlu0 %v516, 8
      %v2760 = vpop.permute.xlu0 %2759
      %2761 = vrot.lane.b32.xlu0 %v517, 8
      %v2762 = vpop.permute.xlu0 %2761
      %2763 = vrot.lane.b32.xlu0 %v518, 8
      %v2764 = vpop.permute.xlu0 %2763
      %2829 = vrot.lane.b32.xlu0 %v519, 12
      %v2830 = vpop.permute.xlu0 %2829
      %2831 = vrot.lane.b32.xlu0 %v520, 12
      %v2832 = vpop.permute.xlu0 %2831
      %2833 = vrot.lane.b32.xlu0 %v521, 12
      %v2834 = vpop.permute.xlu0 %2833
      %2835 = vrot.lane.b32.xlu0 %v522, 12
      %v2836 = vpop.permute.xlu0 %2835
      %2837 = vrot.lane.b32.xlu0 %v523, 12
      %v2838 = vpop.permute.xlu0 %2837
      %2839 = vrot.lane.b32.xlu0 %v524, 12
      %v2840 = vpop.permute.xlu0 %2839
      %2841 = vrot.lane.b32.xlu0 %v525, 12
      %v2842 = vpop.permute.xlu0 %2841
      %2843 = vrot.lane.b32.xlu0 %v526, 12
      %v2844 = vpop.permute.xlu0 %2843
      %2845 = vrot.lane.b32.xlu0 %v527, 12
      %v2846 = vpop.permute.xlu0 %2845
      %2847 = vrot.lane.b32.xlu0 %v528, 12
      %v2848 = vpop.permute.xlu0 %2847
      %2849 = vrot.lane.b32.xlu0 %v529, 12
      %v2850 = vpop.permute.xlu0 %2849
      %2851 = vrot.lane.b32.xlu0 %v530, 12
      %v2852 = vpop.permute.xlu0 %2851
      %2853 = vrot.lane.b32.xlu0 %v531, 12
      %v2854 = vpop.permute.xlu0 %2853
      %2855 = vrot.lane.b32.xlu0 %v532, 12
      %v2856 = vpop.permute.xlu0 %2855
      %2857 = vrot.lane.b32.xlu0 %v533, 12
      %v2858 = vpop.permute.xlu0 %2857
      %2859 = vrot.lane.b32.xlu0 %v534, 12
      %v2860 = vpop.permute.xlu0 %2859
      %2861 = vrot.lane.b32.xlu0 %v535, 12
      %v2862 = vpop.permute.xlu0 %2861
      %2863 = vrot.lane.b32.xlu0 %v536, 12
      %v2864 = vpop.permute.xlu0 %2863
      %2865 = vrot.lane.b32.xlu0 %v537, 12
      %v2866 = vpop.permute.xlu0 %2865
      %2867 = vrot.lane.b32.xlu0 %v538, 12
      %v2868 = vpop.permute.xlu0 %2867
      %2869 = vrot.lane.b32.xlu0 %v539, 12
      %v2870 = vpop.permute.xlu0 %2869
      %2871 = vrot.lane.b32.xlu0 %v540, 12
      %v2872 = vpop.permute.xlu0 %2871
      %2873 = vrot.lane.b32.xlu0 %v541, 12
      %v2874 = vpop.permute.xlu0 %2873
      %2875 = vrot.lane.b32.xlu0 %v542, 12
      %v2876 = vpop.permute.xlu0 %2875
      %2877 = vrot.lane.b32.xlu0 %v543, 12
      %v2878 = vpop.permute.xlu0 %2877
      %2879 = vrot.lane.b32.xlu0 %v544, 12
      %v2880 = vpop.permute.xlu0 %2879
      %2881 = vrot.lane.b32.xlu0 %v545, 12
      %v2882 = vpop.permute.xlu0 %2881
      %2883 = vrot.lane.b32.xlu0 %v546, 12
      %v2884 = vpop.permute.xlu0 %2883
      %2885 = vrot.lane.b32.xlu0 %v547, 12
      %v2886 = vpop.permute.xlu0 %2885
      %2887 = vrot.lane.b32.xlu0 %v548, 12
      %v2888 = vpop.permute.xlu0 %2887
      %2889 = vrot.lane.b32.xlu0 %v549, 12
      %v2890 = vpop.permute.xlu0 %2889
      %2891 = vrot.lane.b32.xlu0 %v550, 12
      %v2892 = vpop.permute.xlu0 %2891
      %v2925 = vsel %vm183, %v390, %v2574
      %v2926 = vsel %vm183, %v391, %v2576
      %v2927 = vsel %vm183, %v392, %v2578
      %v2928 = vsel %vm183, %v393, %v2580
      %v2929 = vsel %vm183, %v394, %v2582
      %v2930 = vsel %vm183, %v395, %v2584
      %v2931 = vsel %vm183, %v396, %v2586
      %v2932 = vsel %vm183, %v397, %v2588
      %v2933 = vsel %vm183, %v398, %v2590
      %v2934 = vsel %vm183, %v399, %v2592
      %v2935 = vsel %vm183, %v400, %v2594
      %v2936 = vsel %vm183, %v401, %v2596
      %v2937 = vsel %vm183, %v402, %v2598
      %v2938 = vsel %vm183, %v403, %v2600
      %v2939 = vsel %vm183, %v404, %v2602
      %v2940 = vsel %vm183, %v405, %v2604
      %v2941 = vsel %vm183, %v406, %v2606
      %v2942 = vsel %vm183, %v407, %v2608
      %v2943 = vsel %vm183, %v408, %v2610
      %v2944 = vsel %vm183, %v409, %v2612
      %v2945 = vsel %vm183, %v410, %v2614
      %v2946 = vsel %vm183, %v411, %v2616
      %v2947 = vsel %vm183, %v412, %v2618
      %v2948 = vsel %vm183, %v413, %v2620
      %v2949 = vsel %vm183, %v414, %v2622
      %v2950 = vsel %vm183, %v415, %v2624
      %v2951 = vsel %vm183, %v416, %v2626
      %v2952 = vsel %vm183, %v417, %v2628
      %v2953 = vsel %vm183, %v418, %v2630
      %v2954 = vsel %vm183, %v419, %v2632
      %v2955 = vsel %vm183, %v420, %v2634
      %v2956 = vsel %vm183, %v421, %v2636
      %v2957 = vsel %vm1001, %v2925, %v2702
      %v2958 = vsel %vm1001, %v2926, %v2704
      %v2959 = vsel %vm1001, %v2927, %v2706
      %v2960 = vsel %vm1001, %v2928, %v2708
      %v2961 = vsel %vm1001, %v2929, %v2710
      %v2962 = vsel %vm1001, %v2930, %v2712
      %v2963 = vsel %vm1001, %v2931, %v2714
      %v2964 = vsel %vm1001, %v2932, %v2716
      %v2965 = vsel %vm1001, %v2933, %v2718
      %v2966 = vsel %vm1001, %v2934, %v2720
      %v2967 = vsel %vm1001, %v2935, %v2722
      %v2968 = vsel %vm1001, %v2936, %v2724
      %v2969 = vsel %vm1001, %v2937, %v2726
      %v2970 = vsel %vm1001, %v2938, %v2728
      %v2971 = vsel %vm1001, %v2939, %v2730
      %v2972 = vsel %vm1001, %v2940, %v2732
      %v2973 = vsel %vm1001, %v2941, %v2734
      %v2974 = vsel %vm1001, %v2942, %v2736
      %v2975 = vsel %vm1001, %v2943, %v2738
      %v2976 = vsel %vm1001, %v2944, %v2740
      %v2977 = vsel %vm1001, %v2945, %v2742
      %v2978 = vsel %vm1001, %v2946, %v2744
      %v2979 = vsel %vm1001, %v2947, %v2746
      %v2980 = vsel %vm1001, %v2948, %v2748
      %v2981 = vsel %vm1001, %v2949, %v2750
      %v2982 = vsel %vm1001, %v2950, %v2752
      %v2983 = vsel %vm1001, %v2951, %v2754
      %v2984 = vsel %vm1001, %v2952, %v2756
      %v2985 = vsel %vm1001, %v2953, %v2758
      %v2986 = vsel %vm1001, %v2954, %v2760
      %v2987 = vsel %vm1001, %v2955, %v2762
      %v2988 = vsel %vm1001, %v2956, %v2764
      %v2989 = vsel %vm1034, %v2957, %v2830
      %v2990 = vsel %vm1034, %v2958, %v2832
      %v2991 = vsel %vm1034, %v2959, %v2834
      %v2992 = vsel %vm1034, %v2960, %v2836
      %v2993 = vsel %vm1034, %v2961, %v2838
      %v2994 = vsel %vm1034, %v2962, %v2840
      %v2995 = vsel %vm1034, %v2963, %v2842
      %v2996 = vsel %vm1034, %v2964, %v2844
      %v2997 = vsel %vm1034, %v2965, %v2846
      %v2998 = vsel %vm1034, %v2966, %v2848
      %v2999 = vsel %vm1034, %v2967, %v2850
      %v3000 = vsel %vm1034, %v2968, %v2852
      %v3001 = vsel %vm1034, %v2969, %v2854
      %v3002 = vsel %vm1034, %v2970, %v2856
      %v3003 = vsel %vm1034, %v2971, %v2858
      %v3004 = vsel %vm1034, %v2972, %v2860
      %v3005 = vsel %vm1034, %v2973, %v2862
      %v3006 = vsel %vm1034, %v2974, %v2864
      %v3007 = vsel %vm1034, %v2975, %v2866
      %v3008 = vsel %vm1034, %v2976, %v2868
      %v3009 = vsel %vm1034, %v2977, %v2870
      %v3010 = vsel %vm1034, %v2978, %v2872
      %v3011 = vsel %vm1034, %v2979, %v2874
      %v3012 = vsel %vm1034, %v2980, %v2876
      %v3013 = vsel %vm1034, %v2981, %v2878
      %v3014 = vsel %vm1034, %v2982, %v2880
      %v3015 = vsel %vm1034, %v2983, %v2882
      %v3016 = vsel %vm1034, %v2984, %v2884
      %v3017 = vsel %vm1034, %v2985, %v2886
      %v3018 = vsel %vm1034, %v2986, %v2888
      %v3019 = vsel %vm1034, %v2987, %v2890
      %v3020 = vsel %vm1034, %v2988, %v2892
      %v3022 = vsel %vm1067, %v2989, 0
      %v3025 = vsel %vm1067, %v2990, 0
      %v3028 = vsel %vm1067, %v2991, 0
      %v3031 = vsel %vm1067, %v2992, 0
      %v3034 = vsel %vm1067, %v2993, 0
      %v3037 = vsel %vm1067, %v2994, 0
      %v3040 = vsel %vm1067, %v2995, 0
      %v3043 = vsel %vm1067, %v2996, 0
      %v3046 = vsel %vm1067, %v2997, 0
      %v3049 = vsel %vm1067, %v2998, 0
      %v3052 = vsel %vm1067, %v2999, 0
      %v3055 = vsel %vm1067, %v3000, 0
      %v3058 = vsel %vm1067, %v3001, 0
      %v3061 = vsel %vm1067, %v3002, 0
      %v3064 = vsel %vm1067, %v3003, 0
      %v3067 = vsel %vm1067, %v3004, 0
      %v3070 = vsel %vm1067, %v3005, 0
      %v3073 = vsel %vm1067, %v3006, 0
      %v3076 = vsel %vm1067, %v3007, 0
      %v3079 = vsel %vm1067, %v3008, 0
      %v3082 = vsel %vm1067, %v3009, 0
      %v3085 = vsel %vm1067, %v3010, 0
      %v3088 = vsel %vm1067, %v3011, 0
      %v3091 = vsel %vm1067, %v3012, 0
      %v3094 = vsel %vm1067, %v3013, 0
      %v3097 = vsel %vm1067, %v3014, 0
      %v3100 = vsel %vm1067, %v3015, 0
      %v3103 = vsel %vm1067, %v3016, 0
      %v3106 = vsel %vm1067, %v3017, 0
      %v3109 = vsel %vm1067, %v3018, 0
      %v3112 = vsel %vm1067, %v3019, 0
      %v3115 = vsel %vm1067, %v3020, 0
      %3117 = vmatprep.subr.mxu0 0.0
      %3118 = vmatpush1.msra.mxu0 %v2571
      %3119 = vmatprep.subr.mxu0 0.0
      %3120 = vmatpush1.msra.mxu0 %v2572
      %3121 = vmatprep.subr.mxu0 0.0
      %3122 = vmatpush1.msra.mxu0 0.0
      %3123 = vmatprep.subr.mxu0 0.0
      %3124 = vmatpush1.msra.mxu0 0.0
      %3125 = vmatprep.subr.mxu0 0.0
      %3126 = vmatpush1.msra.mxu0 0.0
      %3127 = vmatprep.subr.mxu0 0.0
      %3128 = vmatpush1.msra.mxu0 0.0
      %3129 = vmatprep.subr.mxu0 0.0
      %3130 = vmatpush1.msra.mxu0 0.0
      %3131 = vmatprep.subr.mxu0 0.0
      %3132 = vmatpush1.msra.mxu0 0.0
      %3133 = vmatprep.subr.mxu0 0.0
      %3134 = vmatpush1.msra.mxu0 0.0
      %3135 = vmatprep.subr.mxu0 0.0
      %3136 = vmatpush1.msra.mxu0 0.0
      %3137 = vmatprep.subr.mxu0 0.0
      %3138 = vmatpush1.msra.mxu0 0.0
      %3139 = vmatprep.subr.mxu0 0.0
      %3140 = vmatpush1.msra.mxu0 0.0
      %3141 = vmatprep.subr.mxu0 0.0
      %3142 = vmatpush1.msra.mxu0 0.0
      %3143 = vmatprep.subr.mxu0 0.0
      %3144 = vmatpush1.msra.mxu0 0.0
      %3145 = vmatprep.subr.mxu0 0.0
      %3146 = vmatpush1.msra.mxu0 0.0
      %3147 = vmatprep.subr.mxu0 0.0
      %3148 = vmatpush1.msra.mxu0 0.0
      %3149 = vmatprep.subr.mxu0 0.0
      %3150 = vmatpush1.msra.mxu0 0.0
      %3151 = vmatprep.subr.mxu0 0.0
      %3152 = vmatpush1.msra.mxu0 0.0
      %3153 = vmatprep.subr.mxu0 0.0
      %3154 = vmatpush1.msra.mxu0 0.0
      %3155 = vmatprep.subr.mxu0 0.0
      %3156 = vmatpush1.msra.mxu0 0.0
      %3157 = vmatprep.subr.mxu0 0.0
      %3158 = vmatpush1.msra.mxu0 0.0
      %3159 = vmatprep.subr.mxu0 0.0
      %3160 = vmatpush1.msra.mxu0 0.0
      %3161 = vmatprep.subr.mxu0 0.0
      %3162 = vmatpush1.msra.mxu0 0.0
      %3163 = vmatprep.subr.mxu0 0.0
      %3164 = vmatpush1.msra.mxu0 0.0
      %3165 = vmatprep.subr.mxu0 0.0
      %3166 = vmatpush1.msra.mxu0 0.0
      %3167 = vmatprep.subr.mxu0 0.0
      %3168 = vmatpush1.msra.mxu0 0.0
      %3169 = vmatprep.subr.mxu0 0.0
      %3170 = vmatpush1.msra.mxu0 0.0
      %3171 = vmatprep.subr.mxu0 0.0
      %3172 = vmatpush1.msra.mxu0 0.0
      %3173 = vmatprep.subr.mxu0 0.0
      %3174 = vmatpush1.msra.mxu0 0.0
      %3175 = vmatprep.subr.mxu0 0.0
      %3176 = vmatpush1.msra.mxu0 0.0
      %3177 = vmatprep.subr.mxu0 0.0
      %3178 = vmatpush1.msra.mxu0 0.0
      %3179 = vmatprep.subr.mxu0 0.0
      %3180 = vmatpush1.msra.mxu0 0.0
      %3181 = vmatprep.mubr.f32.mxu0 0.0
      %3182 = vmatmul.mubr.f32.gmra.mrb[0].mxu0 %v3022
      %v3183 = vpop.f32.mrb[0].mxu0
      %v3184 = vadd.f32 0.0, %v3183
      %v3185 = vpop.f32.mrb[0].mxu0
      %3186 = vmatprep.mubr.f32.mxu0 0.0
      %3187 = vmatmul.mubr.f32.gmra.mrb[0].mxu0 %v3025
      %v3188 = vpop.f32.mrb[0].mxu0
      %v3189 = vadd.f32 0.0, %v3188
      %v3190 = vpop.f32.mrb[0].mxu0
      %3191 = vmatprep.mubr.f32.mxu0 0.0
      %3192 = vmatmul.mubr.f32.gmra.mrb[0].mxu0 %v3028
      %v3193 = vpop.f32.mrb[0].mxu0
      %v3194 = vadd.f32 0.0, %v3193
      %v3195 = vpop.f32.mrb[0].mxu0
      %3196 = vmatprep.mubr.f32.mxu0 0.0
      %3197 = vmatmul.mubr.f32.gmra.mrb[0].mxu0 %v3031
      %v3198 = vpop.f32.mrb[0].mxu0
      %v3199 = vadd.f32 0.0, %v3198
      %v3200 = vpop.f32.mrb[0].mxu0
      %3201 = vmatprep.mubr.f32.mxu0 0.0
      %3202 = vmatmul.mubr.f32.gmra.mrb[0].mxu0 %v3034
      %v3203 = vpop.f32.mrb[0].mxu0
      %v3204 = vadd.f32 0.0, %v3203
      %v3205 = vpop.f32.mrb[0].mxu0
      %3206 = vmatprep.mubr.f32.mxu0 0.0
      %3207 = vmatmul.mubr.f32.gmra.mrb[0].mxu0 %v3037
      %v3208 = vpop.f32.mrb[0].mxu0
      %v3209 = vadd.f32 0.0, %v3208
      %v3210 = vpop.f32.mrb[0].mxu0
      %3211 = vmatprep.mubr.f32.mxu0 0.0
      %3212 = vmatmul.mubr.f32.gmra.mrb[0].mxu0 %v3040
      %v3213 = vpop.f32.mrb[0].mxu0
      %v3214 = vadd.f32 0.0, %v3213
      %v3215 = vpop.f32.mrb[0].mxu0
      %3216 = vmatprep.mubr.f32.mxu0 0.0
      %3217 = vmatmul.mubr.f32.gmra.mrb[0].mxu0 %v3043
      %v3218 = vpop.f32.mrb[0].mxu0
      %v3219 = vadd.f32 0.0, %v3218
      %v3220 = vpop.f32.mrb[0].mxu0
      %3221 = vmatprep.mubr.f32.mxu0 0.0
      %3222 = vmatmul.mubr.f32.gmra.mrb[0].mxu0 %v3046
      %v3223 = vpop.f32.mrb[0].mxu0
      %v3224 = vadd.f32 0.0, %v3223
      %v3225 = vpop.f32.mrb[0].mxu0
      %3226 = vmatprep.mubr.f32.mxu0 0.0
      %3227 = vmatmul.mubr.f32.gmra.mrb[0].mxu0 %v3049
      %v3228 = vpop.f32.mrb[0].mxu0
      %v3229 = vadd.f32 0.0, %v3228
      %v3230 = vpop.f32.mrb[0].mxu0
      %3231 = vmatprep.mubr.f32.mxu0 0.0
      %3232 = vmatmul.mubr.f32.gmra.mrb[0].mxu0 %v3052
      %v3233 = vpop.f32.mrb[0].mxu0
      %v3234 = vadd.f32 0.0, %v3233
      %v3235 = vpop.f32.mrb[0].mxu0
      %3236 = vmatprep.mubr.f32.mxu0 0.0
      %3237 = vmatmul.mubr.f32.gmra.mrb[0].mxu0 %v3055
      %v3238 = vpop.f32.mrb[0].mxu0
      %v3239 = vadd.f32 0.0, %v3238
      %v3240 = vpop.f32.mrb[0].mxu0
      %3241 = vmatprep.mubr.f32.mxu0 0.0
      %3242 = vmatmul.mubr.f32.gmra.mrb[0].mxu0 %v3058
      %v3243 = vpop.f32.mrb[0].mxu0
      %v3244 = vadd.f32 0.0, %v3243
      %v3245 = vpop.f32.mrb[0].mxu0
      %3246 = vmatprep.mubr.f32.mxu0 0.0
      %3247 = vmatmul.mubr.f32.gmra.mrb[0].mxu0 %v3061
      %v3248 = vpop.f32.mrb[0].mxu0
      %v3249 = vadd.f32 0.0, %v3248
      %v3250 = vpop.f32.mrb[0].mxu0
      %3251 = vmatprep.mubr.f32.mxu0 0.0
      %3252 = vmatmul.mubr.f32.gmra.mrb[0].mxu0 %v3064
      %v3253 = vpop.f32.mrb[0].mxu0
      %v3254 = vadd.f32 0.0, %v3253
      %v3255 = vpop.f32.mrb[0].mxu0
      %3256 = vmatprep.mubr.f32.mxu0 0.0
      %3257 = vmatmul.mubr.f32.gmra.mrb[0].mxu0 %v3067
      %v3258 = vpop.f32.mrb[0].mxu0
      %v3259 = vadd.f32 0.0, %v3258
      %v3260 = vpop.f32.mrb[0].mxu0
      %3261 = vmatprep.mubr.f32.mxu0 0.0
      %3262 = vmatmul.mubr.f32.gmra.mrb[0].mxu0 %v3070
      %v3263 = vpop.f32.mrb[0].mxu0
      %v3264 = vadd.f32 0.0, %v3263
      %v3265 = vpop.f32.mrb[0].mxu0
      %3266 = vmatprep.mubr.f32.mxu0 0.0
      %3267 = vmatmul.mubr.f32.gmra.mrb[0].mxu0 %v3073
      %v3268 = vpop.f32.mrb[0].mxu0
      %v3269 = vadd.f32 0.0, %v3268
      %v3270 = vpop.f32.mrb[0].mxu0
      %3271 = vmatprep.mubr.f32.mxu0 0.0
      %3272 = vmatmul.mubr.f32.gmra.mrb[0].mxu0 %v3076
      %v3273 = vpop.f32.mrb[0].mxu0
      %v3274 = vadd.f32 0.0, %v3273
      %v3275 = vpop.f32.mrb[0].mxu0
      %3276 = vmatprep.mubr.f32.mxu0 0.0
      %3277 = vmatmul.mubr.f32.gmra.mrb[0].mxu0 %v3079
      %v3278 = vpop.f32.mrb[0].mxu0
      %v3279 = vadd.f32 0.0, %v3278
      %v3280 = vpop.f32.mrb[0].mxu0
      %3281 = vmatprep.mubr.f32.mxu0 0.0
      %3282 = vmatmul.mubr.f32.gmra.mrb[0].mxu0 %v3082
      %v3283 = vpop.f32.mrb[0].mxu0
      %v3284 = vadd.f32 0.0, %v3283
      %v3285 = vpop.f32.mrb[0].mxu0
      %3286 = vmatprep.mubr.f32.mxu0 0.0
      %3287 = vmatmul.mubr.f32.gmra.mrb[0].mxu0 %v3085
      %v3288 = vpop.f32.mrb[0].mxu0
      %v3289 = vadd.f32 0.0, %v3288
      %v3290 = vpop.f32.mrb[0].mxu0
      %3291 = vmatprep.mubr.f32.mxu0 0.0
      %3292 = vmatmul.mubr.f32.gmra.mrb[0].mxu0 %v3088
      %v3293 = vpop.f32.mrb[0].mxu0
      %v3294 = vadd.f32 0.0, %v3293
      %v3295 = vpop.f32.mrb[0].mxu0
      %3296 = vmatprep.mubr.f32.mxu0 0.0
      %3297 = vmatmul.mubr.f32.gmra.mrb[0].mxu0 %v3091
      %v3298 = vpop.f32.mrb[0].mxu0
      %v3299 = vadd.f32 0.0, %v3298
      %v3300 = vpop.f32.mrb[0].mxu0
      %3301 = vmatprep.mubr.f32.mxu0 0.0
      %3302 = vmatmul.mubr.f32.gmra.mrb[0].mxu0 %v3094
      %v3303 = vpop.f32.mrb[0].mxu0
      %v3304 = vadd.f32 0.0, %v3303
      %v3305 = vpop.f32.mrb[0].mxu0
      %3306 = vmatprep.mubr.f32.mxu0 0.0
      %3307 = vmatmul.mubr.f32.gmra.mrb[0].mxu0 %v3097
      %v3308 = vpop.f32.mrb[0].mxu0
      %v3309 = vadd.f32 0.0, %v3308
      %v3310 = vpop.f32.mrb[0].mxu0
      %3311 = vmatprep.mubr.f32.mxu0 0.0
      %3312 = vmatmul.mubr.f32.gmra.mrb[0].mxu0 %v3100
      %v3313 = vpop.f32.mrb[0].mxu0
      %v3314 = vadd.f32 0.0, %v3313
      %v3315 = vpop.f32.mrb[0].mxu0
      %3316 = vmatprep.mubr.f32.mxu0 0.0
      %3317 = vmatmul.mubr.f32.gmra.mrb[0].mxu0 %v3103
      %v3318 = vpop.f32.mrb[0].mxu0
      %v3319 = vadd.f32 0.0, %v3318
      %v3320 = vpop.f32.mrb[0].mxu0
      %3321 = vmatprep.mubr.f32.mxu0 0.0
      %3322 = vmatmul.mubr.f32.gmra.mrb[0].mxu0 %v3106
      %v3323 = vpop.f32.mrb[0].mxu0
      %v3324 = vadd.f32 0.0, %v3323
      %v3325 = vpop.f32.mrb[0].mxu0
      %3326 = vmatprep.mubr.f32.mxu0 0.0
      %3327 = vmatmul.mubr.f32.gmra.mrb[0].mxu0 %v3109
      %v3328 = vpop.f32.mrb[0].mxu0
      %v3329 = vadd.f32 0.0, %v3328
      %v3330 = vpop.f32.mrb[0].mxu0
      %3331 = vmatprep.mubr.f32.mxu0 0.0
      %3332 = vmatmul.mubr.f32.gmra.mrb[0].mxu0 %v3112
      %v3333 = vpop.f32.mrb[0].mxu0
      %v3334 = vadd.f32 0.0, %v3333
      %v3335 = vpop.f32.mrb[0].mxu0
      %3336 = vmatprep.mubr.f32.mxu0 0.0
      %3337 = vmatmul.mubr.f32.gmra.mrb[0].mxu0 %v3115
      %v3338 = vpop.f32.mrb[0].mxu0
      %v3339 = vadd.f32 0.0, %v3338
      %v3340 = vpop.f32.mrb[0].mxu0
      %3341 = vdwg.mxu0
      %s3342 = scalar_lea.vmem [#allocation3], 512
      %3343 = vst.msk [vmem:[%s3342] sm:$0xff] %vm1001, %v3184
      %3344 = vst.msk [vmem:[%s3342 + $0x8] sm:$0xff] %vm1001, %v3189
      %3345 = vst.msk [vmem:[%s3342 + $0x10] sm:$0xff] %vm1001, %v3194
      %3346 = vst.msk [vmem:[%s3342 + $0x18] sm:$0xff] %vm1001, %v3199
      %3347 = vst.msk [vmem:[%s3342 + $0x20] sm:$0xff] %vm1001, %v3204
      %3348 = vst.msk [vmem:[%s3342 + $0x28] sm:$0xff] %vm1001, %v3209
      %3349 = vst.msk [vmem:[%s3342 + $0x30] sm:$0xff] %vm1001, %v3214
      %3350 = vst.msk [vmem:[%s3342 + $0x38] sm:$0xff] %vm1001, %v3219
      %3351 = vst.msk [vmem:[%s3342 + $0x40] sm:$0xff] %vm1001, %v3224
      %3352 = vst.msk [vmem:[%s3342 + $0x48] sm:$0xff] %vm1001, %v3229
      %3353 = vst.msk [vmem:[%s3342 + $0x50] sm:$0xff] %vm1001, %v3234
      %3354 = vst.msk [vmem:[%s3342 + $0x58] sm:$0xff] %vm1001, %v3239
      %3355 = vst.msk [vmem:[%s3342 + $0x60] sm:$0xff] %vm1001, %v3244
      %3356 = vst.msk [vmem:[%s3342 + $0x68] sm:$0xff] %vm1001, %v3249
      %3357 = vst.msk [vmem:[%s3342 + $0x70] sm:$0xff] %vm1001, %v3254
      %3358 = vst.msk [vmem:[%s3342 + $0x78] sm:$0xff] %vm1001, %v3259
      %3359 = vst.msk [vmem:[%s3342 + $0x80] sm:$0xff] %vm1001, %v3264
      %3360 = vst.msk [vmem:[%s3342 + $0x88] sm:$0xff] %vm1001, %v3269
      %3361 = vst.msk [vmem:[%s3342 + $0x90] sm:$0xff] %vm1001, %v3274
      %3362 = vst.msk [vmem:[%s3342 + $0x98] sm:$0xff] %vm1001, %v3279
      %3363 = vst.msk [vmem:[%s3342 + $0xa0] sm:$0xff] %vm1001, %v3284
      %3364 = vst.msk [vmem:[%s3342 + $0xa8] sm:$0xff] %vm1001, %v3289
      %3365 = vst.msk [vmem:[%s3342 + $0xb0] sm:$0xff] %vm1001, %v3294
      %3366 = vst.msk [vmem:[%s3342 + $0xb8] sm:$0xff] %vm1001, %v3299
      %3367 = vst.msk [vmem:[%s3342 + $0xc0] sm:$0xff] %vm1001, %v3304
      %3368 = vst.msk [vmem:[%s3342 + $0xc8] sm:$0xff] %vm1001, %v3309
      %3369 = vst.msk [vmem:[%s3342 + $0xd0] sm:$0xff] %vm1001, %v3314
      %3370 = vst.msk [vmem:[%s3342 + $0xd8] sm:$0xff] %vm1001, %v3319
      %3371 = vst.msk [vmem:[%s3342 + $0xe0] sm:$0xff] %vm1001, %v3324
      %3372 = vst.msk [vmem:[%s3342 + $0xe8] sm:$0xff] %vm1001, %v3329
      %3373 = vst.msk [vmem:[%s3342 + $0xf0] sm:$0xff] %vm1001, %v3334
      %3374 = vst.msk [vmem:[%s3342 + $0xf8] sm:$0xff] %vm1001, %v3339
      %v3375 = vsel %vm1001, %v3184, 0.0
      %v3376 = vsel %vm1001, %v3189, 0.0
      %v3377 = vadd.f32 %v3375, %v3376
      %v3378 = vsel %vm1001, %v3194, 0.0
      %v3379 = vadd.f32 %v3377, %v3378
      %v3380 = vsel %vm1001, %v3199, 0.0
      %v3381 = vadd.f32 %v3379, %v3380
      %v3382 = vsel %vm1001, %v3204, 0.0
      %v3383 = vadd.f32 %v3381, %v3382
      %v3384 = vsel %vm1001, %v3209, 0.0
      %v3385 = vadd.f32 %v3383, %v3384
      %v3386 = vsel %vm1001, %v3214, 0.0
      %v3387 = vadd.f32 %v3385, %v3386
      %v3388 = vsel %vm1001, %v3219, 0.0
      %v3389 = vadd.f32 %v3387, %v3388
      %v3390 = vsel %vm1001, %v3224, 0.0
      %v3391 = vadd.f32 %v3389, %v3390
      %v3392 = vsel %vm1001, %v3229, 0.0
      %v3393 = vadd.f32 %v3391, %v3392
      %v3394 = vsel %vm1001, %v3234, 0.0
      %v3395 = vadd.f32 %v3393, %v3394
      %v3396 = vsel %vm1001, %v3239, 0.0
      %v3397 = vadd.f32 %v3395, %v3396
      %v3398 = vsel %vm1001, %v3244, 0.0
      %v3399 = vadd.f32 %v3397, %v3398
      %v3400 = vsel %vm1001, %v3249, 0.0
      %v3401 = vadd.f32 %v3399, %v3400
      %v3402 = vsel %vm1001, %v3254, 0.0
      %v3403 = vadd.f32 %v3401, %v3402
      %v3404 = vsel %vm1001, %v3259, 0.0
      %v3405 = vadd.f32 %v3403, %v3404
      %v3406 = vsel %vm1001, %v3264, 0.0
      %v3407 = vadd.f32 %v3405, %v3406
      %v3408 = vsel %vm1001, %v3269, 0.0
      %v3409 = vadd.f32 %v3407, %v3408
      %v3410 = vsel %vm1001, %v3274, 0.0
      %v3411 = vadd.f32 %v3409, %v3410
      %v3412 = vsel %vm1001, %v3279, 0.0
      %v3413 = vadd.f32 %v3411, %v3412
      %v3414 = vsel %vm1001, %v3284, 0.0
      %v3415 = vadd.f32 %v3413, %v3414
      %v3416 = vsel %vm1001, %v3289, 0.0
      %v3417 = vadd.f32 %v3415, %v3416
      %v3418 = vsel %vm1001, %v3294, 0.0
      %v3419 = vadd.f32 %v3417, %v3418
      %v3420 = vsel %vm1001, %v3299, 0.0
      %v3421 = vadd.f32 %v3419, %v3420
      %v3422 = vsel %vm1001, %v3304, 0.0
      %v3423 = vadd.f32 %v3421, %v3422
      %v3424 = vsel %vm1001, %v3309, 0.0
      %v3425 = vadd.f32 %v3423, %v3424
      %v3426 = vsel %vm1001, %v3314, 0.0
      %v3427 = vadd.f32 %v3425, %v3426
      %v3428 = vsel %vm1001, %v3319, 0.0
      %v3429 = vadd.f32 %v3427, %v3428
      %v3430 = vsel %vm1001, %v3324, 0.0
      %v3431 = vadd.f32 %v3429, %v3430
      %v3432 = vsel %vm1001, %v3329, 0.0
      %v3433 = vadd.f32 %v3431, %v3432
      %v3434 = vsel %vm1001, %v3334, 0.0
      %v3435 = vadd.f32 %v3433, %v3434
      %v3436 = vsel %vm1001, %v3339, 0.0
      %v3437 = vadd.f32 %v3435, %v3436
      %v3438 = vrot.slane %v3437, 4
      %v3439 = vadd.f32 %v3437, %v3438
      %v3440 = vrot.slane %v3439, 2
      %v3441 = vadd.f32 %v3439, %v3440
      %v3442 = vrot.slane %v3441, 1
      %v3443 = vadd.f32 %v3441, %v3442
      %v3444 = vadd.f32 %v2467, %v3443
      %v3445 = vmul.f32 %v3184, %v3184
      %v3446 = vmul.f32 %v3189, %v3189
      %v3447 = vmul.f32 %v3194, %v3194
      %v3448 = vmul.f32 %v3199, %v3199
      %v3449 = vmul.f32 %v3204, %v3204
      %v3450 = vmul.f32 %v3209, %v3209
      %v3451 = vmul.f32 %v3214, %v3214
      %v3452 = vmul.f32 %v3219, %v3219
      %v3453 = vmul.f32 %v3224, %v3224
      %v3454 = vmul.f32 %v3229, %v3229
      %v3455 = vmul.f32 %v3234, %v3234
      %v3456 = vmul.f32 %v3239, %v3239
      %v3457 = vmul.f32 %v3244, %v3244
      %v3458 = vmul.f32 %v3249, %v3249
      %v3459 = vmul.f32 %v3254, %v3254
      %v3460 = vmul.f32 %v3259, %v3259
      %v3461 = vmul.f32 %v3264, %v3264
      %v3462 = vmul.f32 %v3269, %v3269
      %v3463 = vmul.f32 %v3274, %v3274
      %v3464 = vmul.f32 %v3279, %v3279
      %v3465 = vmul.f32 %v3284, %v3284
      %v3466 = vmul.f32 %v3289, %v3289
      %v3467 = vmul.f32 %v3294, %v3294
      %v3468 = vmul.f32 %v3299, %v3299
      %v3469 = vmul.f32 %v3304, %v3304
      %v3470 = vmul.f32 %v3309, %v3309
      %v3471 = vmul.f32 %v3314, %v3314
      %v3472 = vmul.f32 %v3319, %v3319
      %v3473 = vmul.f32 %v3324, %v3324
      %v3474 = vmul.f32 %v3329, %v3329
      %v3475 = vmul.f32 %v3334, %v3334
      %v3476 = vmul.f32 %v3339, %v3339
      %v3477 = vsel %vm1001, %v3445, 0.0
      %v3478 = vsel %vm1001, %v3446, 0.0
      %v3479 = vadd.f32 %v3477, %v3478
      %v3480 = vsel %vm1001, %v3447, 0.0
      %v3481 = vadd.f32 %v3479, %v3480
      %v3482 = vsel %vm1001, %v3448, 0.0
      %v3483 = vadd.f32 %v3481, %v3482
      %v3484 = vsel %vm1001, %v3449, 0.0
      %v3485 = vadd.f32 %v3483, %v3484
      %v3486 = vsel %vm1001, %v3450, 0.0
      %v3487 = vadd.f32 %v3485, %v3486
      %v3488 = vsel %vm1001, %v3451, 0.0
      %v3489 = vadd.f32 %v3487, %v3488
      %v3490 = vsel %vm1001, %v3452, 0.0
      %v3491 = vadd.f32 %v3489, %v3490
      %v3492 = vsel %vm1001, %v3453, 0.0
      %v3493 = vadd.f32 %v3491, %v3492
      %v3494 = vsel %vm1001, %v3454, 0.0
      %v3495 = vadd.f32 %v3493, %v3494
      %v3496 = vsel %vm1001, %v3455, 0.0
      %v3497 = vadd.f32 %v3495, %v3496
      %v3498 = vsel %vm1001, %v3456, 0.0
      %v3499 = vadd.f32 %v3497, %v3498
      %v3500 = vsel %vm1001, %v3457, 0.0
      %v3501 = vadd.f32 %v3499, %v3500
      %v3502 = vsel %vm1001, %v3458, 0.0
      %v3503 = vadd.f32 %v3501, %v3502
      %v3504 = vsel %vm1001, %v3459, 0.0
      %v3505 = vadd.f32 %v3503, %v3504
      %v3506 = vsel %vm1001, %v3460, 0.0
      %v3507 = vadd.f32 %v3505, %v3506
      %v3508 = vsel %vm1001, %v3461, 0.0
      %v3509 = vadd.f32 %v3507, %v3508
      %v3510 = vsel %vm1001, %v3462, 0.0
      %v3511 = vadd.f32 %v3509, %v3510
      %v3512 = vsel %vm1001, %v3463, 0.0
      %v3513 = vadd.f32 %v3511, %v3512
      %v3514 = vsel %vm1001, %v3464, 0.0
      %v3515 = vadd.f32 %v3513, %v3514
      %v3516 = vsel %vm1001, %v3465, 0.0
      %v3517 = vadd.f32 %v3515, %v3516
      %v3518 = vsel %vm1001, %v3466, 0.0
      %v3519 = vadd.f32 %v3517, %v3518
      %v3520 = vsel %vm1001, %v3467, 0.0
      %v3521 = vadd.f32 %v3519, %v3520
      %v3522 = vsel %vm1001, %v3468, 0.0
      %v3523 = vadd.f32 %v3521, %v3522
      %v3524 = vsel %vm1001, %v3469, 0.0
      %v3525 = vadd.f32 %v3523, %v3524
      %v3526 = vsel %vm1001, %v3470, 0.0
      %v3527 = vadd.f32 %v3525, %v3526
      %v3528 = vsel %vm1001, %v3471, 0.0
      %v3529 = vadd.f32 %v3527, %v3528
      %v3530 = vsel %vm1001, %v3472, 0.0
      %v3531 = vadd.f32 %v3529, %v3530
      %v3532 = vsel %vm1001, %v3473, 0.0
      %v3533 = vadd.f32 %v3531, %v3532
      %v3534 = vsel %vm1001, %v3474, 0.0
      %v3535 = vadd.f32 %v3533, %v3534
      %v3536 = vsel %vm1001, %v3475, 0.0
      %v3537 = vadd.f32 %v3535, %v3536
      %v3538 = vsel %vm1001, %v3476, 0.0
      %v3539 = vadd.f32 %v3537, %v3538
      %v3540 = vrot.slane %v3539, 4
      %v3541 = vadd.f32 %v3539, %v3540
      %v3542 = vrot.slane %v3541, 2
      %v3543 = vadd.f32 %v3541, %v3542
      %v3544 = vrot.slane %v3543, 1
      %v3545 = vadd.f32 %v3543, %v3544
      %v3546 = vadd.f32 %v2569, %v3545
      %s3547 = scalar_lea.vmem %s173, 48
      %v3548 = vld [vmem:[%s3547] sm:$0xff]
      %v3549 = vld [vmem:[%s3547 + $0x8] sm:$0xff]
      %3550 = vrot.lane.b32.xlu0 %v454, 4
      %v3551 = vpop.permute.xlu0 %3550
      %3552 = vrot.lane.b32.xlu0 %v455, 4
      %v3553 = vpop.permute.xlu0 %3552
      %3554 = vrot.lane.b32.xlu0 %v456, 4
      %v3555 = vpop.permute.xlu0 %3554
      %3556 = vrot.lane.b32.xlu0 %v457, 4
      %v3557 = vpop.permute.xlu0 %3556
      %3558 = vrot.lane.b32.xlu0 %v458, 4
      %v3559 = vpop.permute.xlu0 %3558
      %3560 = vrot.lane.b32.xlu0 %v459, 4
      %v3561 = vpop.permute.xlu0 %3560
      %3562 = vrot.lane.b32.xlu0 %v460, 4
      %v3563 = vpop.permute.xlu0 %3562
      %3564 = vrot.lane.b32.xlu0 %v461, 4
      %v3565 = vpop.permute.xlu0 %3564
      %3566 = vrot.lane.b32.xlu0 %v462, 4
      %v3567 = vpop.permute.xlu0 %3566
      %3568 = vrot.lane.b32.xlu0 %v463, 4
      %v3569 = vpop.permute.xlu0 %3568
      %3570 = vrot.lane.b32.xlu0 %v464, 4
      %v3571 = vpop.permute.xlu0 %3570
      %3572 = vrot.lane.b32.xlu0 %v465, 4
      %v3573 = vpop.permute.xlu0 %3572
      %3574 = vrot.lane.b32.xlu0 %v466, 4
      %v3575 = vpop.permute.xlu0 %3574
      %3576 = vrot.lane.b32.xlu0 %v467, 4
      %v3577 = vpop.permute.xlu0 %3576
      %3578 = vrot.lane.b32.xlu0 %v468, 4
      %v3579 = vpop.permute.xlu0 %3578
      %3580 = vrot.lane.b32.xlu0 %v469, 4
      %v3581 = vpop.permute.xlu0 %3580
      %3582 = vrot.lane.b32.xlu0 %v470, 4
      %v3583 = vpop.permute.xlu0 %3582
      %3584 = vrot.lane.b32.xlu0 %v471, 4
      %v3585 = vpop.permute.xlu0 %3584
      %3586 = vrot.lane.b32.xlu0 %v472, 4
      %v3587 = vpop.permute.xlu0 %3586
      %3588 = vrot.lane.b32.xlu0 %v473, 4
      %v3589 = vpop.permute.xlu0 %3588
      %3590 = vrot.lane.b32.xlu0 %v474, 4
      %v3591 = vpop.permute.xlu0 %3590
      %3592 = vrot.lane.b32.xlu0 %v475, 4
      %v3593 = vpop.permute.xlu0 %3592
      %3594 = vrot.lane.b32.xlu0 %v476, 4
      %v3595 = vpop.permute.xlu0 %3594
      %3596 = vrot.lane.b32.xlu0 %v477, 4
      %v3597 = vpop.permute.xlu0 %3596
      %3598 = vrot.lane.b32.xlu0 %v478, 4
      %v3599 = vpop.permute.xlu0 %3598
      %3600 = vrot.lane.b32.xlu0 %v479, 4
      %v3601 = vpop.permute.xlu0 %3600
      %3602 = vrot.lane.b32.xlu0 %v480, 4
      %v3603 = vpop.permute.xlu0 %3602
      %3604 = vrot.lane.b32.xlu0 %v481, 4
      %v3605 = vpop.permute.xlu0 %3604
      %3606 = vrot.lane.b32.xlu0 %v482, 4
      %v3607 = vpop.permute.xlu0 %3606
      %3608 = vrot.lane.b32.xlu0 %v483, 4
      %v3609 = vpop.permute.xlu0 %3608
      %3610 = vrot.lane.b32.xlu0 %v484, 4
      %v3611 = vpop.permute.xlu0 %3610
      %3612 = vrot.lane.b32.xlu0 %v485, 4
      %v3613 = vpop.permute.xlu0 %3612
      %3646 = vrot.lane.b32.xlu0 %v519, 8
      %v3647 = vpop.permute.xlu0 %3646
      %3648 = vrot.lane.b32.xlu0 %v520, 8
      %v3649 = vpop.permute.xlu0 %3648
      %3650 = vrot.lane.b32.xlu0 %v521, 8
      %v3651 = vpop.permute.xlu0 %3650
      %3652 = vrot.lane.b32.xlu0 %v522, 8
      %v3653 = vpop.permute.xlu0 %3652
      %3654 = vrot.lane.b32.xlu0 %v523, 8
      %v3655 = vpop.permute.xlu0 %3654
      %3656 = vrot.lane.b32.xlu0 %v524, 8
      %v3657 = vpop.permute.xlu0 %3656
      %3658 = vrot.lane.b32.xlu0 %v525, 8
      %v3659 = vpop.permute.xlu0 %3658
      %3660 = vrot.lane.b32.xlu0 %v526, 8
      %v3661 = vpop.permute.xlu0 %3660
      %3662 = vrot.lane.b32.xlu0 %v527, 8
      %v3663 = vpop.permute.xlu0 %3662
      %3664 = vrot.lane.b32.xlu0 %v528, 8
      %v3665 = vpop.permute.xlu0 %3664
      %3666 = vrot.lane.b32.xlu0 %v529, 8
      %v3667 = vpop.permute.xlu0 %3666
      %3668 = vrot.lane.b32.xlu0 %v530, 8
      %v3669 = vpop.permute.xlu0 %3668
      %3670 = vrot.lane.b32.xlu0 %v531, 8
      %v3671 = vpop.permute.xlu0 %3670
      %3672 = vrot.lane.b32.xlu0 %v532, 8
      %v3673 = vpop.permute.xlu0 %3672
      %3674 = vrot.lane.b32.xlu0 %v533, 8
      %v3675 = vpop.permute.xlu0 %3674
      %3676 = vrot.lane.b32.xlu0 %v534, 8
      %v3677 = vpop.permute.xlu0 %3676
      %3678 = vrot.lane.b32.xlu0 %v535, 8
      %v3679 = vpop.permute.xlu0 %3678
      %3680 = vrot.lane.b32.xlu0 %v536, 8
      %v3681 = vpop.permute.xlu0 %3680
      %3682 = vrot.lane.b32.xlu0 %v537, 8
      %v3683 = vpop.permute.xlu0 %3682
      %3684 = vrot.lane.b32.xlu0 %v538, 8
      %v3685 = vpop.permute.xlu0 %3684
      %3686 = vrot.lane.b32.xlu0 %v539, 8
      %v3687 = vpop.permute.xlu0 %3686
      %3688 = vrot.lane.b32.xlu0 %v540, 8
      %v3689 = vpop.permute.xlu0 %3688
      %3690 = vrot.lane.b32.xlu0 %v541, 8
      %v3691 = vpop.permute.xlu0 %3690
      %3692 = vrot.lane.b32.xlu0 %v542, 8
      %v3693 = vpop.permute.xlu0 %3692
      %3694 = vrot.lane.b32.xlu0 %v543, 8
      %v3695 = vpop.permute.xlu0 %3694
      %3696 = vrot.lane.b32.xlu0 %v544, 8
      %v3697 = vpop.permute.xlu0 %3696
      %3698 = vrot.lane.b32.xlu0 %v545, 8
      %v3699 = vpop.permute.xlu0 %3698
      %3700 = vrot.lane.b32.xlu0 %v546, 8
      %v3701 = vpop.permute.xlu0 %3700
      %3702 = vrot.lane.b32.xlu0 %v547, 8
      %v3703 = vpop.permute.xlu0 %3702
      %3704 = vrot.lane.b32.xlu0 %v548, 8
      %v3705 = vpop.permute.xlu0 %3704
      %3706 = vrot.lane.b32.xlu0 %v549, 8
      %v3707 = vpop.permute.xlu0 %3706
      %3708 = vrot.lane.b32.xlu0 %v550, 8
      %v3709 = vpop.permute.xlu0 %3708
      %3774 = vrot.lane.b32.xlu0 %v551, 12
      %v3775 = vpop.permute.xlu0 %3774
      %3776 = vrot.lane.b32.xlu0 %v552, 12
      %v3777 = vpop.permute.xlu0 %3776
      %3778 = vrot.lane.b32.xlu0 %v553, 12
      %v3779 = vpop.permute.xlu0 %3778
      %3780 = vrot.lane.b32.xlu0 %v554, 12
      %v3781 = vpop.permute.xlu0 %3780
      %3782 = vrot.lane.b32.xlu0 %v555, 12
      %v3783 = vpop.permute.xlu0 %3782
      %3784 = vrot.lane.b32.xlu0 %v556, 12
      %v3785 = vpop.permute.xlu0 %3784
      %3786 = vrot.lane.b32.xlu0 %v557, 12
      %v3787 = vpop.permute.xlu0 %3786
      %3788 = vrot.lane.b32.xlu0 %v558, 12
      %v3789 = vpop.permute.xlu0 %3788
      %3790 = vrot.lane.b32.xlu0 %v559, 12
      %v3791 = vpop.permute.xlu0 %3790
      %3792 = vrot.lane.b32.xlu0 %v560, 12
      %v3793 = vpop.permute.xlu0 %3792
      %3794 = vrot.lane.b32.xlu0 %v561, 12
      %v3795 = vpop.permute.xlu0 %3794
      %3796 = vrot.lane.b32.xlu0 %v562, 12
      %v3797 = vpop.permute.xlu0 %3796
      %3798 = vrot.lane.b32.xlu0 %v563, 12
      %v3799 = vpop.permute.xlu0 %3798
      %3800 = vrot.lane.b32.xlu0 %v564, 12
      %v3801 = vpop.permute.xlu0 %3800
      %3802 = vrot.lane.b32.xlu0 %v565, 12
      %v3803 = vpop.permute.xlu0 %3802
      %3804 = vrot.lane.b32.xlu0 %v566, 12
      %v3805 = vpop.permute.xlu0 %3804
      %3806 = vrot.lane.b32.xlu0 %v567, 12
      %v3807 = vpop.permute.xlu0 %3806
      %3808 = vrot.lane.b32.xlu0 %v568, 12
      %v3809 = vpop.permute.xlu0 %3808
      %3810 = vrot.lane.b32.xlu0 %v569, 12
      %v3811 = vpop.permute.xlu0 %3810
      %3812 = vrot.lane.b32.xlu0 %v570, 12
      %v3813 = vpop.permute.xlu0 %3812
      %3814 = vrot.lane.b32.xlu0 %v571, 12
      %v3815 = vpop.permute.xlu0 %3814
      %3816 = vrot.lane.b32.xlu0 %v572, 12
      %v3817 = vpop.permute.xlu0 %3816
      %3818 = vrot.lane.b32.xlu0 %v573, 12
      %v3819 = vpop.permute.xlu0 %3818
      %3820 = vrot.lane.b32.xlu0 %v574, 12
      %v3821 = vpop.permute.xlu0 %3820
      %3822 = vrot.lane.b32.xlu0 %v575, 12
      %v3823 = vpop.permute.xlu0 %3822
      %3824 = vrot.lane.b32.xlu0 %v576, 12
      %v3825 = vpop.permute.xlu0 %3824
      %3826 = vrot.lane.b32.xlu0 %v577, 12
      %v3827 = vpop.permute.xlu0 %3826
      %3828 = vrot.lane.b32.xlu0 %v578, 12
      %v3829 = vpop.permute.xlu0 %3828
      %3830 = vrot.lane.b32.xlu0 %v579, 12
      %v3831 = vpop.permute.xlu0 %3830
      %3832 = vrot.lane.b32.xlu0 %v580, 12
      %v3833 = vpop.permute.xlu0 %3832
      %3834 = vrot.lane.b32.xlu0 %v581, 12
      %v3835 = vpop.permute.xlu0 %3834
      %3836 = vrot.lane.b32.xlu0 %v582, 12
      %v3837 = vpop.permute.xlu0 %3836
      %v3870 = vsel %vm183, %v422, %v3551
      %v3871 = vsel %vm183, %v423, %v3553
      %v3872 = vsel %vm183, %v424, %v3555
      %v3873 = vsel %vm183, %v425, %v3557
      %v3874 = vsel %vm183, %v426, %v3559
      %v3875 = vsel %vm183, %v427, %v3561
      %v3876 = vsel %vm183, %v428, %v3563
      %v3877 = vsel %vm183, %v429, %v3565
      %v3878 = vsel %vm183, %v430, %v3567
      %v3879 = vsel %vm183, %v431, %v3569
      %v3880 = vsel %vm183, %v432, %v3571
      %v3881 = vsel %vm183, %v433, %v3573
      %v3882 = vsel %vm183, %v434, %v3575
      %v3883 = vsel %vm183, %v435, %v3577
      %v3884 = vsel %vm183, %v436, %v3579
      %v3885 = vsel %vm183, %v437, %v3581
      %v3886 = vsel %vm183, %v438, %v3583
      %v3887 = vsel %vm183, %v439, %v3585
      %v3888 = vsel %vm183, %v440, %v3587
      %v3889 = vsel %vm183, %v441, %v3589
      %v3890 = vsel %vm183, %v442, %v3591
      %v3891 = vsel %vm183, %v443, %v3593
      %v3892 = vsel %vm183, %v444, %v3595
      %v3893 = vsel %vm183, %v445, %v3597
      %v3894 = vsel %vm183, %v446, %v3599
      %v3895 = vsel %vm183, %v447, %v3601
      %v3896 = vsel %vm183, %v448, %v3603
      %v3897 = vsel %vm183, %v449, %v3605
      %v3898 = vsel %vm183, %v450, %v3607
      %v3899 = vsel %vm183, %v451, %v3609
      %v3900 = vsel %vm183, %v452, %v3611
      %v3901 = vsel %vm183, %v453, %v3613
      %v3902 = vsel %vm1001, %v3870, %v3647
      %v3903 = vsel %vm1001, %v3871, %v3649
      %v3904 = vsel %vm1001, %v3872, %v3651
      %v3905 = vsel %vm1001, %v3873, %v3653
      %v3906 = vsel %vm1001, %v3874, %v3655
      %v3907 = vsel %vm1001, %v3875, %v3657
      %v3908 = vsel %vm1001, %v3876, %v3659
      %v3909 = vsel %vm1001, %v3877, %v3661
      %v3910 = vsel %vm1001, %v3878, %v3663
      %v3911 = vsel %vm1001, %v3879, %v3665
      %v3912 = vsel %vm1001, %v3880, %v3667
      %v3913 = vsel %vm1001, %v3881, %v3669
      %v3914 = vsel %vm1001, %v3882, %v3671
      %v3915 = vsel %vm1001, %v3883, %v3673
      %v3916 = vsel %vm1001, %v3884, %v3675
      %v3917 = vsel %vm1001, %v3885, %v3677
      %v3918 = vsel %vm1001, %v3886, %v3679
      %v3919 = vsel %vm1001, %v3887, %v3681
      %v3920 = vsel %vm1001, %v3888, %v3683
      %v3921 = vsel %vm1001, %v3889, %v3685
      %v3922 = vsel %vm1001, %v3890, %v3687
      %v3923 = vsel %vm1001, %v3891, %v3689
      %v3924 = vsel %vm1001, %v3892, %v3691
      %v3925 = vsel %vm1001, %v3893, %v3693
      %v3926 = vsel %vm1001, %v3894, %v3695
      %v3927 = vsel %vm1001, %v3895, %v3697
      %v3928 = vsel %vm1001, %v3896, %v3699
      %v3929 = vsel %vm1001, %v3897, %v3701
      %v3930 = vsel %vm1001, %v3898, %v3703
      %v3931 = vsel %vm1001, %v3899, %v3705
      %v3932 = vsel %vm1001, %v3900, %v3707
      %v3933 = vsel %vm1001, %v3901, %v3709
      %v3934 = vsel %vm1034, %v3902, %v3775
      %v3935 = vsel %vm1034, %v3903, %v3777
      %v3936 = vsel %vm1034, %v3904, %v3779
      %v3937 = vsel %vm1034, %v3905, %v3781
      %v3938 = vsel %vm1034, %v3906, %v3783
      %v3939 = vsel %vm1034, %v3907, %v3785
      %v3940 = vsel %vm1034, %v3908, %v3787
      %v3941 = vsel %vm1034, %v3909, %v3789
      %v3942 = vsel %vm1034, %v3910, %v3791
      %v3943 = vsel %vm1034, %v3911, %v3793
      %v3944 = vsel %vm1034, %v3912, %v3795
      %v3945 = vsel %vm1034, %v3913, %v3797
      %v3946 = vsel %vm1034, %v3914, %v3799
      %v3947 = vsel %vm1034, %v3915, %v3801
      %v3948 = vsel %vm1034, %v3916, %v3803
      %v3949 = vsel %vm1034, %v3917, %v3805
      %v3950 = vsel %vm1034, %v3918, %v3807
      %v3951 = vsel %vm1034, %v3919, %v3809
      %v3952 = vsel %vm1034, %v3920, %v3811
      %v3953 = vsel %vm1034, %v3921, %v3813
      %v3954 = vsel %vm1034, %v3922, %v3815
      %v3955 = vsel %vm1034, %v3923, %v3817
      %v3956 = vsel %vm1034, %v3924, %v3819
      %v3957 = vsel %vm1034, %v3925, %v3821
      %v3958 = vsel %vm1034, %v3926, %v3823
      %v3959 = vsel %vm1034, %v3927, %v3825
      %v3960 = vsel %vm1034, %v3928, %v3827
      %v3961 = vsel %vm1034, %v3929, %v3829
      %v3962 = vsel %vm1034, %v3930, %v3831
      %v3963 = vsel %vm1034, %v3931, %v3833
      %v3964 = vsel %vm1034, %v3932, %v3835
      %v3965 = vsel %vm1034, %v3933, %v3837
      %v3967 = vsel %vm1067, %v3934, 0
      %v3970 = vsel %vm1067, %v3935, 0
      %v3973 = vsel %vm1067, %v3936, 0
      %v3976 = vsel %vm1067, %v3937, 0
      %v3979 = vsel %vm1067, %v3938, 0
      %v3982 = vsel %vm1067, %v3939, 0
      %v3985 = vsel %vm1067, %v3940, 0
      %v3988 = vsel %vm1067, %v3941, 0
      %v3991 = vsel %vm1067, %v3942, 0
      %v3994 = vsel %vm1067, %v3943, 0
      %v3997 = vsel %vm1067, %v3944, 0
      %v4000 = vsel %vm1067, %v3945, 0
      %v4003 = vsel %vm1067, %v3946, 0
      %v4006 = vsel %vm1067, %v3947, 0
      %v4009 = vsel %vm1067, %v3948, 0
      %v4012 = vsel %vm1067, %v3949, 0
      %v4015 = vsel %vm1067, %v3950, 0
      %v4018 = vsel %vm1067, %v3951, 0
      %v4021 = vsel %vm1067, %v3952, 0
      %v4024 = vsel %vm1067, %v3953, 0
      %v4027 = vsel %vm1067, %v3954, 0
      %v4030 = vsel %vm1067, %v3955, 0
      %v4033 = vsel %vm1067, %v3956, 0
      %v4036 = vsel %vm1067, %v3957, 0
      %v4039 = vsel %vm1067, %v3958, 0
      %v4042 = vsel %vm1067, %v3959, 0
      %v4045 = vsel %vm1067, %v3960, 0
      %v4048 = vsel %vm1067, %v3961, 0
      %v4051 = vsel %vm1067, %v3962, 0
      %v4054 = vsel %vm1067, %v3963, 0
      %v4057 = vsel %vm1067, %v3964, 0
      %v4060 = vsel %vm1067, %v3965, 0
      %4062 = vmatprep.subr.mxu0 0.0
      %4063 = vmatpush1.msra.mxu0 %v3548
      %4064 = vmatprep.subr.mxu0 0.0
      %4065 = vmatpush1.msra.mxu0 %v3549
      %4066 = vmatprep.subr.mxu0 0.0
      %4067 = vmatpush1.msra.mxu0 0.0
      %4068 = vmatprep.subr.mxu0 0.0
      %4069 = vmatpush1.msra.mxu0 0.0
      %4070 = vmatprep.subr.mxu0 0.0
      %4071 = vmatpush1.msra.mxu0 0.0
      %4072 = vmatprep.subr.mxu0 0.0
      %4073 = vmatpush1.msra.mxu0 0.0
      %4074 = vmatprep.subr.mxu0 0.0
      %4075 = vmatpush1.msra.mxu0 0.0
      %4076 = vmatprep.subr.mxu0 0.0
      %4077 = vmatpush1.msra.mxu0 0.0
      %4078 = vmatprep.subr.mxu0 0.0
      %4079 = vmatpush1.msra.mxu0 0.0
      %4080 = vmatprep.subr.mxu0 0.0
      %4081 = vmatpush1.msra.mxu0 0.0
      %4082 = vmatprep.subr.mxu0 0.0
      %4083 = vmatpush1.msra.mxu0 0.0
      %4084 = vmatprep.subr.mxu0 0.0
      %4085 = vmatpush1.msra.mxu0 0.0
      %4086 = vmatprep.subr.mxu0 0.0
      %4087 = vmatpush1.msra.mxu0 0.0
      %4088 = vmatprep.subr.mxu0 0.0
      %4089 = vmatpush1.msra.mxu0 0.0
      %4090 = vmatprep.subr.mxu0 0.0
      %4091 = vmatpush1.msra.mxu0 0.0
      %4092 = vmatprep.subr.mxu0 0.0
      %4093 = vmatpush1.msra.mxu0 0.0
      %4094 = vmatprep.subr.mxu0 0.0
      %4095 = vmatpush1.msra.mxu0 0.0
      %4096 = vmatprep.subr.mxu0 0.0
      %4097 = vmatpush1.msra.mxu0 0.0
      %4098 = vmatprep.subr.mxu0 0.0
      %4099 = vmatpush1.msra.mxu0 0.0
      %4100 = vmatprep.subr.mxu0 0.0
      %4101 = vmatpush1.msra.mxu0 0.0
      %4102 = vmatprep.subr.mxu0 0.0
      %4103 = vmatpush1.msra.mxu0 0.0
      %4104 = vmatprep.subr.mxu0 0.0
      %4105 = vmatpush1.msra.mxu0 0.0
      %4106 = vmatprep.subr.mxu0 0.0
      %4107 = vmatpush1.msra.mxu0 0.0
      %4108 = vmatprep.subr.mxu0 0.0
      %4109 = vmatpush1.msra.mxu0 0.0
      %4110 = vmatprep.subr.mxu0 0.0
      %4111 = vmatpush1.msra.mxu0 0.0
      %4112 = vmatprep.subr.mxu0 0.0
      %4113 = vmatpush1.msra.mxu0 0.0
      %4114 = vmatprep.subr.mxu0 0.0
      %4115 = vmatpush1.msra.mxu0 0.0
      %4116 = vmatprep.subr.mxu0 0.0
      %4117 = vmatpush1.msra.mxu0 0.0
      %4118 = vmatprep.subr.mxu0 0.0
      %4119 = vmatpush1.msra.mxu0 0.0
      %4120 = vmatprep.subr.mxu0 0.0
      %4121 = vmatpush1.msra.mxu0 0.0
      %4122 = vmatprep.subr.mxu0 0.0
      %4123 = vmatpush1.msra.mxu0 0.0
      %4124 = vmatprep.subr.mxu0 0.0
      %4125 = vmatpush1.msra.mxu0 0.0
      %4126 = vmatprep.mubr.f32.mxu0 0.0
      %4127 = vmatmul.mubr.f32.gmra.mrb[0].mxu0 %v3967
      %v4128 = vpop.f32.mrb[0].mxu0
      %v4129 = vadd.f32 0.0, %v4128
      %v4130 = vpop.f32.mrb[0].mxu0
      %4131 = vmatprep.mubr.f32.mxu0 0.0
      %4132 = vmatmul.mubr.f32.gmra.mrb[0].mxu0 %v3970
      %v4133 = vpop.f32.mrb[0].mxu0
      %v4134 = vadd.f32 0.0, %v4133
      %v4135 = vpop.f32.mrb[0].mxu0
      %4136 = vmatprep.mubr.f32.mxu0 0.0
      %4137 = vmatmul.mubr.f32.gmra.mrb[0].mxu0 %v3973
      %v4138 = vpop.f32.mrb[0].mxu0
      %v4139 = vadd.f32 0.0, %v4138
      %v4140 = vpop.f32.mrb[0].mxu0
      %4141 = vmatprep.mubr.f32.mxu0 0.0
      %4142 = vmatmul.mubr.f32.gmra.mrb[0].mxu0 %v3976
      %v4143 = vpop.f32.mrb[0].mxu0
      %v4144 = vadd.f32 0.0, %v4143
      %v4145 = vpop.f32.mrb[0].mxu0
      %4146 = vmatprep.mubr.f32.mxu0 0.0
      %4147 = vmatmul.mubr.f32.gmra.mrb[0].mxu0 %v3979
      %v4148 = vpop.f32.mrb[0].mxu0
      %v4149 = vadd.f32 0.0, %v4148
      %v4150 = vpop.f32.mrb[0].mxu0
      %4151 = vmatprep.mubr.f32.mxu0 0.0
      %4152 = vmatmul.mubr.f32.gmra.mrb[0].mxu0 %v3982
      %v4153 = vpop.f32.mrb[0].mxu0
      %v4154 = vadd.f32 0.0, %v4153
      %v4155 = vpop.f32.mrb[0].mxu0
      %4156 = vmatprep.mubr.f32.mxu0 0.0
      %4157 = vmatmul.mubr.f32.gmra.mrb[0].mxu0 %v3985
      %v4158 = vpop.f32.mrb[0].mxu0
      %v4159 = vadd.f32 0.0, %v4158
      %v4160 = vpop.f32.mrb[0].mxu0
      %4161 = vmatprep.mubr.f32.mxu0 0.0
      %4162 = vmatmul.mubr.f32.gmra.mrb[0].mxu0 %v3988
      %v4163 = vpop.f32.mrb[0].mxu0
      %v4164 = vadd.f32 0.0, %v4163
      %v4165 = vpop.f32.mrb[0].mxu0
      %4166 = vmatprep.mubr.f32.mxu0 0.0
      %4167 = vmatmul.mubr.f32.gmra.mrb[0].mxu0 %v3991
      %v4168 = vpop.f32.mrb[0].mxu0
      %v4169 = vadd.f32 0.0, %v4168
      %v4170 = vpop.f32.mrb[0].mxu0
      %4171 = vmatprep.mubr.f32.mxu0 0.0
      %4172 = vmatmul.mubr.f32.gmra.mrb[0].mxu0 %v3994
      %v4173 = vpop.f32.mrb[0].mxu0
      %v4174 = vadd.f32 0.0, %v4173
      %v4175 = vpop.f32.mrb[0].mxu0
      %4176 = vmatprep.mubr.f32.mxu0 0.0
      %4177 = vmatmul.mubr.f32.gmra.mrb[0].mxu0 %v3997
      %v4178 = vpop.f32.mrb[0].mxu0
      %v4179 = vadd.f32 0.0, %v4178
      %v4180 = vpop.f32.mrb[0].mxu0
      %4181 = vmatprep.mubr.f32.mxu0 0.0
      %4182 = vmatmul.mubr.f32.gmra.mrb[0].mxu0 %v4000
      %v4183 = vpop.f32.mrb[0].mxu0
      %v4184 = vadd.f32 0.0, %v4183
      %v4185 = vpop.f32.mrb[0].mxu0
      %4186 = vmatprep.mubr.f32.mxu0 0.0
      %4187 = vmatmul.mubr.f32.gmra.mrb[0].mxu0 %v4003
      %v4188 = vpop.f32.mrb[0].mxu0
      %v4189 = vadd.f32 0.0, %v4188
      %v4190 = vpop.f32.mrb[0].mxu0
      %4191 = vmatprep.mubr.f32.mxu0 0.0
      %4192 = vmatmul.mubr.f32.gmra.mrb[0].mxu0 %v4006
      %v4193 = vpop.f32.mrb[0].mxu0
      %v4194 = vadd.f32 0.0, %v4193
      %v4195 = vpop.f32.mrb[0].mxu0
      %4196 = vmatprep.mubr.f32.mxu0 0.0
      %4197 = vmatmul.mubr.f32.gmra.mrb[0].mxu0 %v4009
      %v4198 = vpop.f32.mrb[0].mxu0
      %v4199 = vadd.f32 0.0, %v4198
      %v4200 = vpop.f32.mrb[0].mxu0
      %4201 = vmatprep.mubr.f32.mxu0 0.0
      %4202 = vmatmul.mubr.f32.gmra.mrb[0].mxu0 %v4012
      %v4203 = vpop.f32.mrb[0].mxu0
      %v4204 = vadd.f32 0.0, %v4203
      %v4205 = vpop.f32.mrb[0].mxu0
      %4206 = vmatprep.mubr.f32.mxu0 0.0
      %4207 = vmatmul.mubr.f32.gmra.mrb[0].mxu0 %v4015
      %v4208 = vpop.f32.mrb[0].mxu0
      %v4209 = vadd.f32 0.0, %v4208
      %v4210 = vpop.f32.mrb[0].mxu0
      %4211 = vmatprep.mubr.f32.mxu0 0.0
      %4212 = vmatmul.mubr.f32.gmra.mrb[0].mxu0 %v4018
      %v4213 = vpop.f32.mrb[0].mxu0
      %v4214 = vadd.f32 0.0, %v4213
      %v4215 = vpop.f32.mrb[0].mxu0
      %4216 = vmatprep.mubr.f32.mxu0 0.0
      %4217 = vmatmul.mubr.f32.gmra.mrb[0].mxu0 %v4021
      %v4218 = vpop.f32.mrb[0].mxu0
      %v4219 = vadd.f32 0.0, %v4218
      %v4220 = vpop.f32.mrb[0].mxu0
      %4221 = vmatprep.mubr.f32.mxu0 0.0
      %4222 = vmatmul.mubr.f32.gmra.mrb[0].mxu0 %v4024
      %v4223 = vpop.f32.mrb[0].mxu0
      %v4224 = vadd.f32 0.0, %v4223
      %v4225 = vpop.f32.mrb[0].mxu0
      %4226 = vmatprep.mubr.f32.mxu0 0.0
      %4227 = vmatmul.mubr.f32.gmra.mrb[0].mxu0 %v4027
      %v4228 = vpop.f32.mrb[0].mxu0
      %v4229 = vadd.f32 0.0, %v4228
      %v4230 = vpop.f32.mrb[0].mxu0
      %4231 = vmatprep.mubr.f32.mxu0 0.0
      %4232 = vmatmul.mubr.f32.gmra.mrb[0].mxu0 %v4030
      %v4233 = vpop.f32.mrb[0].mxu0
      %v4234 = vadd.f32 0.0, %v4233
      %v4235 = vpop.f32.mrb[0].mxu0
      %4236 = vmatprep.mubr.f32.mxu0 0.0
      %4237 = vmatmul.mubr.f32.gmra.mrb[0].mxu0 %v4033
      %v4238 = vpop.f32.mrb[0].mxu0
      %v4239 = vadd.f32 0.0, %v4238
      %v4240 = vpop.f32.mrb[0].mxu0
      %4241 = vmatprep.mubr.f32.mxu0 0.0
      %4242 = vmatmul.mubr.f32.gmra.mrb[0].mxu0 %v4036
      %v4243 = vpop.f32.mrb[0].mxu0
      %v4244 = vadd.f32 0.0, %v4243
      %v4245 = vpop.f32.mrb[0].mxu0
      %4246 = vmatprep.mubr.f32.mxu0 0.0
      %4247 = vmatmul.mubr.f32.gmra.mrb[0].mxu0 %v4039
      %v4248 = vpop.f32.mrb[0].mxu0
      %v4249 = vadd.f32 0.0, %v4248
      %v4250 = vpop.f32.mrb[0].mxu0
      %4251 = vmatprep.mubr.f32.mxu0 0.0
      %4252 = vmatmul.mubr.f32.gmra.mrb[0].mxu0 %v4042
      %v4253 = vpop.f32.mrb[0].mxu0
      %v4254 = vadd.f32 0.0, %v4253
      %v4255 = vpop.f32.mrb[0].mxu0
      %4256 = vmatprep.mubr.f32.mxu0 0.0
      %4257 = vmatmul.mubr.f32.gmra.mrb[0].mxu0 %v4045
      %v4258 = vpop.f32.mrb[0].mxu0
      %v4259 = vadd.f32 0.0, %v4258
      %v4260 = vpop.f32.mrb[0].mxu0
      %4261 = vmatprep.mubr.f32.mxu0 0.0
      %4262 = vmatmul.mubr.f32.gmra.mrb[0].mxu0 %v4048
      %v4263 = vpop.f32.mrb[0].mxu0
      %v4264 = vadd.f32 0.0, %v4263
      %v4265 = vpop.f32.mrb[0].mxu0
      %4266 = vmatprep.mubr.f32.mxu0 0.0
      %4267 = vmatmul.mubr.f32.gmra.mrb[0].mxu0 %v4051
      %v4268 = vpop.f32.mrb[0].mxu0
      %v4269 = vadd.f32 0.0, %v4268
      %v4270 = vpop.f32.mrb[0].mxu0
      %4271 = vmatprep.mubr.f32.mxu0 0.0
      %4272 = vmatmul.mubr.f32.gmra.mrb[0].mxu0 %v4054
      %v4273 = vpop.f32.mrb[0].mxu0
      %v4274 = vadd.f32 0.0, %v4273
      %v4275 = vpop.f32.mrb[0].mxu0
      %4276 = vmatprep.mubr.f32.mxu0 0.0
      %4277 = vmatmul.mubr.f32.gmra.mrb[0].mxu0 %v4057
      %v4278 = vpop.f32.mrb[0].mxu0
      %v4279 = vadd.f32 0.0, %v4278
      %v4280 = vpop.f32.mrb[0].mxu0
      %4281 = vmatprep.mubr.f32.mxu0 0.0
      %4282 = vmatmul.mubr.f32.gmra.mrb[0].mxu0 %v4060
      %v4283 = vpop.f32.mrb[0].mxu0
      %v4284 = vadd.f32 0.0, %v4283
      %v4285 = vpop.f32.mrb[0].mxu0
      %4286 = vdwg.mxu0
      %s4287 = scalar_lea.vmem [#allocation3], 768
      %4288 = vst.msk [vmem:[%s4287] sm:$0xff] %vm1001, %v4129
      %4289 = vst.msk [vmem:[%s4287 + $0x8] sm:$0xff] %vm1001, %v4134
      %4290 = vst.msk [vmem:[%s4287 + $0x10] sm:$0xff] %vm1001, %v4139
      %4291 = vst.msk [vmem:[%s4287 + $0x18] sm:$0xff] %vm1001, %v4144
      %4292 = vst.msk [vmem:[%s4287 + $0x20] sm:$0xff] %vm1001, %v4149
      %4293 = vst.msk [vmem:[%s4287 + $0x28] sm:$0xff] %vm1001, %v4154
      %4294 = vst.msk [vmem:[%s4287 + $0x30] sm:$0xff] %vm1001, %v4159
      %4295 = vst.msk [vmem:[%s4287 + $0x38] sm:$0xff] %vm1001, %v4164
      %4296 = vst.msk [vmem:[%s4287 + $0x40] sm:$0xff] %vm1001, %v4169
      %4297 = vst.msk [vmem:[%s4287 + $0x48] sm:$0xff] %vm1001, %v4174
      %4298 = vst.msk [vmem:[%s4287 + $0x50] sm:$0xff] %vm1001, %v4179
      %4299 = vst.msk [vmem:[%s4287 + $0x58] sm:$0xff] %vm1001, %v4184
      %4300 = vst.msk [vmem:[%s4287 + $0x60] sm:$0xff] %vm1001, %v4189
      %4301 = vst.msk [vmem:[%s4287 + $0x68] sm:$0xff] %vm1001, %v4194
      %4302 = vst.msk [vmem:[%s4287 + $0x70] sm:$0xff] %vm1001, %v4199
      %4303 = vst.msk [vmem:[%s4287 + $0x78] sm:$0xff] %vm1001, %v4204
      %4304 = vst.msk [vmem:[%s4287 + $0x80] sm:$0xff] %vm1001, %v4209
      %4305 = vst.msk [vmem:[%s4287 + $0x88] sm:$0xff] %vm1001, %v4214
      %4306 = vst.msk [vmem:[%s4287 + $0x90] sm:$0xff] %vm1001, %v4219
      %4307 = vst.msk [vmem:[%s4287 + $0x98] sm:$0xff] %vm1001, %v4224
      %4308 = vst.msk [vmem:[%s4287 + $0xa0] sm:$0xff] %vm1001, %v4229
      %4309 = vst.msk [vmem:[%s4287 + $0xa8] sm:$0xff] %vm1001, %v4234
      %4310 = vst.msk [vmem:[%s4287 + $0xb0] sm:$0xff] %vm1001, %v4239
      %4311 = vst.msk [vmem:[%s4287 + $0xb8] sm:$0xff] %vm1001, %v4244
      %4312 = vst.msk [vmem:[%s4287 + $0xc0] sm:$0xff] %vm1001, %v4249
      %4313 = vst.msk [vmem:[%s4287 + $0xc8] sm:$0xff] %vm1001, %v4254
      %4314 = vst.msk [vmem:[%s4287 + $0xd0] sm:$0xff] %vm1001, %v4259
      %4315 = vst.msk [vmem:[%s4287 + $0xd8] sm:$0xff] %vm1001, %v4264
      %4316 = vst.msk [vmem:[%s4287 + $0xe0] sm:$0xff] %vm1001, %v4269
      %4317 = vst.msk [vmem:[%s4287 + $0xe8] sm:$0xff] %vm1001, %v4274
      %4318 = vst.msk [vmem:[%s4287 + $0xf0] sm:$0xff] %vm1001, %v4279
      %4319 = vst.msk [vmem:[%s4287 + $0xf8] sm:$0xff] %vm1001, %v4284
      %v4320 = vsel %vm1001, %v4129, 0.0
      %v4321 = vsel %vm1001, %v4134, 0.0
      %v4322 = vadd.f32 %v4320, %v4321
      %v4323 = vsel %vm1001, %v4139, 0.0
      %v4324 = vadd.f32 %v4322, %v4323
      %v4325 = vsel %vm1001, %v4144, 0.0
      %v4326 = vadd.f32 %v4324, %v4325
      %v4327 = vsel %vm1001, %v4149, 0.0
      %v4328 = vadd.f32 %v4326, %v4327
      %v4329 = vsel %vm1001, %v4154, 0.0
      %v4330 = vadd.f32 %v4328, %v4329
      %v4331 = vsel %vm1001, %v4159, 0.0
      %v4332 = vadd.f32 %v4330, %v4331
      %v4333 = vsel %vm1001, %v4164, 0.0
      %v4334 = vadd.f32 %v4332, %v4333
      %v4335 = vsel %vm1001, %v4169, 0.0
      %v4336 = vadd.f32 %v4334, %v4335
      %v4337 = vsel %vm1001, %v4174, 0.0
      %v4338 = vadd.f32 %v4336, %v4337
      %v4339 = vsel %vm1001, %v4179, 0.0
      %v4340 = vadd.f32 %v4338, %v4339
      %v4341 = vsel %vm1001, %v4184, 0.0
      %v4342 = vadd.f32 %v4340, %v4341
      %v4343 = vsel %vm1001, %v4189, 0.0
      %v4344 = vadd.f32 %v4342, %v4343
      %v4345 = vsel %vm1001, %v4194, 0.0
      %v4346 = vadd.f32 %v4344, %v4345
      %v4347 = vsel %vm1001, %v4199, 0.0
      %v4348 = vadd.f32 %v4346, %v4347
      %v4349 = vsel %vm1001, %v4204, 0.0
      %v4350 = vadd.f32 %v4348, %v4349
      %v4351 = vsel %vm1001, %v4209, 0.0
      %v4352 = vadd.f32 %v4350, %v4351
      %v4353 = vsel %vm1001, %v4214, 0.0
      %v4354 = vadd.f32 %v4352, %v4353
      %v4355 = vsel %vm1001, %v4219, 0.0
      %v4356 = vadd.f32 %v4354, %v4355
      %v4357 = vsel %vm1001, %v4224, 0.0
      %v4358 = vadd.f32 %v4356, %v4357
      %v4359 = vsel %vm1001, %v4229, 0.0
      %v4360 = vadd.f32 %v4358, %v4359
      %v4361 = vsel %vm1001, %v4234, 0.0
      %v4362 = vadd.f32 %v4360, %v4361
      %v4363 = vsel %vm1001, %v4239, 0.0
      %v4364 = vadd.f32 %v4362, %v4363
      %v4365 = vsel %vm1001, %v4244, 0.0
      %v4366 = vadd.f32 %v4364, %v4365
      %v4367 = vsel %vm1001, %v4249, 0.0
      %v4368 = vadd.f32 %v4366, %v4367
      %v4369 = vsel %vm1001, %v4254, 0.0
      %v4370 = vadd.f32 %v4368, %v4369
      %v4371 = vsel %vm1001, %v4259, 0.0
      %v4372 = vadd.f32 %v4370, %v4371
      %v4373 = vsel %vm1001, %v4264, 0.0
      %v4374 = vadd.f32 %v4372, %v4373
      %v4375 = vsel %vm1001, %v4269, 0.0
      %v4376 = vadd.f32 %v4374, %v4375
      %v4377 = vsel %vm1001, %v4274, 0.0
      %v4378 = vadd.f32 %v4376, %v4377
      %v4379 = vsel %vm1001, %v4279, 0.0
      %v4380 = vadd.f32 %v4378, %v4379
      %v4381 = vsel %vm1001, %v4284, 0.0
      %v4382 = vadd.f32 %v4380, %v4381
      %v4383 = vrot.slane %v4382, 4
      %v4384 = vadd.f32 %v4382, %v4383
      %v4385 = vrot.slane %v4384, 2
      %v4386 = vadd.f32 %v4384, %v4385
      %v4387 = vrot.slane %v4386, 1
      %v4388 = vadd.f32 %v4386, %v4387
      %v4389 = vadd.f32 %v3444, %v4388
      %v4390 = vmul.f32 %v4129, %v4129
      %v4391 = vmul.f32 %v4134, %v4134
      %v4392 = vmul.f32 %v4139, %v4139
      %v4393 = vmul.f32 %v4144, %v4144
      %v4394 = vmul.f32 %v4149, %v4149
      %v4395 = vmul.f32 %v4154, %v4154
      %v4396 = vmul.f32 %v4159, %v4159
      %v4397 = vmul.f32 %v4164, %v4164
      %v4398 = vmul.f32 %v4169, %v4169
      %v4399 = vmul.f32 %v4174, %v4174
      %v4400 = vmul.f32 %v4179, %v4179
      %v4401 = vmul.f32 %v4184, %v4184
      %v4402 = vmul.f32 %v4189, %v4189
      %v4403 = vmul.f32 %v4194, %v4194
      %v4404 = vmul.f32 %v4199, %v4199
      %v4405 = vmul.f32 %v4204, %v4204
      %v4406 = vmul.f32 %v4209, %v4209
      %v4407 = vmul.f32 %v4214, %v4214
      %v4408 = vmul.f32 %v4219, %v4219
      %v4409 = vmul.f32 %v4224, %v4224
      %v4410 = vmul.f32 %v4229, %v4229
      %v4411 = vmul.f32 %v4234, %v4234
      %v4412 = vmul.f32 %v4239, %v4239
      %v4413 = vmul.f32 %v4244, %v4244
      %v4414 = vmul.f32 %v4249, %v4249
      %v4415 = vmul.f32 %v4254, %v4254
      %v4416 = vmul.f32 %v4259, %v4259
      %v4417 = vmul.f32 %v4264, %v4264
      %v4418 = vmul.f32 %v4269, %v4269
      %v4419 = vmul.f32 %v4274, %v4274
      %v4420 = vmul.f32 %v4279, %v4279
      %v4421 = vmul.f32 %v4284, %v4284
      %v4422 = vsel %vm1001, %v4390, 0.0
      %v4423 = vsel %vm1001, %v4391, 0.0
      %v4424 = vadd.f32 %v4422, %v4423
      %v4425 = vsel %vm1001, %v4392, 0.0
      %v4426 = vadd.f32 %v4424, %v4425
      %v4427 = vsel %vm1001, %v4393, 0.0
      %v4428 = vadd.f32 %v4426, %v4427
      %v4429 = vsel %vm1001, %v4394, 0.0
      %v4430 = vadd.f32 %v4428, %v4429
      %v4431 = vsel %vm1001, %v4395, 0.0
      %v4432 = vadd.f32 %v4430, %v4431
      %v4433 = vsel %vm1001, %v4396, 0.0
      %v4434 = vadd.f32 %v4432, %v4433
      %v4435 = vsel %vm1001, %v4397, 0.0
      %v4436 = vadd.f32 %v4434, %v4435
      %v4437 = vsel %vm1001, %v4398, 0.0
      %v4438 = vadd.f32 %v4436, %v4437
      %v4439 = vsel %vm1001, %v4399, 0.0
      %v4440 = vadd.f32 %v4438, %v4439
      %v4441 = vsel %vm1001, %v4400, 0.0
      %v4442 = vadd.f32 %v4440, %v4441
      %v4443 = vsel %vm1001, %v4401, 0.0
      %v4444 = vadd.f32 %v4442, %v4443
      %v4445 = vsel %vm1001, %v4402, 0.0
      %v4446 = vadd.f32 %v4444, %v4445
      %v4447 = vsel %vm1001, %v4403, 0.0
      %v4448 = vadd.f32 %v4446, %v4447
      %v4449 = vsel %vm1001, %v4404, 0.0
      %v4450 = vadd.f32 %v4448, %v4449
      %v4451 = vsel %vm1001, %v4405, 0.0
      %v4452 = vadd.f32 %v4450, %v4451
      %v4453 = vsel %vm1001, %v4406, 0.0
      %v4454 = vadd.f32 %v4452, %v4453
      %v4455 = vsel %vm1001, %v4407, 0.0
      %v4456 = vadd.f32 %v4454, %v4455
      %v4457 = vsel %vm1001, %v4408, 0.0
      %v4458 = vadd.f32 %v4456, %v4457
      %v4459 = vsel %vm1001, %v4409, 0.0
      %v4460 = vadd.f32 %v4458, %v4459
      %v4461 = vsel %vm1001, %v4410, 0.0
      %v4462 = vadd.f32 %v4460, %v4461
      %v4463 = vsel %vm1001, %v4411, 0.0
      %v4464 = vadd.f32 %v4462, %v4463
      %v4465 = vsel %vm1001, %v4412, 0.0
      %v4466 = vadd.f32 %v4464, %v4465
      %v4467 = vsel %vm1001, %v4413, 0.0
      %v4468 = vadd.f32 %v4466, %v4467
      %v4469 = vsel %vm1001, %v4414, 0.0
      %v4470 = vadd.f32 %v4468, %v4469
      %v4471 = vsel %vm1001, %v4415, 0.0
      %v4472 = vadd.f32 %v4470, %v4471
      %v4473 = vsel %vm1001, %v4416, 0.0
      %v4474 = vadd.f32 %v4472, %v4473
      %v4475 = vsel %vm1001, %v4417, 0.0
      %v4476 = vadd.f32 %v4474, %v4475
      %v4477 = vsel %vm1001, %v4418, 0.0
      %v4478 = vadd.f32 %v4476, %v4477
      %v4479 = vsel %vm1001, %v4419, 0.0
      %v4480 = vadd.f32 %v4478, %v4479
      %v4481 = vsel %vm1001, %v4420, 0.0
      %v4482 = vadd.f32 %v4480, %v4481
      %v4483 = vsel %vm1001, %v4421, 0.0
      %v4484 = vadd.f32 %v4482, %v4483
      %v4485 = vrot.slane %v4484, 4
      %v4486 = vadd.f32 %v4484, %v4485
      %v4487 = vrot.slane %v4486, 2
      %v4488 = vadd.f32 %v4486, %v4487
      %v4489 = vrot.slane %v4488, 1
      %v4490 = vadd.f32 %v4488, %v4489
      %v4491 = vadd.f32 %v3546, %v4490
      %v4492 = vmul.f32 %v4389, 0.0009765625
      %v4493 = vmul.f32 %v4491, 0.0009765625
      %v4494 = vmul.f32 %v4492, %v4492
      %v4495 = vsub.f32 %v4493, %v4494
      %v4496 = vmax.f32 %v4495, 0.0
      %v4497 = vadd.f32 %v4496, 1e-05
      %v4498 = vrsqrt.pop %v4497
      %v4499 = vld [vmem:[#allocation3] sm:$0xff]
      %v4500 = vld [vmem:[#allocation3 + $0x8] sm:$0xff]
      %v4501 = vld [vmem:[#allocation3 + $0x10] sm:$0xff]
      %v4502 = vld [vmem:[#allocation3 + $0x18] sm:$0xff]
      %v4503 = vld [vmem:[#allocation3 + $0x20] sm:$0xff]
      %v4504 = vld [vmem:[#allocation3 + $0x28] sm:$0xff]
      %v4505 = vld [vmem:[#allocation3 + $0x30] sm:$0xff]
      %v4506 = vld [vmem:[#allocation3 + $0x38] sm:$0xff]
      %v4507 = vld [vmem:[#allocation3 + $0x40] sm:$0xff]
      %v4508 = vld [vmem:[#allocation3 + $0x48] sm:$0xff]
      %v4509 = vld [vmem:[#allocation3 + $0x50] sm:$0xff]
      %v4510 = vld [vmem:[#allocation3 + $0x58] sm:$0xff]
      %v4511 = vld [vmem:[#allocation3 + $0x60] sm:$0xff]
      %v4512 = vld [vmem:[#allocation3 + $0x68] sm:$0xff]
      %v4513 = vld [vmem:[#allocation3 + $0x70] sm:$0xff]
      %v4514 = vld [vmem:[#allocation3 + $0x78] sm:$0xff]
      %v4515 = vld [vmem:[#allocation3 + $0x80] sm:$0xff]
      %v4516 = vld [vmem:[#allocation3 + $0x88] sm:$0xff]
      %v4517 = vld [vmem:[#allocation3 + $0x90] sm:$0xff]
      %v4518 = vld [vmem:[#allocation3 + $0x98] sm:$0xff]
      %v4519 = vld [vmem:[#allocation3 + $0xa0] sm:$0xff]
      %v4520 = vld [vmem:[#allocation3 + $0xa8] sm:$0xff]
      %v4521 = vld [vmem:[#allocation3 + $0xb0] sm:$0xff]
      %v4522 = vld [vmem:[#allocation3 + $0xb8] sm:$0xff]
      %v4523 = vld [vmem:[#allocation3 + $0xc0] sm:$0xff]
      %v4524 = vld [vmem:[#allocation3 + $0xc8] sm:$0xff]
      %v4525 = vld [vmem:[#allocation3 + $0xd0] sm:$0xff]
      %v4526 = vld [vmem:[#allocation3 + $0xd8] sm:$0xff]
      %v4527 = vld [vmem:[#allocation3 + $0xe0] sm:$0xff]
      %v4528 = vld [vmem:[#allocation3 + $0xe8] sm:$0xff]
      %v4529 = vld [vmem:[#allocation3 + $0xf0] sm:$0xff]
      %v4530 = vld [vmem:[#allocation3 + $0xf8] sm:$0xff]
      %v4531 = vsub.f32 %v4499, %v4492
      %v4532 = vsub.f32 %v4500, %v4492
      %v4533 = vsub.f32 %v4501, %v4492
      %v4534 = vsub.f32 %v4502, %v4492
      %v4535 = vsub.f32 %v4503, %v4492
      %v4536 = vsub.f32 %v4504, %v4492
      %v4537 = vsub.f32 %v4505, %v4492
      %v4538 = vsub.f32 %v4506, %v4492
      %v4539 = vsub.f32 %v4507, %v4492
      %v4540 = vsub.f32 %v4508, %v4492
      %v4541 = vsub.f32 %v4509, %v4492
      %v4542 = vsub.f32 %v4510, %v4492
      %v4543 = vsub.f32 %v4511, %v4492
      %v4544 = vsub.f32 %v4512, %v4492
      %v4545 = vsub.f32 %v4513, %v4492
      %v4546 = vsub.f32 %v4514, %v4492
      %v4547 = vsub.f32 %v4515, %v4492
      %v4548 = vsub.f32 %v4516, %v4492
      %v4549 = vsub.f32 %v4517, %v4492
      %v4550 = vsub.f32 %v4518, %v4492
      %v4551 = vsub.f32 %v4519, %v4492
      %v4552 = vsub.f32 %v4520, %v4492
      %v4553 = vsub.f32 %v4521, %v4492
      %v4554 = vsub.f32 %v4522, %v4492
      %v4555 = vsub.f32 %v4523, %v4492
      %v4556 = vsub.f32 %v4524, %v4492
      %v4557 = vsub.f32 %v4525, %v4492
      %v4558 = vsub.f32 %v4526, %v4492
      %v4559 = vsub.f32 %v4527, %v4492
      %v4560 = vsub.f32 %v4528, %v4492
      %v4561 = vsub.f32 %v4529, %v4492
      %v4562 = vsub.f32 %v4530, %v4492
      %v4563 = vmul.f32 %v4531, %v4498
      %v4564 = vmul.f32 %v4532, %v4498
      %v4565 = vmul.f32 %v4533, %v4498
      %v4566 = vmul.f32 %v4534, %v4498
      %v4567 = vmul.f32 %v4535, %v4498
      %v4568 = vmul.f32 %v4536, %v4498
      %v4569 = vmul.f32 %v4537, %v4498
      %v4570 = vmul.f32 %v4538, %v4498
      %v4571 = vmul.f32 %v4539, %v4498
      %v4572 = vmul.f32 %v4540, %v4498
      %v4573 = vmul.f32 %v4541, %v4498
      %v4574 = vmul.f32 %v4542, %v4498
      %v4575 = vmul.f32 %v4543, %v4498
      %v4576 = vmul.f32 %v4544, %v4498
      %v4577 = vmul.f32 %v4545, %v4498
      %v4578 = vmul.f32 %v4546, %v4498
      %v4579 = vmul.f32 %v4547, %v4498
      %v4580 = vmul.f32 %v4548, %v4498
      %v4581 = vmul.f32 %v4549, %v4498
      %v4582 = vmul.f32 %v4550, %v4498
      %v4583 = vmul.f32 %v4551, %v4498
      %v4584 = vmul.f32 %v4552, %v4498
      %v4585 = vmul.f32 %v4553, %v4498
      %v4586 = vmul.f32 %v4554, %v4498
      %v4587 = vmul.f32 %v4555, %v4498
      %v4588 = vmul.f32 %v4556, %v4498
      %v4589 = vmul.f32 %v4557, %v4498
      %v4590 = vmul.f32 %v4558, %v4498
      %v4591 = vmul.f32 %v4559, %v4498
      %v4592 = vmul.f32 %v4560, %v4498
      %v4593 = vmul.f32 %v4561, %v4498
      %v4594 = vmul.f32 %v4562, %v4498
      %v4595 = vmax.f32 %v4563, 0.0
      %v4596 = vmax.f32 %v4564, 0.0
      %v4597 = vmax.f32 %v4565, 0.0
      %v4598 = vmax.f32 %v4566, 0.0
      %v4599 = vmax.f32 %v4567, 0.0
      %v4600 = vmax.f32 %v4568, 0.0
      %v4601 = vmax.f32 %v4569, 0.0
      %v4602 = vmax.f32 %v4570, 0.0
      %v4603 = vmax.f32 %v4571, 0.0
      %v4604 = vmax.f32 %v4572, 0.0
      %v4605 = vmax.f32 %v4573, 0.0
      %v4606 = vmax.f32 %v4574, 0.0
      %v4607 = vmax.f32 %v4575, 0.0
      %v4608 = vmax.f32 %v4576, 0.0
      %v4609 = vmax.f32 %v4577, 0.0
      %v4610 = vmax.f32 %v4578, 0.0
      %v4611 = vmax.f32 %v4579, 0.0
      %v4612 = vmax.f32 %v4580, 0.0
      %v4613 = vmax.f32 %v4581, 0.0
      %v4614 = vmax.f32 %v4582, 0.0
      %v4615 = vmax.f32 %v4583, 0.0
      %v4616 = vmax.f32 %v4584, 0.0
      %v4617 = vmax.f32 %v4585, 0.0
      %v4618 = vmax.f32 %v4586, 0.0
      %v4619 = vmax.f32 %v4587, 0.0
      %v4620 = vmax.f32 %v4588, 0.0
      %v4621 = vmax.f32 %v4589, 0.0
      %v4622 = vmax.f32 %v4590, 0.0
      %v4623 = vmax.f32 %v4591, 0.0
      %v4624 = vmax.f32 %v4592, 0.0
      %v4625 = vmax.f32 %v4593, 0.0
      %v4626 = vmax.f32 %v4594, 0.0
      %v4627 = vld [vmem:[%s2365] sm:$0xff]
      %v4628 = vld [vmem:[%s2365 + $0x8] sm:$0xff]
      %v4629 = vld [vmem:[%s2365 + $0x10] sm:$0xff]
      %v4630 = vld [vmem:[%s2365 + $0x18] sm:$0xff]
      %v4631 = vld [vmem:[%s2365 + $0x20] sm:$0xff]
      %v4632 = vld [vmem:[%s2365 + $0x28] sm:$0xff]
      %v4633 = vld [vmem:[%s2365 + $0x30] sm:$0xff]
      %v4634 = vld [vmem:[%s2365 + $0x38] sm:$0xff]
      %v4635 = vld [vmem:[%s2365 + $0x40] sm:$0xff]
      %v4636 = vld [vmem:[%s2365 + $0x48] sm:$0xff]
      %v4637 = vld [vmem:[%s2365 + $0x50] sm:$0xff]
      %v4638 = vld [vmem:[%s2365 + $0x58] sm:$0xff]
      %v4639 = vld [vmem:[%s2365 + $0x60] sm:$0xff]
      %v4640 = vld [vmem:[%s2365 + $0x68] sm:$0xff]
      %v4641 = vld [vmem:[%s2365 + $0x70] sm:$0xff]
      %v4642 = vld [vmem:[%s2365 + $0x78] sm:$0xff]
      %v4643 = vld [vmem:[%s2365 + $0x80] sm:$0xff]
      %v4644 = vld [vmem:[%s2365 + $0x88] sm:$0xff]
      %v4645 = vld [vmem:[%s2365 + $0x90] sm:$0xff]
      %v4646 = vld [vmem:[%s2365 + $0x98] sm:$0xff]
      %v4647 = vld [vmem:[%s2365 + $0xa0] sm:$0xff]
      %v4648 = vld [vmem:[%s2365 + $0xa8] sm:$0xff]
      %v4649 = vld [vmem:[%s2365 + $0xb0] sm:$0xff]
      %v4650 = vld [vmem:[%s2365 + $0xb8] sm:$0xff]
      %v4651 = vld [vmem:[%s2365 + $0xc0] sm:$0xff]
      %v4652 = vld [vmem:[%s2365 + $0xc8] sm:$0xff]
      %v4653 = vld [vmem:[%s2365 + $0xd0] sm:$0xff]
      %v4654 = vld [vmem:[%s2365 + $0xd8] sm:$0xff]
      %v4655 = vld [vmem:[%s2365 + $0xe0] sm:$0xff]
      %v4656 = vld [vmem:[%s2365 + $0xe8] sm:$0xff]
      %v4657 = vld [vmem:[%s2365 + $0xf0] sm:$0xff]
      %v4658 = vld [vmem:[%s2365 + $0xf8] sm:$0xff]
      %v4659 = vsub.f32 %v4627, %v4492
      %v4660 = vsub.f32 %v4628, %v4492
      %v4661 = vsub.f32 %v4629, %v4492
      %v4662 = vsub.f32 %v4630, %v4492
      %v4663 = vsub.f32 %v4631, %v4492
      %v4664 = vsub.f32 %v4632, %v4492
      %v4665 = vsub.f32 %v4633, %v4492
      %v4666 = vsub.f32 %v4634, %v4492
      %v4667 = vsub.f32 %v4635, %v4492
      %v4668 = vsub.f32 %v4636, %v4492
      %v4669 = vsub.f32 %v4637, %v4492
      %v4670 = vsub.f32 %v4638, %v4492
      %v4671 = vsub.f32 %v4639, %v4492
      %v4672 = vsub.f32 %v4640, %v4492
      %v4673 = vsub.f32 %v4641, %v4492
      %v4674 = vsub.f32 %v4642, %v4492
      %v4675 = vsub.f32 %v4643, %v4492
      %v4676 = vsub.f32 %v4644, %v4492
      %v4677 = vsub.f32 %v4645, %v4492
      %v4678 = vsub.f32 %v4646, %v4492
      %v4679 = vsub.f32 %v4647, %v4492
      %v4680 = vsub.f32 %v4648, %v4492
      %v4681 = vsub.f32 %v4649, %v4492
      %v4682 = vsub.f32 %v4650, %v4492
      %v4683 = vsub.f32 %v4651, %v4492
      %v4684 = vsub.f32 %v4652, %v4492
      %v4685 = vsub.f32 %v4653, %v4492
      %v4686 = vsub.f32 %v4654, %v4492
      %v4687 = vsub.f32 %v4655, %v4492
      %v4688 = vsub.f32 %v4656, %v4492
      %v4689 = vsub.f32 %v4657, %v4492
      %v4690 = vsub.f32 %v4658, %v4492
      %v4691 = vmul.f32 %v4659, %v4498
      %v4692 = vmul.f32 %v4660, %v4498
      %v4693 = vmul.f32 %v4661, %v4498
      %v4694 = vmul.f32 %v4662, %v4498
      %v4695 = vmul.f32 %v4663, %v4498
      %v4696 = vmul.f32 %v4664, %v4498
      %v4697 = vmul.f32 %v4665, %v4498
      %v4698 = vmul.f32 %v4666, %v4498
      %v4699 = vmul.f32 %v4667, %v4498
      %v4700 = vmul.f32 %v4668, %v4498
      %v4701 = vmul.f32 %v4669, %v4498
      %v4702 = vmul.f32 %v4670, %v4498
      %v4703 = vmul.f32 %v4671, %v4498
      %v4704 = vmul.f32 %v4672, %v4498
      %v4705 = vmul.f32 %v4673, %v4498
      %v4706 = vmul.f32 %v4674, %v4498
      %v4707 = vmul.f32 %v4675, %v4498
      %v4708 = vmul.f32 %v4676, %v4498
      %v4709 = vmul.f32 %v4677, %v4498
      %v4710 = vmul.f32 %v4678, %v4498
      %v4711 = vmul.f32 %v4679, %v4498
      %v4712 = vmul.f32 %v4680, %v4498
      %v4713 = vmul.f32 %v4681, %v4498
      %v4714 = vmul.f32 %v4682, %v4498
      %v4715 = vmul.f32 %v4683, %v4498
      %v4716 = vmul.f32 %v4684, %v4498
      %v4717 = vmul.f32 %v4685, %v4498
      %v4718 = vmul.f32 %v4686, %v4498
      %v4719 = vmul.f32 %v4687, %v4498
      %v4720 = vmul.f32 %v4688, %v4498
      %v4721 = vmul.f32 %v4689, %v4498
      %v4722 = vmul.f32 %v4690, %v4498
      %v4723 = vmax.f32 %v4691, 0.0
      %v4724 = vmax.f32 %v4692, 0.0
      %v4725 = vmax.f32 %v4693, 0.0
      %v4726 = vmax.f32 %v4694, 0.0
      %v4727 = vmax.f32 %v4695, 0.0
      %v4728 = vmax.f32 %v4696, 0.0
      %v4729 = vmax.f32 %v4697, 0.0
      %v4730 = vmax.f32 %v4698, 0.0
      %v4731 = vmax.f32 %v4699, 0.0
      %v4732 = vmax.f32 %v4700, 0.0
      %v4733 = vmax.f32 %v4701, 0.0
      %v4734 = vmax.f32 %v4702, 0.0
      %v4735 = vmax.f32 %v4703, 0.0
      %v4736 = vmax.f32 %v4704, 0.0
      %v4737 = vmax.f32 %v4705, 0.0
      %v4738 = vmax.f32 %v4706, 0.0
      %v4739 = vmax.f32 %v4707, 0.0
      %v4740 = vmax.f32 %v4708, 0.0
      %v4741 = vmax.f32 %v4709, 0.0
      %v4742 = vmax.f32 %v4710, 0.0
      %v4743 = vmax.f32 %v4711, 0.0
      %v4744 = vmax.f32 %v4712, 0.0
      %v4745 = vmax.f32 %v4713, 0.0
      %v4746 = vmax.f32 %v4714, 0.0
      %v4747 = vmax.f32 %v4715, 0.0
      %v4748 = vmax.f32 %v4716, 0.0
      %v4749 = vmax.f32 %v4717, 0.0
      %v4750 = vmax.f32 %v4718, 0.0
      %v4751 = vmax.f32 %v4719, 0.0
      %v4752 = vmax.f32 %v4720, 0.0
      %v4753 = vmax.f32 %v4721, 0.0
      %v4754 = vmax.f32 %v4722, 0.0
      %v4755 = vld [vmem:[%s3342] sm:$0xff]
      %v4756 = vld [vmem:[%s3342 + $0x8] sm:$0xff]
      %v4757 = vld [vmem:[%s3342 + $0x10] sm:$0xff]
      %v4758 = vld [vmem:[%s3342 + $0x18] sm:$0xff]
      %v4759 = vld [vmem:[%s3342 + $0x20] sm:$0xff]
      %v4760 = vld [vmem:[%s3342 + $0x28] sm:$0xff]
      %v4761 = vld [vmem:[%s3342 + $0x30] sm:$0xff]
      %v4762 = vld [vmem:[%s3342 + $0x38] sm:$0xff]
      %v4763 = vld [vmem:[%s3342 + $0x40] sm:$0xff]
      %v4764 = vld [vmem:[%s3342 + $0x48] sm:$0xff]
      %v4765 = vld [vmem:[%s3342 + $0x50] sm:$0xff]
      %v4766 = vld [vmem:[%s3342 + $0x58] sm:$0xff]
      %v4767 = vld [vmem:[%s3342 + $0x60] sm:$0xff]
      %v4768 = vld [vmem:[%s3342 + $0x68] sm:$0xff]
      %v4769 = vld [vmem:[%s3342 + $0x70] sm:$0xff]
      %v4770 = vld [vmem:[%s3342 + $0x78] sm:$0xff]
      %v4771 = vld [vmem:[%s3342 + $0x80] sm:$0xff]
      %v4772 = vld [vmem:[%s3342 + $0x88] sm:$0xff]
      %v4773 = vld [vmem:[%s3342 + $0x90] sm:$0xff]
      %v4774 = vld [vmem:[%s3342 + $0x98] sm:$0xff]
      %v4775 = vld [vmem:[%s3342 + $0xa0] sm:$0xff]
      %v4776 = vld [vmem:[%s3342 + $0xa8] sm:$0xff]
      %v4777 = vld [vmem:[%s3342 + $0xb0] sm:$0xff]
      %v4778 = vld [vmem:[%s3342 + $0xb8] sm:$0xff]
      %v4779 = vld [vmem:[%s3342 + $0xc0] sm:$0xff]
      %v4780 = vld [vmem:[%s3342 + $0xc8] sm:$0xff]
      %v4781 = vld [vmem:[%s3342 + $0xd0] sm:$0xff]
      %v4782 = vld [vmem:[%s3342 + $0xd8] sm:$0xff]
      %v4783 = vld [vmem:[%s3342 + $0xe0] sm:$0xff]
      %v4784 = vld [vmem:[%s3342 + $0xe8] sm:$0xff]
      %v4785 = vld [vmem:[%s3342 + $0xf0] sm:$0xff]
      %v4786 = vld [vmem:[%s3342 + $0xf8] sm:$0xff]
      %v4787 = vsub.f32 %v4755, %v4492
      %v4788 = vsub.f32 %v4756, %v4492
      %v4789 = vsub.f32 %v4757, %v4492
      %v4790 = vsub.f32 %v4758, %v4492
      %v4791 = vsub.f32 %v4759, %v4492
      %v4792 = vsub.f32 %v4760, %v4492
      %v4793 = vsub.f32 %v4761, %v4492
      %v4794 = vsub.f32 %v4762, %v4492
      %v4795 = vsub.f32 %v4763, %v4492
      %v4796 = vsub.f32 %v4764, %v4492
      %v4797 = vsub.f32 %v4765, %v4492
      %v4798 = vsub.f32 %v4766, %v4492
      %v4799 = vsub.f32 %v4767, %v4492
      %v4800 = vsub.f32 %v4768, %v4492
      %v4801 = vsub.f32 %v4769, %v4492
      %v4802 = vsub.f32 %v4770, %v4492
      %v4803 = vsub.f32 %v4771, %v4492
      %v4804 = vsub.f32 %v4772, %v4492
      %v4805 = vsub.f32 %v4773, %v4492
      %v4806 = vsub.f32 %v4774, %v4492
      %v4807 = vsub.f32 %v4775, %v4492
      %v4808 = vsub.f32 %v4776, %v4492
      %v4809 = vsub.f32 %v4777, %v4492
      %v4810 = vsub.f32 %v4778, %v4492
      %v4811 = vsub.f32 %v4779, %v4492
      %v4812 = vsub.f32 %v4780, %v4492
      %v4813 = vsub.f32 %v4781, %v4492
      %v4814 = vsub.f32 %v4782, %v4492
      %v4815 = vsub.f32 %v4783, %v4492
      %v4816 = vsub.f32 %v4784, %v4492
      %v4817 = vsub.f32 %v4785, %v4492
      %v4818 = vsub.f32 %v4786, %v4492
      %v4819 = vmul.f32 %v4787, %v4498
      %v4820 = vmul.f32 %v4788, %v4498
      %v4821 = vmul.f32 %v4789, %v4498
      %v4822 = vmul.f32 %v4790, %v4498
      %v4823 = vmul.f32 %v4791, %v4498
      %v4824 = vmul.f32 %v4792, %v4498
      %v4825 = vmul.f32 %v4793, %v4498
      %v4826 = vmul.f32 %v4794, %v4498
      %v4827 = vmul.f32 %v4795, %v4498
      %v4828 = vmul.f32 %v4796, %v4498
      %v4829 = vmul.f32 %v4797, %v4498
      %v4830 = vmul.f32 %v4798, %v4498
      %v4831 = vmul.f32 %v4799, %v4498
      %v4832 = vmul.f32 %v4800, %v4498
      %v4833 = vmul.f32 %v4801, %v4498
      %v4834 = vmul.f32 %v4802, %v4498
      %v4835 = vmul.f32 %v4803, %v4498
      %v4836 = vmul.f32 %v4804, %v4498
      %v4837 = vmul.f32 %v4805, %v4498
      %v4838 = vmul.f32 %v4806, %v4498
      %v4839 = vmul.f32 %v4807, %v4498
      %v4840 = vmul.f32 %v4808, %v4498
      %v4841 = vmul.f32 %v4809, %v4498
      %v4842 = vmul.f32 %v4810, %v4498
      %v4843 = vmul.f32 %v4811, %v4498
      %v4844 = vmul.f32 %v4812, %v4498
      %v4845 = vmul.f32 %v4813, %v4498
      %v4846 = vmul.f32 %v4814, %v4498
      %v4847 = vmul.f32 %v4815, %v4498
      %v4848 = vmul.f32 %v4816, %v4498
      %v4849 = vmul.f32 %v4817, %v4498
      %v4850 = vmul.f32 %v4818, %v4498
      %v4851 = vmax.f32 %v4819, 0.0
      %v4852 = vmax.f32 %v4820, 0.0
      %v4853 = vmax.f32 %v4821, 0.0
      %v4854 = vmax.f32 %v4822, 0.0
      %v4855 = vmax.f32 %v4823, 0.0
      %v4856 = vmax.f32 %v4824, 0.0
      %v4857 = vmax.f32 %v4825, 0.0
      %v4858 = vmax.f32 %v4826, 0.0
      %v4859 = vmax.f32 %v4827, 0.0
      %v4860 = vmax.f32 %v4828, 0.0
      %v4861 = vmax.f32 %v4829, 0.0
      %v4862 = vmax.f32 %v4830, 0.0
      %v4863 = vmax.f32 %v4831, 0.0
      %v4864 = vmax.f32 %v4832, 0.0
      %v4865 = vmax.f32 %v4833, 0.0
      %v4866 = vmax.f32 %v4834, 0.0
      %v4867 = vmax.f32 %v4835, 0.0
      %v4868 = vmax.f32 %v4836, 0.0
      %v4869 = vmax.f32 %v4837, 0.0
      %v4870 = vmax.f32 %v4838, 0.0
      %v4871 = vmax.f32 %v4839, 0.0
      %v4872 = vmax.f32 %v4840, 0.0
      %v4873 = vmax.f32 %v4841, 0.0
      %v4874 = vmax.f32 %v4842, 0.0
      %v4875 = vmax.f32 %v4843, 0.0
      %v4876 = vmax.f32 %v4844, 0.0
      %v4877 = vmax.f32 %v4845, 0.0
      %v4878 = vmax.f32 %v4846, 0.0
      %v4879 = vmax.f32 %v4847, 0.0
      %v4880 = vmax.f32 %v4848, 0.0
      %v4881 = vmax.f32 %v4849, 0.0
      %v4882 = vmax.f32 %v4850, 0.0
      %v4883 = vld [vmem:[%s4287] sm:$0xff]
      %v4884 = vld [vmem:[%s4287 + $0x8] sm:$0xff]
      %v4885 = vld [vmem:[%s4287 + $0x10] sm:$0xff]
      %v4886 = vld [vmem:[%s4287 + $0x18] sm:$0xff]
      %v4887 = vld [vmem:[%s4287 + $0x20] sm:$0xff]
      %v4888 = vld [vmem:[%s4287 + $0x28] sm:$0xff]
      %v4889 = vld [vmem:[%s4287 + $0x30] sm:$0xff]
      %v4890 = vld [vmem:[%s4287 + $0x38] sm:$0xff]
      %v4891 = vld [vmem:[%s4287 + $0x40] sm:$0xff]
      %v4892 = vld [vmem:[%s4287 + $0x48] sm:$0xff]
      %v4893 = vld [vmem:[%s4287 + $0x50] sm:$0xff]
      %v4894 = vld [vmem:[%s4287 + $0x58] sm:$0xff]
      %v4895 = vld [vmem:[%s4287 + $0x60] sm:$0xff]
      %v4896 = vld [vmem:[%s4287 + $0x68] sm:$0xff]
      %v4897 = vld [vmem:[%s4287 + $0x70] sm:$0xff]
      %v4898 = vld [vmem:[%s4287 + $0x78] sm:$0xff]
      %v4899 = vld [vmem:[%s4287 + $0x80] sm:$0xff]
      %v4900 = vld [vmem:[%s4287 + $0x88] sm:$0xff]
      %v4901 = vld [vmem:[%s4287 + $0x90] sm:$0xff]
      %v4902 = vld [vmem:[%s4287 + $0x98] sm:$0xff]
      %v4903 = vld [vmem:[%s4287 + $0xa0] sm:$0xff]
      %v4904 = vld [vmem:[%s4287 + $0xa8] sm:$0xff]
      %v4905 = vld [vmem:[%s4287 + $0xb0] sm:$0xff]
      %v4906 = vld [vmem:[%s4287 + $0xb8] sm:$0xff]
      %v4907 = vld [vmem:[%s4287 + $0xc0] sm:$0xff]
      %v4908 = vld [vmem:[%s4287 + $0xc8] sm:$0xff]
      %v4909 = vld [vmem:[%s4287 + $0xd0] sm:$0xff]
      %v4910 = vld [vmem:[%s4287 + $0xd8] sm:$0xff]
      %v4911 = vld [vmem:[%s4287 + $0xe0] sm:$0xff]
      %v4912 = vld [vmem:[%s4287 + $0xe8] sm:$0xff]
      %v4913 = vld [vmem:[%s4287 + $0xf0] sm:$0xff]
      %v4914 = vld [vmem:[%s4287 + $0xf8] sm:$0xff]
      %v4915 = vsub.f32 %v4883, %v4492
      %v4916 = vsub.f32 %v4884, %v4492
      %v4917 = vsub.f32 %v4885, %v4492
      %v4918 = vsub.f32 %v4886, %v4492
      %v4919 = vsub.f32 %v4887, %v4492
      %v4920 = vsub.f32 %v4888, %v4492
      %v4921 = vsub.f32 %v4889, %v4492
      %v4922 = vsub.f32 %v4890, %v4492
      %v4923 = vsub.f32 %v4891, %v4492
      %v4924 = vsub.f32 %v4892, %v4492
      %v4925 = vsub.f32 %v4893, %v4492
      %v4926 = vsub.f32 %v4894, %v4492
      %v4927 = vsub.f32 %v4895, %v4492
      %v4928 = vsub.f32 %v4896, %v4492
      %v4929 = vsub.f32 %v4897, %v4492
      %v4930 = vsub.f32 %v4898, %v4492
      %v4931 = vsub.f32 %v4899, %v4492
      %v4932 = vsub.f32 %v4900, %v4492
      %v4933 = vsub.f32 %v4901, %v4492
      %v4934 = vsub.f32 %v4902, %v4492
      %v4935 = vsub.f32 %v4903, %v4492
      %v4936 = vsub.f32 %v4904, %v4492
      %v4937 = vsub.f32 %v4905, %v4492
      %v4938 = vsub.f32 %v4906, %v4492
      %v4939 = vsub.f32 %v4907, %v4492
      %v4940 = vsub.f32 %v4908, %v4492
      %v4941 = vsub.f32 %v4909, %v4492
      %v4942 = vsub.f32 %v4910, %v4492
      %v4943 = vsub.f32 %v4911, %v4492
      %v4944 = vsub.f32 %v4912, %v4492
      %v4945 = vsub.f32 %v4913, %v4492
      %v4946 = vsub.f32 %v4914, %v4492
      %v4947 = vmul.f32 %v4915, %v4498
      %v4948 = vmul.f32 %v4916, %v4498
      %v4949 = vmul.f32 %v4917, %v4498
      %v4950 = vmul.f32 %v4918, %v4498
      %v4951 = vmul.f32 %v4919, %v4498
      %v4952 = vmul.f32 %v4920, %v4498
      %v4953 = vmul.f32 %v4921, %v4498
      %v4954 = vmul.f32 %v4922, %v4498
      %v4955 = vmul.f32 %v4923, %v4498
      %v4956 = vmul.f32 %v4924, %v4498
      %v4957 = vmul.f32 %v4925, %v4498
      %v4958 = vmul.f32 %v4926, %v4498
      %v4959 = vmul.f32 %v4927, %v4498
      %v4960 = vmul.f32 %v4928, %v4498
      %v4961 = vmul.f32 %v4929, %v4498
      %v4962 = vmul.f32 %v4930, %v4498
      %v4963 = vmul.f32 %v4931, %v4498
      %v4964 = vmul.f32 %v4932, %v4498
      %v4965 = vmul.f32 %v4933, %v4498
      %v4966 = vmul.f32 %v4934, %v4498
      %v4967 = vmul.f32 %v4935, %v4498
      %v4968 = vmul.f32 %v4936, %v4498
      %v4969 = vmul.f32 %v4937, %v4498
      %v4970 = vmul.f32 %v4938, %v4498
      %v4971 = vmul.f32 %v4939, %v4498
      %v4972 = vmul.f32 %v4940, %v4498
      %v4973 = vmul.f32 %v4941, %v4498
      %v4974 = vmul.f32 %v4942, %v4498
      %v4975 = vmul.f32 %v4943, %v4498
      %v4976 = vmul.f32 %v4944, %v4498
      %v4977 = vmul.f32 %v4945, %v4498
      %v4978 = vmul.f32 %v4946, %v4498
      %v4979 = vmax.f32 %v4947, 0.0
      %v4980 = vmax.f32 %v4948, 0.0
      %v4981 = vmax.f32 %v4949, 0.0
      %v4982 = vmax.f32 %v4950, 0.0
      %v4983 = vmax.f32 %v4951, 0.0
      %v4984 = vmax.f32 %v4952, 0.0
      %v4985 = vmax.f32 %v4953, 0.0
      %v4986 = vmax.f32 %v4954, 0.0
      %v4987 = vmax.f32 %v4955, 0.0
      %v4988 = vmax.f32 %v4956, 0.0
      %v4989 = vmax.f32 %v4957, 0.0
      %v4990 = vmax.f32 %v4958, 0.0
      %v4991 = vmax.f32 %v4959, 0.0
      %v4992 = vmax.f32 %v4960, 0.0
      %v4993 = vmax.f32 %v4961, 0.0
      %v4994 = vmax.f32 %v4962, 0.0
      %v4995 = vmax.f32 %v4963, 0.0
      %v4996 = vmax.f32 %v4964, 0.0
      %v4997 = vmax.f32 %v4965, 0.0
      %v4998 = vmax.f32 %v4966, 0.0
      %v4999 = vmax.f32 %v4967, 0.0
      %v5000 = vmax.f32 %v4968, 0.0
      %v5001 = vmax.f32 %v4969, 0.0
      %v5002 = vmax.f32 %v4970, 0.0
      %v5003 = vmax.f32 %v4971, 0.0
      %v5004 = vmax.f32 %v4972, 0.0
      %v5005 = vmax.f32 %v4973, 0.0
      %v5006 = vmax.f32 %v4974, 0.0
      %v5007 = vmax.f32 %v4975, 0.0
      %v5008 = vmax.f32 %v4976, 0.0
      %v5009 = vmax.f32 %v4977, 0.0
      %v5010 = vmax.f32 %v4978, 0.0
      %5043 = vrot.lane.b32.xlu0 %v4723, 8
      %v5044 = vpop.permute.xlu0 %5043
      %5045 = vrot.lane.b32.xlu0 %v4724, 8
      %v5046 = vpop.permute.xlu0 %5045
      %5047 = vrot.lane.b32.xlu0 %v4725, 8
      %v5048 = vpop.permute.xlu0 %5047
      %5049 = vrot.lane.b32.xlu0 %v4726, 8
      %v5050 = vpop.permute.xlu0 %5049
      %5051 = vrot.lane.b32.xlu0 %v4727, 8
      %v5052 = vpop.permute.xlu0 %5051
      %5053 = vrot.lane.b32.xlu0 %v4728, 8
      %v5054 = vpop.permute.xlu0 %5053
      %5055 = vrot.lane.b32.xlu0 %v4729, 8
      %v5056 = vpop.permute.xlu0 %5055
      %5057 = vrot.lane.b32.xlu0 %v4730, 8
      %v5058 = vpop.permute.xlu0 %5057
      %5059 = vrot.lane.b32.xlu0 %v4731, 8
      %v5060 = vpop.permute.xlu0 %5059
      %5061 = vrot.lane.b32.xlu0 %v4732, 8
      %v5062 = vpop.permute.xlu0 %5061
      %5063 = vrot.lane.b32.xlu0 %v4733, 8
      %v5064 = vpop.permute.xlu0 %5063
      %5065 = vrot.lane.b32.xlu0 %v4734, 8
      %v5066 = vpop.permute.xlu0 %5065
      %5067 = vrot.lane.b32.xlu0 %v4735, 8
      %v5068 = vpop.permute.xlu0 %5067
      %5069 = vrot.lane.b32.xlu0 %v4736, 8
      %v5070 = vpop.permute.xlu0 %5069
      %5071 = vrot.lane.b32.xlu0 %v4737, 8
      %v5072 = vpop.permute.xlu0 %5071
      %5073 = vrot.lane.b32.xlu0 %v4738, 8
      %v5074 = vpop.permute.xlu0 %5073
      %5075 = vrot.lane.b32.xlu0 %v4739, 8
      %v5076 = vpop.permute.xlu0 %5075
      %5077 = vrot.lane.b32.xlu0 %v4740, 8
      %v5078 = vpop.permute.xlu0 %5077
      %5079 = vrot.lane.b32.xlu0 %v4741, 8
      %v5080 = vpop.permute.xlu0 %5079
      %5081 = vrot.lane.b32.xlu0 %v4742, 8
      %v5082 = vpop.permute.xlu0 %5081
      %5083 = vrot.lane.b32.xlu0 %v4743, 8
      %v5084 = vpop.permute.xlu0 %5083
      %5085 = vrot.lane.b32.xlu0 %v4744, 8
      %v5086 = vpop.permute.xlu0 %5085
      %5087 = vrot.lane.b32.xlu0 %v4745, 8
      %v5088 = vpop.permute.xlu0 %5087
      %5089 = vrot.lane.b32.xlu0 %v4746, 8
      %v5090 = vpop.permute.xlu0 %5089
      %5091 = vrot.lane.b32.xlu0 %v4747, 8
      %v5092 = vpop.permute.xlu0 %5091
      %5093 = vrot.lane.b32.xlu0 %v4748, 8
      %v5094 = vpop.permute.xlu0 %5093
      %5095 = vrot.lane.b32.xlu0 %v4749, 8
      %v5096 = vpop.permute.xlu0 %5095
      %5097 = vrot.lane.b32.xlu0 %v4750, 8
      %v5098 = vpop.permute.xlu0 %5097
      %5099 = vrot.lane.b32.xlu0 %v4751, 8
      %v5100 = vpop.permute.xlu0 %5099
      %5101 = vrot.lane.b32.xlu0 %v4752, 8
      %v5102 = vpop.permute.xlu0 %5101
      %5103 = vrot.lane.b32.xlu0 %v4753, 8
      %v5104 = vpop.permute.xlu0 %5103
      %5105 = vrot.lane.b32.xlu0 %v4754, 8
      %v5106 = vpop.permute.xlu0 %5105
      %5171 = vrot.lane.b32.xlu0 %v4851, 16
      %v5172 = vpop.permute.xlu0 %5171
      %5173 = vrot.lane.b32.xlu0 %v4852, 16
      %v5174 = vpop.permute.xlu0 %5173
      %5175 = vrot.lane.b32.xlu0 %v4853, 16
      %v5176 = vpop.permute.xlu0 %5175
      %5177 = vrot.lane.b32.xlu0 %v4854, 16
      %v5178 = vpop.permute.xlu0 %5177
      %5179 = vrot.lane.b32.xlu0 %v4855, 16
      %v5180 = vpop.permute.xlu0 %5179
      %5181 = vrot.lane.b32.xlu0 %v4856, 16
      %v5182 = vpop.permute.xlu0 %5181
      %5183 = vrot.lane.b32.xlu0 %v4857, 16
      %v5184 = vpop.permute.xlu0 %5183
      %5185 = vrot.lane.b32.xlu0 %v4858, 16
      %v5186 = vpop.permute.xlu0 %5185
      %5187 = vrot.lane.b32.xlu0 %v4859, 16
      %v5188 = vpop.permute.xlu0 %5187
      %5189 = vrot.lane.b32.xlu0 %v4860, 16
      %v5190 = vpop.permute.xlu0 %5189
      %5191 = vrot.lane.b32.xlu0 %v4861, 16
      %v5192 = vpop.permute.xlu0 %5191
      %5193 = vrot.lane.b32.xlu0 %v4862, 16
      %v5194 = vpop.permute.xlu0 %5193
      %5195 = vrot.lane.b32.xlu0 %v4863, 16
      %v5196 = vpop.permute.xlu0 %5195
      %5197 = vrot.lane.b32.xlu0 %v4864, 16
      %v5198 = vpop.permute.xlu0 %5197
      %5199 = vrot.lane.b32.xlu0 %v4865, 16
      %v5200 = vpop.permute.xlu0 %5199
      %5201 = vrot.lane.b32.xlu0 %v4866, 16
      %v5202 = vpop.permute.xlu0 %5201
      %5203 = vrot.lane.b32.xlu0 %v4867, 16
      %v5204 = vpop.permute.xlu0 %5203
      %5205 = vrot.lane.b32.xlu0 %v4868, 16
      %v5206 = vpop.permute.xlu0 %5205
      %5207 = vrot.lane.b32.xlu0 %v4869, 16
      %v5208 = vpop.permute.xlu0 %5207
      %5209 = vrot.lane.b32.xlu0 %v4870, 16
      %v5210 = vpop.permute.xlu0 %5209
      %5211 = vrot.lane.b32.xlu0 %v4871, 16
      %v5212 = vpop.permute.xlu0 %5211
      %5213 = vrot.lane.b32.xlu0 %v4872, 16
      %v5214 = vpop.permute.xlu0 %5213
      %5215 = vrot.lane.b32.xlu0 %v4873, 16
      %v5216 = vpop.permute.xlu0 %5215
      %5217 = vrot.lane.b32.xlu0 %v4874, 16
      %v5218 = vpop.permute.xlu0 %5217
      %5219 = vrot.lane.b32.xlu0 %v4875, 16
      %v5220 = vpop.permute.xlu0 %5219
      %5221 = vrot.lane.b32.xlu0 %v4876, 16
      %v5222 = vpop.permute.xlu0 %5221
      %5223 = vrot.lane.b32.xlu0 %v4877, 16
      %v5224 = vpop.permute.xlu0 %5223
      %5225 = vrot.lane.b32.xlu0 %v4878, 16
      %v5226 = vpop.permute.xlu0 %5225
      %5227 = vrot.lane.b32.xlu0 %v4879, 16
      %v5228 = vpop.permute.xlu0 %5227
      %5229 = vrot.lane.b32.xlu0 %v4880, 16
      %v5230 = vpop.permute.xlu0 %5229
      %5231 = vrot.lane.b32.xlu0 %v4881, 16
      %v5232 = vpop.permute.xlu0 %5231
      %5233 = vrot.lane.b32.xlu0 %v4882, 16
      %v5234 = vpop.permute.xlu0 %5233
      %5299 = vrot.lane.b32.xlu0 %v4979, 24
      %v5300 = vpop.permute.xlu0 %5299
      %5301 = vrot.lane.b32.xlu0 %v4980, 24
      %v5302 = vpop.permute.xlu0 %5301
      %5303 = vrot.lane.b32.xlu0 %v4981, 24
      %v5304 = vpop.permute.xlu0 %5303
      %5305 = vrot.lane.b32.xlu0 %v4982, 24
      %v5306 = vpop.permute.xlu0 %5305
      %5307 = vrot.lane.b32.xlu0 %v4983, 24
      %v5308 = vpop.permute.xlu0 %5307
      %5309 = vrot.lane.b32.xlu0 %v4984, 24
      %v5310 = vpop.permute.xlu0 %5309
      %5311 = vrot.lane.b32.xlu0 %v4985, 24
      %v5312 = vpop.permute.xlu0 %5311
      %5313 = vrot.lane.b32.xlu0 %v4986, 24
      %v5314 = vpop.permute.xlu0 %5313
      %5315 = vrot.lane.b32.xlu0 %v4987, 24
      %v5316 = vpop.permute.xlu0 %5315
      %5317 = vrot.lane.b32.xlu0 %v4988, 24
      %v5318 = vpop.permute.xlu0 %5317
      %5319 = vrot.lane.b32.xlu0 %v4989, 24
      %v5320 = vpop.permute.xlu0 %5319
      %5321 = vrot.lane.b32.xlu0 %v4990, 24
      %v5322 = vpop.permute.xlu0 %5321
      %5323 = vrot.lane.b32.xlu0 %v4991, 24
      %v5324 = vpop.permute.xlu0 %5323
      %5325 = vrot.lane.b32.xlu0 %v4992, 24
      %v5326 = vpop.permute.xlu0 %5325
      %5327 = vrot.lane.b32.xlu0 %v4993, 24
      %v5328 = vpop.permute.xlu0 %5327
      %5329 = vrot.lane.b32.xlu0 %v4994, 24
      %v5330 = vpop.permute.xlu0 %5329
      %5331 = vrot.lane.b32.xlu0 %v4995, 24
      %v5332 = vpop.permute.xlu0 %5331
      %5333 = vrot.lane.b32.xlu0 %v4996, 24
      %v5334 = vpop.permute.xlu0 %5333
      %5335 = vrot.lane.b32.xlu0 %v4997, 24
      %v5336 = vpop.permute.xlu0 %5335
      %5337 = vrot.lane.b32.xlu0 %v4998, 24
      %v5338 = vpop.permute.xlu0 %5337
      %5339 = vrot.lane.b32.xlu0 %v4999, 24
      %v5340 = vpop.permute.xlu0 %5339
      %5341 = vrot.lane.b32.xlu0 %v5000, 24
      %v5342 = vpop.permute.xlu0 %5341
      %5343 = vrot.lane.b32.xlu0 %v5001, 24
      %v5344 = vpop.permute.xlu0 %5343
      %5345 = vrot.lane.b32.xlu0 %v5002, 24
      %v5346 = vpop.permute.xlu0 %5345
      %5347 = vrot.lane.b32.xlu0 %v5003, 24
      %v5348 = vpop.permute.xlu0 %5347
      %5349 = vrot.lane.b32.xlu0 %v5004, 24
      %v5350 = vpop.permute.xlu0 %5349
      %5351 = vrot.lane.b32.xlu0 %v5005, 24
      %v5352 = vpop.permute.xlu0 %5351
      %5353 = vrot.lane.b32.xlu0 %v5006, 24
      %v5354 = vpop.permute.xlu0 %5353
      %5355 = vrot.lane.b32.xlu0 %v5007, 24
      %v5356 = vpop.permute.xlu0 %5355
      %5357 = vrot.lane.b32.xlu0 %v5008, 24
      %v5358 = vpop.permute.xlu0 %5357
      %5359 = vrot.lane.b32.xlu0 %v5009, 24
      %v5360 = vpop.permute.xlu0 %5359
      %5361 = vrot.lane.b32.xlu0 %v5010, 24
      %v5362 = vpop.permute.xlu0 %5361
      %v5395 = vsel %vm1001, %v4595, %v5044
      %v5396 = vsel %vm1001, %v4596, %v5046
      %v5397 = vsel %vm1001, %v4597, %v5048
      %v5398 = vsel %vm1001, %v4598, %v5050
      %v5399 = vsel %vm1001, %v4599, %v5052
      %v5400 = vsel %vm1001, %v4600, %v5054
      %v5401 = vsel %vm1001, %v4601, %v5056
      %v5402 = vsel %vm1001, %v4602, %v5058
      %v5403 = vsel %vm1001, %v4603, %v5060
      %v5404 = vsel %vm1001, %v4604, %v5062
      %v5405 = vsel %vm1001, %v4605, %v5064
      %v5406 = vsel %vm1001, %v4606, %v5066
      %v5407 = vsel %vm1001, %v4607, %v5068
      %v5408 = vsel %vm1001, %v4608, %v5070
      %v5409 = vsel %vm1001, %v4609, %v5072
      %v5410 = vsel %vm1001, %v4610, %v5074
      %v5411 = vsel %vm1001, %v4611, %v5076
      %v5412 = vsel %vm1001, %v4612, %v5078
      %v5413 = vsel %vm1001, %v4613, %v5080
      %v5414 = vsel %vm1001, %v4614, %v5082
      %v5415 = vsel %vm1001, %v4615, %v5084
      %v5416 = vsel %vm1001, %v4616, %v5086
      %v5417 = vsel %vm1001, %v4617, %v5088
      %v5418 = vsel %vm1001, %v4618, %v5090
      %v5419 = vsel %vm1001, %v4619, %v5092
      %v5420 = vsel %vm1001, %v4620, %v5094
      %v5421 = vsel %vm1001, %v4621, %v5096
      %v5422 = vsel %vm1001, %v4622, %v5098
      %v5423 = vsel %vm1001, %v4623, %v5100
      %v5424 = vsel %vm1001, %v4624, %v5102
      %v5425 = vsel %vm1001, %v4625, %v5104
      %v5426 = vsel %vm1001, %v4626, %v5106
      %v5427 = vsel %vm1067, %v5395, %v5172
      %v5428 = vsel %vm1067, %v5396, %v5174
      %v5429 = vsel %vm1067, %v5397, %v5176
      %v5430 = vsel %vm1067, %v5398, %v5178
      %v5431 = vsel %vm1067, %v5399, %v5180
      %v5432 = vsel %vm1067, %v5400, %v5182
      %v5433 = vsel %vm1067, %v5401, %v5184
      %v5434 = vsel %vm1067, %v5402, %v5186
      %v5435 = vsel %vm1067, %v5403, %v5188
      %v5436 = vsel %vm1067, %v5404, %v5190
      %v5437 = vsel %vm1067, %v5405, %v5192
      %v5438 = vsel %vm1067, %v5406, %v5194
      %v5439 = vsel %vm1067, %v5407, %v5196
      %v5440 = vsel %vm1067, %v5408, %v5198
      %v5441 = vsel %vm1067, %v5409, %v5200
      %v5442 = vsel %vm1067, %v5410, %v5202
      %v5443 = vsel %vm1067, %v5411, %v5204
      %v5444 = vsel %vm1067, %v5412, %v5206
      %v5445 = vsel %vm1067, %v5413, %v5208
      %v5446 = vsel %vm1067, %v5414, %v5210
      %v5447 = vsel %vm1067, %v5415, %v5212
      %v5448 = vsel %vm1067, %v5416, %v5214
      %v5449 = vsel %vm1067, %v5417, %v5216
      %v5450 = vsel %vm1067, %v5418, %v5218
      %v5451 = vsel %vm1067, %v5419, %v5220
      %v5452 = vsel %vm1067, %v5420, %v5222
      %v5453 = vsel %vm1067, %v5421, %v5224
      %v5454 = vsel %vm1067, %v5422, %v5226
      %v5455 = vsel %vm1067, %v5423, %v5228
      %v5456 = vsel %vm1067, %v5424, %v5230
      %v5457 = vsel %vm1067, %v5425, %v5232
      %v5458 = vsel %vm1067, %v5426, %v5234
      %vm5459 = vcmask 195584
      %v5460 = vsel %vm5459, %v5427, %v5300
      %v5461 = vsel %vm5459, %v5428, %v5302
      %v5462 = vsel %vm5459, %v5429, %v5304
      %v5463 = vsel %vm5459, %v5430, %v5306
      %v5464 = vsel %vm5459, %v5431, %v5308
      %v5465 = vsel %vm5459, %v5432, %v5310
      %v5466 = vsel %vm5459, %v5433, %v5312
      %v5467 = vsel %vm5459, %v5434, %v5314
      %v5468 = vsel %vm5459, %v5435, %v5316
      %v5469 = vsel %vm5459, %v5436, %v5318
      %v5470 = vsel %vm5459, %v5437, %v5320
      %v5471 = vsel %vm5459, %v5438, %v5322
      %v5472 = vsel %vm5459, %v5439, %v5324
      %v5473 = vsel %vm5459, %v5440, %v5326
      %v5474 = vsel %vm5459, %v5441, %v5328
      %v5475 = vsel %vm5459, %v5442, %v5330
      %v5476 = vsel %vm5459, %v5443, %v5332
      %v5477 = vsel %vm5459, %v5444, %v5334
      %v5478 = vsel %vm5459, %v5445, %v5336
      %v5479 = vsel %vm5459, %v5446, %v5338
      %v5480 = vsel %vm5459, %v5447, %v5340
      %v5481 = vsel %vm5459, %v5448, %v5342
      %v5482 = vsel %vm5459, %v5449, %v5344
      %v5483 = vsel %vm5459, %v5450, %v5346
      %v5484 = vsel %vm5459, %v5451, %v5348
      %v5485 = vsel %vm5459, %v5452, %v5350
      %v5486 = vsel %vm5459, %v5453, %v5352
      %v5487 = vsel %vm5459, %v5454, %v5354
      %v5488 = vsel %vm5459, %v5455, %v5356
      %v5489 = vsel %vm5459, %v5456, %v5358
      %v5490 = vsel %vm5459, %v5457, %v5360
      %v5491 = vsel %vm5459, %v5458, %v5362
      %vm5492 = vcmask 261120
      %5493 = vst.msk [vmem:[%s182] sm:$0xff] %vm5492, %v5460
      %5494 = vst.msk [vmem:[%s182 + $0x8] sm:$0xff] %vm5492, %v5461
      %5495 = vst.msk [vmem:[%s182 + $0x10] sm:$0xff] %vm5492, %v5462
      %5496 = vst.msk [vmem:[%s182 + $0x18] sm:$0xff] %vm5492, %v5463
      %5497 = vst.msk [vmem:[%s182 + $0x20] sm:$0xff] %vm5492, %v5464
      %5498 = vst.msk [vmem:[%s182 + $0x28] sm:$0xff] %vm5492, %v5465
      %5499 = vst.msk [vmem:[%s182 + $0x30] sm:$0xff] %vm5492, %v5466
      %5500 = vst.msk [vmem:[%s182 + $0x38] sm:$0xff] %vm5492, %v5467
      %5501 = vst.msk [vmem:[%s182 + $0x40] sm:$0xff] %vm5492, %v5468
      %5502 = vst.msk [vmem:[%s182 + $0x48] sm:$0xff] %vm5492, %v5469
      %5503 = vst.msk [vmem:[%s182 + $0x50] sm:$0xff] %vm5492, %v5470
      %5504 = vst.msk [vmem:[%s182 + $0x58] sm:$0xff] %vm5492, %v5471
      %5505 = vst.msk [vmem:[%s182 + $0x60] sm:$0xff] %vm5492, %v5472
      %5506 = vst.msk [vmem:[%s182 + $0x68] sm:$0xff] %vm5492, %v5473
      %5507 = vst.msk [vmem:[%s182 + $0x70] sm:$0xff] %vm5492, %v5474
      %5508 = vst.msk [vmem:[%s182 + $0x78] sm:$0xff] %vm5492, %v5475
      %5509 = vst.msk [vmem:[%s182 + $0x80] sm:$0xff] %vm5492, %v5476
      %5510 = vst.msk [vmem:[%s182 + $0x88] sm:$0xff] %vm5492, %v5477
      %5511 = vst.msk [vmem:[%s182 + $0x90] sm:$0xff] %vm5492, %v5478
      %5512 = vst.msk [vmem:[%s182 + $0x98] sm:$0xff] %vm5492, %v5479
      %5513 = vst.msk [vmem:[%s182 + $0xa0] sm:$0xff] %vm5492, %v5480
      %5514 = vst.msk [vmem:[%s182 + $0xa8] sm:$0xff] %vm5492, %v5481
      %5515 = vst.msk [vmem:[%s182 + $0xb0] sm:$0xff] %vm5492, %v5482
      %5516 = vst.msk [vmem:[%s182 + $0xb8] sm:$0xff] %vm5492, %v5483
      %5517 = vst.msk [vmem:[%s182 + $0xc0] sm:$0xff] %vm5492, %v5484
      %5518 = vst.msk [vmem:[%s182 + $0xc8] sm:$0xff] %vm5492, %v5485
      %5519 = vst.msk [vmem:[%s182 + $0xd0] sm:$0xff] %vm5492, %v5486
      %5520 = vst.msk [vmem:[%s182 + $0xd8] sm:$0xff] %vm5492, %v5487
      %5521 = vst.msk [vmem:[%s182 + $0xe0] sm:$0xff] %vm5492, %v5488
      %5522 = vst.msk [vmem:[%s182 + $0xe8] sm:$0xff] %vm5492, %v5489
      %5523 = vst.msk [vmem:[%s182 + $0xf0] sm:$0xff] %vm5492, %v5490
      %5524 = vst.msk [vmem:[%s182 + $0xf8] sm:$0xff] %vm5492, %v5491
      %p5525 = scmp.lt.s32.totalorder %s18, 1
      %s5526 = scalar_select %p5525, %s18, 1
      %p5527 = scmp.lt.s32.totalorder %s17, 0
      %s5528 = scalar_select %p5527, %s17, 0
      %s5529 = smul.addr %s5528, 32
      %s5530 = smul.addr %s5526, 32
      %s5531 = sadd.s32 %s5529, %s5530
      %s5532 = smul.addr %s5531, 8
      %s5533 = scalar_lea.vmem %s2, %s5532
      // Predicated region
      $region29: #{unet_up_forward.1} parent=27 // pred_check
        %p5534 = pneg %p97
      $region30: #{unet_up_forward.1} parent=27 // pred_check_branch
        %5536 = sbr.rel (%p5534) target = $region32
      $region31: #{unet_up_forward.1} parent=27 // pred_region
        _
      $region32: #{unet_up_forward.1} parent=27 // pred_fallthru
        _
    $region28: #{unet_up_forward.1} parent=5 // pred_fallthru
      _
    %p5537 = scmp.le.s32.totalorder 2, %s8
    // Predicated region
    $region33: #{unet_up_forward.1} parent=5 // pred_check
      %p5538 = pneg %p5537
    $region34: #{unet_up_forward.1} parent=5 // pred_check_branch
      %5540 = sbr.rel (%p5538) target = $region36
    $region35: #{unet_up_forward.1} parent=5 // pred_region
      %s5541 = ssub.s32 %s8, 2
      // Predicated region
      $region37: #{unet_up_forward.1} parent=35 // pred_check
        %p5542 = pneg %p103
      $region38: #{unet_up_forward.1} parent=35 // pred_check_branch
        %5544 = sbr.rel (%p5542) target = $region40
      $region39: #{unet_up_forward.1} parent=35 // pred_region
        %p5545 = scmp.lt.s32.totalorder %s20, 1
        %s5546 = scalar_select %p5545, %s20, 1
        %p5547 = scmp.lt.s32.totalorder %s19, 0
        %s5548 = scalar_select %p5547, %s19, 0
        %s5549 = smul.addr %s5548, 32
        %s5550 = smul.addr %s5546, 32
        %s5551 = sadd.s32 %s5549, %s5550
        %s5552 = smul.addr %s5551, 8
        %s5553 = scalar_lea.vmem %s2, %s5552
      $region40: #{unet_up_forward.1} parent=35 // pred_fallthru
        _
    $region36: #{unet_up_forward.1} parent=5 // pred_fallthru
      _
  $region6: #{unet_up_forward.1} parent=0 // loop_footer
    %s12 = sadd.s32 1, %s8
  $region7: #{unet_up_forward.1} parent=0 // loop_footer_branch
    %7 = sbr.rel target = $region3
  $region8: #{unet_up_forward.1} parent=0 // loop_exit
    _

</llo_original>
